<compile_context>
chip_gen: v5e
topology: v5e:2x2
jax: 0.10.0
libtpu: 0.0.40
codegen_flags: <defaults>
</compile_context>

<pallas_src>
import functools

import jax
import jax.numpy as jnp
from jax.experimental import pallas as pl
from jax.experimental.pallas import tpu as pltpu  # noqa: F401  (TPU tiling knobs when scaled up)


# -----------------------------------------------------------------------------
# Model config (synthetic small RoBERTa + QA head)
# -----------------------------------------------------------------------------
CFG = dict(
    vocab_size=100,
    type_vocab_size=2,
    max_position=40,
    hidden=32,
    heads=4,
    layers=2,
    intermediate=64,
    layer_norm_eps=1e-5,
)


# -----------------------------------------------------------------------------
# Fused Pallas kernel: emb-LN -> [attention + LN1 + FFN + LN2] * L -> QA head
# -----------------------------------------------------------------------------
def fused_encoder_qa_kernel(
    x_ref, mask_ref,
    emb_g_ref, emb_b_ref,
    wqkv_ref, bqkv_ref, wo_ref, bo_ref,
    ln1_g_ref, ln1_b_ref,
    w1_ref, b1_ref, w2_ref, b2_ref,
    ln2_g_ref, ln2_b_ref,
    qa_w_ref, qa_b_ref,
    logits_ref,
    *, B, S, H, Hn, n_layers, eps,
):
    Dh = H // Hn
    M = B * S
    BH = B * Hn
    bf16 = jnp.bfloat16

    def layernorm(v, g, b):
        mu = jnp.mean(v, axis=-1, keepdims=True)
        var = jnp.mean((v - mu) ** 2, axis=-1, keepdims=True)
        return (v - mu) * jax.lax.rsqrt(var + eps) * g + b

    def bf16_dot(a, w_bf16):
        # bf16 operands, f32 accumulation on the MXU.
        return jnp.dot(a.astype(bf16), w_bf16, preferred_element_type=jnp.float32)

    def split_heads(m2d):
        # (M, Hn*Dh) f32 -> (B*Hn, S, Dh) bf16  (heads batched, one relayout per q/k/v)
        return jnp.transpose(
            m2d.reshape(B, S, Hn, Dh), (0, 2, 1, 3)
        ).reshape(BH, S, Dh).astype(bf16)

    # Hoisted ONCE before the layer loop (JAX does not CSE broadcast_in_dim):
    # (B, 1, 1, S) additive mask -> (B*Hn, S, S), reused by every layer.
    bias = jnp.broadcast_to(mask_ref[...], (B, Hn, S, S)).reshape(BH, S, S)

    x = layernorm(x_ref[...], emb_g_ref[...], emb_b_ref[...])   # (M, H) f32

    # Unrolled layer loop: whole encoder is one launch / one traced region.
    # TODO(synk): switch to a grid axis over layers when n_layers grows beyond ~4.
    for l in range(n_layers):
        # ---- self-attention: fused QKV matmul, all heads batched ----
        # 1/sqrt(Dh) is pre-folded into Wq/bq at pack time (no in-kernel scale multiply).
        qkv = bf16_dot(x, wqkv_ref[l]) + bqkv_ref[l]             # (M, 3H) f32
        q = split_heads(qkv[:, :H])                              # (B*Hn, S, Dh) bf16
        k = split_heads(qkv[:, H:2 * H])
        v = split_heads(qkv[:, 2 * H:])

        s = jnp.einsum("bqd,bkd->bqk", q, k,
                       preferred_element_type=jnp.float32) + bias      # (B*Hn, S, S) f32
        s = s - jnp.max(s, axis=-1, keepdims=True)
        p = jnp.exp(s)
        p = p * pl.reciprocal(jnp.sum(p, axis=-1, keepdims=True), approx=True)
        ctx = jnp.einsum("bqk,bkd->bqd", p.astype(bf16), v,
                         preferred_element_type=jnp.float32)            # (B*Hn, S, Dh) f32
        # merge heads back to (M, H), then ONE output-projection matmul
        ctx = jnp.transpose(ctx.reshape(B, Hn, S, Dh), (0, 2, 1, 3)).reshape(M, H)
        attn = bf16_dot(ctx, wo_ref[l])
        x = layernorm(x + attn + bo_ref[l], ln1_g_ref[l], ln1_b_ref[l])

        # ---- FFN ----
        hdn = bf16_dot(x, w1_ref[l]) + b1_ref[l]
        # TODO(synk): tanh-GELU instead of torch's exact erf-GELU (tiny numeric delta).
        hdn = jax.nn.gelu(hdn, approximate=True)
        ffn = bf16_dot(hdn, w2_ref[l]) + b2_ref[l]
        x = layernorm(x + ffn, ln2_g_ref[l], ln2_b_ref[l])

    # ---- QA head: concat([cls_repeated, tok], -1) @ W == tok @ W[H:] + cls @ W[:H] ----
    # CLS row is identical for all S tokens of a batch, so its matmul is (B, H) not (M, H).
    cls = x.reshape(B, S, H)[:, 0, :]                            # (B, H)
    cls_logits = bf16_dot(cls, qa_w_ref[0])                      # (B, 2)
    tok_logits = bf16_dot(x, qa_w_ref[1]).reshape(B, S, 2)       # (B, S, 2)
    # TODO(synk): at real shapes write a lane-dense (2, M) layout instead of last-dim 2.
    logits_ref[...] = tok_logits + cls_logits[:, None, :] + qa_b_ref[...]


def fused_forward_pallas(x2d, add_mask, packed, cfg):
    B = add_mask.shape[0]
    S = add_mask.shape[-1]
    H = cfg["hidden"]
    kern = functools.partial(
        fused_encoder_qa_kernel,
        B=B, S=S, H=H, Hn=cfg["heads"], n_layers=cfg["layers"], eps=cfg["layer_norm_eps"],
    )
    # Single invocation: activations + all stacked layer weights (~100 KiB) are VMEM-resident,
    # so no grid / BlockSpecs are needed at this synthetic size (default = whole arrays in VMEM).
    # TODO(synk): at scale add a "parallel" row-tile grid axis (2 TCs on v7x) and an
    # "arbitrary" layer axis with per-layer weight index_maps + vmem_limit_bytes.
    return pl.pallas_call(
        kern,
        out_shape=jax.ShapeDtypeStruct((B, S, 2), jnp.float32),
    )(
        x2d, add_mask,
        packed["emb_ln_g"], packed["emb_ln_b"],
        packed["wqkv"], packed["bqkv"], packed["wo"], packed["bo"],
        packed["ln1_g"], packed["ln1_b"],
        packed["w1"], packed["b1"], packed["w2"], packed["b2"],
        packed["ln2_g"], packed["ln2_b"],
        packed["qa_w"], packed["qa_b"],
    )


# -----------------------------------------------------------------------------
# Parameters
# -----------------------------------------------------------------------------
def init_params(key, cfg):
    def nrm(k, shape):
        return 0.02 * jax.random.normal(k, shape, dtype=jnp.float32)

    keys = iter(jax.random.split(key, 8 + 16 * cfg["layers"]))
    H, I = cfg["hidden"], cfg["intermediate"]
    p = {
        "word_emb": nrm(next(keys), (cfg["vocab_size"], H)),
        "pos_emb": nrm(next(keys), (cfg["max_position"], H)),
        "type_emb": nrm(next(keys), (cfg["type_vocab_size"], H)),
        "emb_ln_g": jnp.ones((H,), jnp.float32),
        "emb_ln_b": jnp.zeros((H,), jnp.float32),
        "qa_w": nrm(next(keys), (2 * H, 2)),
        "qa_b": jnp.zeros((2,), jnp.float32),
        "layers": [],
    }
    for _ in range(cfg["layers"]):
        layer = {
            "wq": nrm(next(keys), (H, H)), "bq": jnp.zeros((H,), jnp.float32),
            "wk": nrm(next(keys), (H, H)), "bk": jnp.zeros((H,), jnp.float32),
            "wv": nrm(next(keys), (H, H)), "bv": jnp.zeros((H,), jnp.float32),
            "wo": nrm(next(keys), (H, H)), "bo": jnp.zeros((H,), jnp.float32),
            "ln1_g": jnp.ones((H,), jnp.float32), "ln1_b": jnp.zeros((H,), jnp.float32),
            "w1": nrm(next(keys), (H, I)), "b1": jnp.zeros((I,), jnp.float32),
            "w2": nrm(next(keys), (I, H)), "b2": jnp.zeros((H,), jnp.float32),
            "ln2_g": jnp.ones((H,), jnp.float32), "ln2_b": jnp.zeros((H,), jnp.float32),
        }
        p["layers"].append(layer)
    return p


def pack_params(params, cfg):
    """Stack per-layer weights, fold the attention scale into Wq/bq, and cast matmul
    weights to bf16 for the fused kernel (biases / LN params stay f32)."""
    H, Hn = cfg["hidden"], cfg["heads"]
    Dh = H // Hn
    scale = 1.0 / float(Dh) ** 0.5
    layers = params["layers"]
    bf16 = jnp.bfloat16

    def stack(fn):
        return jnp.stack([fn(layer) for layer in layers])

    return {
        # Embedding tables stay f32 and are gathered in plain JAX.
        "word_emb": params["word_emb"],
        "pos_emb": params["pos_emb"],
        "type_emb": params["type_emb"],
        "emb_ln_g": params["emb_ln_g"][None, :],
        "emb_ln_b": params["emb_ln_b"][None, :],
        # Fused QKV with 1/sqrt(Dh) folded into the Q block: (L, H, 3H) bf16, (L, 1, 3H) f32.
        "wqkv": stack(
            lambda l: jnp.concatenate([l["wq"] * scale, l["wk"], l["wv"]], axis=1)
        ).astype(bf16),
        "bqkv": stack(
            lambda l: jnp.concatenate([l["bq"] * scale, l["bk"], l["bv"]])[None, :]
        ),
        # Out projection: one (H, H) matmul per layer (heads merged in-kernel).
        "wo": stack(lambda l: l["wo"]).astype(bf16),
        "bo": stack(lambda l: l["bo"][None, :]),
        "ln1_g": stack(lambda l: l["ln1_g"][None, :]),
        "ln1_b": stack(lambda l: l["ln1_b"][None, :]),
        "w1": stack(lambda l: l["w1"]).astype(bf16),
        "b1": stack(lambda l: l["b1"][None, :]),
        "w2": stack(lambda l: l["w2"]).astype(bf16),
        "b2": stack(lambda l: l["b2"][None, :]),
        "ln2_g": stack(lambda l: l["ln2_g"][None, :]),
        "ln2_b": stack(lambda l: l["ln2_b"][None, :]),
        # QA head split as [W_cls, W_tok]: (2, H, 2) bf16, bias (1, 2) f32.
        "qa_w": jnp.stack([params["qa_w"][:H, :], params["qa_w"][H:, :]]).astype(bf16),
        "qa_b": params["qa_b"][None, :],
    }


# -----------------------------------------------------------------------------
# Forward (JAX glue: embedding gathers, mask, loss)
# -----------------------------------------------------------------------------
def cross_entropy_ignore(logits, targets, ignore_index):
    # Matches torch CrossEntropyLoss(ignore_index=...) with mean reduction.
    valid = (targets != ignore_index).astype(jnp.float32)
    safe = jnp.where(targets == ignore_index, 0, targets)
    logp = jax.nn.log_softmax(logits, axis=-1)
    nll = -jnp.take_along_axis(logp, safe[:, None], axis=-1)[:, 0]
    denom = jnp.maximum(jnp.sum(valid), 1.0)
    return jnp.sum(nll * valid) / denom


def custom_roberta_forward(packed, input_ids, attention_mask, token_type_ids,
                           start_positions=None, end_positions=None, cfg=CFG):
    B, S = input_ids.shape
    H = cfg["hidden"]

    # Embedding gathers (data-dependent) stay in plain JAX.
    # TODO(synk): RoBERTa's padding-aware position-id offset is simplified to arange(S).
    positions = jnp.arange(S)
    x = (
        jnp.take(packed["word_emb"], input_ids, axis=0)
        + jnp.take(packed["pos_emb"], positions, axis=0)[None, :, :]
        + jnp.take(packed["type_emb"], token_type_ids, axis=0)
    ).astype(jnp.float32)
    x2d = x.reshape(B * S, H)

    # Additive mask (B, 1, 1, S); the per-head/per-row broadcast happens once inside the kernel.
    add_mask = ((1.0 - attention_mask.astype(jnp.float32)) * -10000.0)[:, None, None, :]

    logits = fused_forward_pallas(x2d, add_mask, packed, cfg)       # (B, S, 2)
    start_logits = logits[..., 0]
    end_logits = logits[..., 1]

    total_loss = None
    if start_positions is not None and end_positions is not None:
        ignored_index = start_logits.shape[1]
        sp = jnp.clip(start_positions, 0, ignored_index)
        ep = jnp.clip(end_positions, 0, ignored_index)
        start_loss = cross_entropy_ignore(start_logits, sp, ignored_index)
        end_loss = cross_entropy_ignore(end_logits, ep, ignored_index)
        total_loss = (start_loss + end_loss) / 2.0

    return dict(loss=total_loss, start_logits=start_logits, end_logits=end_logits)


# -----------------------------------------------------------------------------
# Demo
# -----------------------------------------------------------------------------
if __name__ == "__main__":
    key = jax.random.PRNGKey(0)
    k_param, k_ids = jax.random.split(key)

    B, S = 2, 8
    params = init_params(k_param, CFG)
    packed = pack_params(params, CFG)

    input_ids = jax.random.randint(k_ids, (B, S), 0, CFG["vocab_size"], dtype=jnp.int32)
    attention_mask = jnp.ones((B, S), jnp.float32).at[1, -2:].set(0.0)
    token_type_ids = jnp.zeros((B, S), jnp.int32)
    start_positions = jnp.array([1, 3], jnp.int32)
    end_positions = jnp.array([2, S], jnp.int32)  # S -> clamped to ignore_index (exercised)

    fwd = jax.jit(functools.partial(custom_roberta_forward, cfg=CFG))
    out = fwd(packed, input_ids, attention_mask, token_type_ids,
              start_positions, end_positions)
    jax.block_until_ready((out["loss"], out["start_logits"], out["end_logits"]))

    assert out["start_logits"].shape == (B, S)
    assert out["end_logits"].shape == (B, S)
    assert out["loss"].shape == ()
    print("KERNEL_OK")
</pallas_src>

<mosaic_0001>
module attributes {stable_mosaic.version = 11 : i64} {
  func.func @fused_encoder_qa_kernel(%arg0: memref<16x32xf32, #tpu.memory_space<vmem>>, %arg1: memref<2x1x1x8xf32, #tpu.memory_space<vmem>>, %arg2: memref<1x32xf32, #tpu.memory_space<vmem>>, %arg3: memref<1x32xf32, #tpu.memory_space<vmem>>, %arg4: memref<2x32x96xbf16, #tpu.memory_space<vmem>>, %arg5: memref<2x1x96xf32, #tpu.memory_space<vmem>>, %arg6: memref<2x32x32xbf16, #tpu.memory_space<vmem>>, %arg7: memref<2x1x32xf32, #tpu.memory_space<vmem>>, %arg8: memref<2x1x32xf32, #tpu.memory_space<vmem>>, %arg9: memref<2x1x32xf32, #tpu.memory_space<vmem>>, %arg10: memref<2x32x64xbf16, #tpu.memory_space<vmem>>, %arg11: memref<2x1x64xf32, #tpu.memory_space<vmem>>, %arg12: memref<2x64x32xbf16, #tpu.memory_space<vmem>>, %arg13: memref<2x1x32xf32, #tpu.memory_space<vmem>>, %arg14: memref<2x1x32xf32, #tpu.memory_space<vmem>>, %arg15: memref<2x1x32xf32, #tpu.memory_space<vmem>>, %arg16: memref<2x32x2xbf16, #tpu.memory_space<vmem>>, %arg17: memref<1x2xf32, #tpu.memory_space<vmem>>, %arg18: memref<2x8x2xf32, #tpu.memory_space<vmem>>) attributes {dimension_semantics = [], scalar_prefetch = 0 : i64, scratch_operands = 0 : i64, tpu.core_type = #tpu.core_type<tc>} {
    %c0 = arith.constant 0 : index
    %c0_0 = arith.constant 0 : index
    %c0_1 = arith.constant 0 : index
    %c0_2 = arith.constant 0 : index
    %0 = vector.load %arg1[%c0, %c0_0, %c0_1, %c0_2] : memref<2x1x1x8xf32, #tpu.memory_space<vmem>>, vector<2x1x1x8xf32>
    %1 = vector.shape_cast %0 : vector<2x1x1x8xf32> to vector<2x1x1x8xf32>
    %2 = vector.broadcast %1 : vector<2x1x1x8xf32> to vector<2x4x8x8xf32>
    %3 = vector.shape_cast %2 : vector<2x4x8x8xf32> to vector<8x8x8xf32>
    %c0_3 = arith.constant 0 : index
    %c0_4 = arith.constant 0 : index
    %4 = vector.load %arg0[%c0_3, %c0_4] : memref<16x32xf32, #tpu.memory_space<vmem>>, vector<16x32xf32>
    %c0_5 = arith.constant 0 : index
    %c0_6 = arith.constant 0 : index
    %5 = vector.load %arg2[%c0_5, %c0_6] : memref<1x32xf32, #tpu.memory_space<vmem>>, vector<1x32xf32>
    %c0_7 = arith.constant 0 : index
    %c0_8 = arith.constant 0 : index
    %6 = vector.load %arg3[%c0_7, %c0_8] : memref<1x32xf32, #tpu.memory_space<vmem>>, vector<1x32xf32>
    %cst = arith.constant dense<0.000000e+00> : vector<16xf32>
    %7 = vector.multi_reduction <add>, %4, %cst [1] : vector<16x32xf32> to vector<16xf32>
    %8 = vector.shape_cast %7 : vector<16xf32> to vector<16x1xf32>
    %cst_9 = arith.constant 3.200000e+01 : f32
    %9 = vector.broadcast %cst_9 : f32 to vector<16x1xf32>
    %10 = arith.divf %8, %9 : vector<16x1xf32>
    %11 = vector.broadcast %10 : vector<16x1xf32> to vector<16x32xf32>
    %12 = arith.subf %4, %11 : vector<16x32xf32>
    %13 = arith.mulf %12, %12 : vector<16x32xf32>
    %cst_10 = arith.constant dense<0.000000e+00> : vector<16xf32>
    %14 = vector.multi_reduction <add>, %13, %cst_10 [1] : vector<16x32xf32> to vector<16xf32>
    %15 = vector.shape_cast %14 : vector<16xf32> to vector<16x1xf32>
    %cst_11 = arith.constant 3.200000e+01 : f32
    %16 = vector.broadcast %cst_11 : f32 to vector<16x1xf32>
    %17 = arith.divf %15, %16 : vector<16x1xf32>
    %18 = vector.broadcast %10 : vector<16x1xf32> to vector<16x32xf32>
    %19 = arith.subf %4, %18 : vector<16x32xf32>
    %cst_12 = arith.constant 9.99999974E-6 : f32
    %20 = vector.broadcast %cst_12 : f32 to vector<16x1xf32>
    %21 = arith.addf %17, %20 : vector<16x1xf32>
    %22 = math.rsqrt %21 : vector<16x1xf32>
    %23 = vector.broadcast %22 : vector<16x1xf32> to vector<16x32xf32>
    %24 = arith.mulf %19, %23 : vector<16x32xf32>
    %25 = vector.broadcast %5 : vector<1x32xf32> to vector<16x32xf32>
    %26 = arith.mulf %24, %25 : vector<16x32xf32>
    %27 = vector.broadcast %6 : vector<1x32xf32> to vector<16x32xf32>
    %28 = arith.addf %26, %27 : vector<16x32xf32>
    %c0_13 = arith.constant 0 : index
    %c0_14 = arith.constant 0 : index
    %c0_15 = arith.constant 0 : index
    %29 = vector.load %arg4[%c0_13, %c0_14, %c0_15] : memref<2x32x96xbf16, #tpu.memory_space<vmem>>, vector<1x32x96xbf16>
    %30 = vector.shape_cast %29 : vector<1x32x96xbf16> to vector<32x96xbf16>
    %31 = arith.truncf %28 : vector<16x32xf32> to vector<16x32xbf16>
    %cst_16 = arith.constant dense<0.000000e+00> : vector<16x96xf32>
    %32 = tpu.matmul %31, %30, %cst_16 {dimension_numbers = #tpu.dot_dimension_numbers<[1], [0], [0], [1], [0, 0, 1, 1], [], []>} : vector<16x32xbf16>, vector<32x96xbf16>, vector<16x96xf32> -> vector<16x96xf32>
    %c0_17 = arith.constant 0 : index
    %c0_18 = arith.constant 0 : index
    %c0_19 = arith.constant 0 : index
    %33 = vector.load %arg5[%c0_17, %c0_18, %c0_19] : memref<2x1x96xf32, #tpu.memory_space<vmem>>, vector<1x1x96xf32>
    %34 = vector.shape_cast %33 : vector<1x1x96xf32> to vector<1x96xf32>
    %35 = vector.broadcast %34 : vector<1x96xf32> to vector<16x96xf32>
    %36 = arith.addf %32, %35 : vector<16x96xf32>
    %37 = vector.extract_strided_slice %36 {offsets = [0, 0], sizes = [16, 32], strides = [1, 1]} : vector<16x96xf32> to vector<16x32xf32>
    %38 = vector.shape_cast %37 : vector<16x32xf32> to vector<2x8x4x8xf32>
    %39 = tpu.transpose %38, [0, 2, 1, 3] : vector<2x8x4x8xf32> -> vector<2x4x8x8xf32>
    %40 = vector.shape_cast %39 : vector<2x4x8x8xf32> to vector<8x8x8xf32>
    %41 = arith.truncf %40 : vector<8x8x8xf32> to vector<8x8x8xbf16>
    %42 = vector.extract_strided_slice %36 {offsets = [0, 32], sizes = [16, 32], strides = [1, 1]} : vector<16x96xf32> to vector<16x32xf32>
    %43 = vector.shape_cast %42 : vector<16x32xf32> to vector<2x8x4x8xf32>
    %44 = tpu.transpose %43, [0, 2, 1, 3] : vector<2x8x4x8xf32> -> vector<2x4x8x8xf32>
    %45 = vector.shape_cast %44 : vector<2x4x8x8xf32> to vector<8x8x8xf32>
    %46 = arith.truncf %45 : vector<8x8x8xf32> to vector<8x8x8xbf16>
    %47 = vector.extract_strided_slice %36 {offsets = [0, 64], sizes = [16, 32], strides = [1, 1]} : vector<16x96xf32> to vector<16x32xf32>
    %48 = vector.shape_cast %47 : vector<16x32xf32> to vector<2x8x4x8xf32>
    %49 = tpu.transpose %48, [0, 2, 1, 3] : vector<2x8x4x8xf32> -> vector<2x4x8x8xf32>
    %50 = vector.shape_cast %49 : vector<2x4x8x8xf32> to vector<8x8x8xf32>
    %51 = arith.truncf %50 : vector<8x8x8xf32> to vector<8x8x8xbf16>
    "tpu.trace_start"() <{level = 10 : i32, message = "bqd,bkd->bqk"}> : () -> ()
    %cst_20 = arith.constant dense<0.000000e+00> : vector<8x8x8xf32>
    %52 = tpu.matmul %41, %46, %cst_20 {dimension_numbers = #tpu.dot_dimension_numbers<[2], [2], [1], [1], [0, 0, 0, 1, 1, 1], [0], [0]>} : vector<8x8x8xbf16>, vector<8x8x8xbf16>, vector<8x8x8xf32> -> vector<8x8x8xf32>
    "tpu.trace_stop"() : () -> ()
    %53 = arith.addf %52, %3 : vector<8x8x8xf32>
    %cst_21 = arith.constant dense<0xFF800000> : vector<8x8xf32>
    %54 = vector.multi_reduction <maximumf>, %53, %cst_21 [2] : vector<8x8x8xf32> to vector<8x8xf32>
    %55 = vector.shape_cast %54 : vector<8x8xf32> to vector<8x8x1xf32>
    %56 = vector.broadcast %55 : vector<8x8x1xf32> to vector<8x8x8xf32>
    %57 = arith.subf %53, %56 : vector<8x8x8xf32>
    %58 = math.exp %57 : vector<8x8x8xf32>
    %cst_22 = arith.constant dense<0.000000e+00> : vector<8x8xf32>
    %59 = vector.multi_reduction <add>, %58, %cst_22 [2] : vector<8x8x8xf32> to vector<8x8xf32>
    %60 = vector.shape_cast %59 : vector<8x8xf32> to vector<8x8x1xf32>
    %61 = tpu.reciprocal %60 {approx = true} : vector<8x8x1xf32> -> vector<8x8x1xf32>
    %62 = vector.broadcast %61 : vector<8x8x1xf32> to vector<8x8x8xf32>
    %63 = arith.mulf %58, %62 : vector<8x8x8xf32>
    %64 = arith.truncf %63 : vector<8x8x8xf32> to vector<8x8x8xbf16>
    "tpu.trace_start"() <{level = 10 : i32, message = "bqk,bkd->bqd"}> : () -> ()
    %cst_23 = arith.constant dense<0.000000e+00> : vector<8x8x8xf32>
    %65 = tpu.matmul %64, %51, %cst_23 {dimension_numbers = #tpu.dot_dimension_numbers<[2], [1], [1], [2], [0, 0, 0, 1, 1, 2], [0], [0]>} : vector<8x8x8xbf16>, vector<8x8x8xbf16>, vector<8x8x8xf32> -> vector<8x8x8xf32>
    "tpu.trace_stop"() : () -> ()
    %66 = vector.shape_cast %65 : vector<8x8x8xf32> to vector<2x4x8x8xf32>
    %67 = tpu.transpose %66, [0, 2, 1, 3] : vector<2x4x8x8xf32> -> vector<2x8x4x8xf32>
    %68 = vector.shape_cast %67 : vector<2x8x4x8xf32> to vector<16x32xf32>
    %c0_24 = arith.constant 0 : index
    %c0_25 = arith.constant 0 : index
    %c0_26 = arith.constant 0 : index
    %69 = vector.load %arg6[%c0_24, %c0_25, %c0_26] : memref<2x32x32xbf16, #tpu.memory_space<vmem>>, vector<1x32x32xbf16>
    %70 = vector.shape_cast %69 : vector<1x32x32xbf16> to vector<32x32xbf16>
    %71 = arith.truncf %68 : vector<16x32xf32> to vector<16x32xbf16>
    %cst_27 = arith.constant dense<0.000000e+00> : vector<16x32xf32>
    %72 = tpu.matmul %71, %70, %cst_27 {dimension_numbers = #tpu.dot_dimension_numbers<[1], [0], [0], [1], [0, 0, 1, 1], [], []>} : vector<16x32xbf16>, vector<32x32xbf16>, vector<16x32xf32> -> vector<16x32xf32>
    %73 = arith.addf %28, %72 : vector<16x32xf32>
    %c0_28 = arith.constant 0 : index
    %c0_29 = arith.constant 0 : index
    %c0_30 = arith.constant 0 : index
    %74 = vector.load %arg7[%c0_28, %c0_29, %c0_30] : memref<2x1x32xf32, #tpu.memory_space<vmem>>, vector<1x1x32xf32>
    %75 = vector.shape_cast %74 : vector<1x1x32xf32> to vector<1x32xf32>
    %76 = vector.broadcast %75 : vector<1x32xf32> to vector<16x32xf32>
    %77 = arith.addf %73, %76 : vector<16x32xf32>
    %c0_31 = arith.constant 0 : index
    %c0_32 = arith.constant 0 : index
    %c0_33 = arith.constant 0 : index
    %78 = vector.load %arg8[%c0_31, %c0_32, %c0_33] : memref<2x1x32xf32, #tpu.memory_space<vmem>>, vector<1x1x32xf32>
    %79 = vector.shape_cast %78 : vector<1x1x32xf32> to vector<1x32xf32>
    %c0_34 = arith.constant 0 : index
    %c0_35 = arith.constant 0 : index
    %c0_36 = arith.constant 0 : index
    %80 = vector.load %arg9[%c0_34, %c0_35, %c0_36] : memref<2x1x32xf32, #tpu.memory_space<vmem>>, vector<1x1x32xf32>
    %81 = vector.shape_cast %80 : vector<1x1x32xf32> to vector<1x32xf32>
    %cst_37 = arith.constant dense<0.000000e+00> : vector<16xf32>
    %82 = vector.multi_reduction <add>, %77, %cst_37 [1] : vector<16x32xf32> to vector<16xf32>
    %83 = vector.shape_cast %82 : vector<16xf32> to vector<16x1xf32>
    %cst_38 = arith.constant 3.200000e+01 : f32
    %84 = vector.broadcast %cst_38 : f32 to vector<16x1xf32>
    %85 = arith.divf %83, %84 : vector<16x1xf32>
    %86 = vector.broadcast %85 : vector<16x1xf32> to vector<16x32xf32>
    %87 = arith.subf %77, %86 : vector<16x32xf32>
    %88 = arith.mulf %87, %87 : vector<16x32xf32>
    %cst_39 = arith.constant dense<0.000000e+00> : vector<16xf32>
    %89 = vector.multi_reduction <add>, %88, %cst_39 [1] : vector<16x32xf32> to vector<16xf32>
    %90 = vector.shape_cast %89 : vector<16xf32> to vector<16x1xf32>
    %cst_40 = arith.constant 3.200000e+01 : f32
    %91 = vector.broadcast %cst_40 : f32 to vector<16x1xf32>
    %92 = arith.divf %90, %91 : vector<16x1xf32>
    %93 = vector.broadcast %85 : vector<16x1xf32> to vector<16x32xf32>
    %94 = arith.subf %77, %93 : vector<16x32xf32>
    %cst_41 = arith.constant 9.99999974E-6 : f32
    %95 = vector.broadcast %cst_41 : f32 to vector<16x1xf32>
    %96 = arith.addf %92, %95 : vector<16x1xf32>
    %97 = math.rsqrt %96 : vector<16x1xf32>
    %98 = vector.broadcast %97 : vector<16x1xf32> to vector<16x32xf32>
    %99 = arith.mulf %94, %98 : vector<16x32xf32>
    %100 = vector.broadcast %79 : vector<1x32xf32> to vector<16x32xf32>
    %101 = arith.mulf %99, %100 : vector<16x32xf32>
    %102 = vector.broadcast %81 : vector<1x32xf32> to vector<16x32xf32>
    %103 = arith.addf %101, %102 : vector<16x32xf32>
    %c0_42 = arith.constant 0 : index
    %c0_43 = arith.constant 0 : index
    %c0_44 = arith.constant 0 : index
    %104 = vector.load %arg10[%c0_42, %c0_43, %c0_44] : memref<2x32x64xbf16, #tpu.memory_space<vmem>>, vector<1x32x64xbf16>
    %105 = vector.shape_cast %104 : vector<1x32x64xbf16> to vector<32x64xbf16>
    %106 = arith.truncf %103 : vector<16x32xf32> to vector<16x32xbf16>
    %cst_45 = arith.constant dense<0.000000e+00> : vector<16x64xf32>
    %107 = tpu.matmul %106, %105, %cst_45 {dimension_numbers = #tpu.dot_dimension_numbers<[1], [0], [0], [1], [0, 0, 1, 1], [], []>} : vector<16x32xbf16>, vector<32x64xbf16>, vector<16x64xf32> -> vector<16x64xf32>
    %c0_46 = arith.constant 0 : index
    %c0_47 = arith.constant 0 : index
    %c0_48 = arith.constant 0 : index
    %108 = vector.load %arg11[%c0_46, %c0_47, %c0_48] : memref<2x1x64xf32, #tpu.memory_space<vmem>>, vector<1x1x64xf32>
    %109 = vector.shape_cast %108 : vector<1x1x64xf32> to vector<1x64xf32>
    %110 = vector.broadcast %109 : vector<1x64xf32> to vector<16x64xf32>
    %111 = arith.addf %107, %110 : vector<16x64xf32>
    %112 = arith.mulf %111, %111 : vector<16x64xf32>
    %113 = arith.mulf %111, %112 : vector<16x64xf32>
    %cst_49 = arith.constant 4.471500e-02 : f32
    %114 = vector.broadcast %cst_49 : f32 to vector<16x64xf32>
    %115 = arith.mulf %114, %113 : vector<16x64xf32>
    %116 = arith.addf %111, %115 : vector<16x64xf32>
    %cst_50 = arith.constant 0.797884583 : f32
    %117 = vector.broadcast %cst_50 : f32 to vector<16x64xf32>
    %118 = arith.mulf %117, %116 : vector<16x64xf32>
    %119 = math.tanh %118 : vector<16x64xf32>
    %cst_51 = arith.constant 1.000000e+00 : f32
    %120 = vector.broadcast %cst_51 : f32 to vector<16x64xf32>
    %121 = arith.addf %120, %119 : vector<16x64xf32>
    %cst_52 = arith.constant 5.000000e-01 : f32
    %122 = vector.broadcast %cst_52 : f32 to vector<16x64xf32>
    %123 = arith.mulf %122, %121 : vector<16x64xf32>
    %124 = arith.mulf %111, %123 : vector<16x64xf32>
    %c0_53 = arith.constant 0 : index
    %c0_54 = arith.constant 0 : index
    %c0_55 = arith.constant 0 : index
    %125 = vector.load %arg12[%c0_53, %c0_54, %c0_55] : memref<2x64x32xbf16, #tpu.memory_space<vmem>>, vector<1x64x32xbf16>
    %126 = vector.shape_cast %125 : vector<1x64x32xbf16> to vector<64x32xbf16>
    %127 = arith.truncf %124 : vector<16x64xf32> to vector<16x64xbf16>
    %cst_56 = arith.constant dense<0.000000e+00> : vector<16x32xf32>
    %128 = tpu.matmul %127, %126, %cst_56 {dimension_numbers = #tpu.dot_dimension_numbers<[1], [0], [0], [1], [0, 0, 1, 1], [], []>} : vector<16x64xbf16>, vector<64x32xbf16>, vector<16x32xf32> -> vector<16x32xf32>
    %c0_57 = arith.constant 0 : index
    %c0_58 = arith.constant 0 : index
    %c0_59 = arith.constant 0 : index
    %129 = vector.load %arg13[%c0_57, %c0_58, %c0_59] : memref<2x1x32xf32, #tpu.memory_space<vmem>>, vector<1x1x32xf32>
    %130 = vector.shape_cast %129 : vector<1x1x32xf32> to vector<1x32xf32>
    %131 = vector.broadcast %130 : vector<1x32xf32> to vector<16x32xf32>
    %132 = arith.addf %128, %131 : vector<16x32xf32>
    %133 = arith.addf %103, %132 : vector<16x32xf32>
    %c0_60 = arith.constant 0 : index
    %c0_61 = arith.constant 0 : index
    %c0_62 = arith.constant 0 : index
    %134 = vector.load %arg14[%c0_60, %c0_61, %c0_62] : memref<2x1x32xf32, #tpu.memory_space<vmem>>, vector<1x1x32xf32>
    %135 = vector.shape_cast %134 : vector<1x1x32xf32> to vector<1x32xf32>
    %c0_63 = arith.constant 0 : index
    %c0_64 = arith.constant 0 : index
    %c0_65 = arith.constant 0 : index
    %136 = vector.load %arg15[%c0_63, %c0_64, %c0_65] : memref<2x1x32xf32, #tpu.memory_space<vmem>>, vector<1x1x32xf32>
    %137 = vector.shape_cast %136 : vector<1x1x32xf32> to vector<1x32xf32>
    %cst_66 = arith.constant dense<0.000000e+00> : vector<16xf32>
    %138 = vector.multi_reduction <add>, %133, %cst_66 [1] : vector<16x32xf32> to vector<16xf32>
    %139 = vector.shape_cast %138 : vector<16xf32> to vector<16x1xf32>
    %cst_67 = arith.constant 3.200000e+01 : f32
    %140 = vector.broadcast %cst_67 : f32 to vector<16x1xf32>
    %141 = arith.divf %139, %140 : vector<16x1xf32>
    %142 = vector.broadcast %141 : vector<16x1xf32> to vector<16x32xf32>
    %143 = arith.subf %133, %142 : vector<16x32xf32>
    %144 = arith.mulf %143, %143 : vector<16x32xf32>
    %cst_68 = arith.constant dense<0.000000e+00> : vector<16xf32>
    %145 = vector.multi_reduction <add>, %144, %cst_68 [1] : vector<16x32xf32> to vector<16xf32>
    %146 = vector.shape_cast %145 : vector<16xf32> to vector<16x1xf32>
    %cst_69 = arith.constant 3.200000e+01 : f32
    %147 = vector.broadcast %cst_69 : f32 to vector<16x1xf32>
    %148 = arith.divf %146, %147 : vector<16x1xf32>
    %149 = vector.broadcast %141 : vector<16x1xf32> to vector<16x32xf32>
    %150 = arith.subf %133, %149 : vector<16x32xf32>
    %cst_70 = arith.constant 9.99999974E-6 : f32
    %151 = vector.broadcast %cst_70 : f32 to vector<16x1xf32>
    %152 = arith.addf %148, %151 : vector<16x1xf32>
    %153 = math.rsqrt %152 : vector<16x1xf32>
    %154 = vector.broadcast %153 : vector<16x1xf32> to vector<16x32xf32>
    %155 = arith.mulf %150, %154 : vector<16x32xf32>
    %156 = vector.broadcast %135 : vector<1x32xf32> to vector<16x32xf32>
    %157 = arith.mulf %155, %156 : vector<16x32xf32>
    %158 = vector.broadcast %137 : vector<1x32xf32> to vector<16x32xf32>
    %159 = arith.addf %157, %158 : vector<16x32xf32>
    %c1 = arith.constant 1 : index
    %c0_71 = arith.constant 0 : index
    %c0_72 = arith.constant 0 : index
    %160 = vector.load %arg4[%c1, %c0_71, %c0_72] : memref<2x32x96xbf16, #tpu.memory_space<vmem>>, vector<1x32x96xbf16>
    %161 = vector.shape_cast %160 : vector<1x32x96xbf16> to vector<32x96xbf16>
    %162 = arith.truncf %159 : vector<16x32xf32> to vector<16x32xbf16>
    %cst_73 = arith.constant dense<0.000000e+00> : vector<16x96xf32>
    %163 = tpu.matmul %162, %161, %cst_73 {dimension_numbers = #tpu.dot_dimension_numbers<[1], [0], [0], [1], [0, 0, 1, 1], [], []>} : vector<16x32xbf16>, vector<32x96xbf16>, vector<16x96xf32> -> vector<16x96xf32>
    %c1_74 = arith.constant 1 : index
    %c0_75 = arith.constant 0 : index
    %c0_76 = arith.constant 0 : index
    %164 = vector.load %arg5[%c1_74, %c0_75, %c0_76] : memref<2x1x96xf32, #tpu.memory_space<vmem>>, vector<1x1x96xf32>
    %165 = vector.shape_cast %164 : vector<1x1x96xf32> to vector<1x96xf32>
    %166 = vector.broadcast %165 : vector<1x96xf32> to vector<16x96xf32>
    %167 = arith.addf %163, %166 : vector<16x96xf32>
    %168 = vector.extract_strided_slice %167 {offsets = [0, 0], sizes = [16, 32], strides = [1, 1]} : vector<16x96xf32> to vector<16x32xf32>
    %169 = vector.shape_cast %168 : vector<16x32xf32> to vector<2x8x4x8xf32>
    %170 = tpu.transpose %169, [0, 2, 1, 3] : vector<2x8x4x8xf32> -> vector<2x4x8x8xf32>
    %171 = vector.shape_cast %170 : vector<2x4x8x8xf32> to vector<8x8x8xf32>
    %172 = arith.truncf %171 : vector<8x8x8xf32> to vector<8x8x8xbf16>
    %173 = vector.extract_strided_slice %167 {offsets = [0, 32], sizes = [16, 32], strides = [1, 1]} : vector<16x96xf32> to vector<16x32xf32>
    %174 = vector.shape_cast %173 : vector<16x32xf32> to vector<2x8x4x8xf32>
    %175 = tpu.transpose %174, [0, 2, 1, 3] : vector<2x8x4x8xf32> -> vector<2x4x8x8xf32>
    %176 = vector.shape_cast %175 : vector<2x4x8x8xf32> to vector<8x8x8xf32>
    %177 = arith.truncf %176 : vector<8x8x8xf32> to vector<8x8x8xbf16>
    %178 = vector.extract_strided_slice %167 {offsets = [0, 64], sizes = [16, 32], strides = [1, 1]} : vector<16x96xf32> to vector<16x32xf32>
    %179 = vector.shape_cast %178 : vector<16x32xf32> to vector<2x8x4x8xf32>
    %180 = tpu.transpose %179, [0, 2, 1, 3] : vector<2x8x4x8xf32> -> vector<2x4x8x8xf32>
    %181 = vector.shape_cast %180 : vector<2x4x8x8xf32> to vector<8x8x8xf32>
    %182 = arith.truncf %181 : vector<8x8x8xf32> to vector<8x8x8xbf16>
    "tpu.trace_start"() <{level = 10 : i32, message = "bqd,bkd->bqk"}> : () -> ()
    %cst_77 = arith.constant dense<0.000000e+00> : vector<8x8x8xf32>
    %183 = tpu.matmul %172, %177, %cst_77 {dimension_numbers = #tpu.dot_dimension_numbers<[2], [2], [1], [1], [0, 0, 0, 1, 1, 1], [0], [0]>} : vector<8x8x8xbf16>, vector<8x8x8xbf16>, vector<8x8x8xf32> -> vector<8x8x8xf32>
    "tpu.trace_stop"() : () -> ()
    %184 = arith.addf %183, %3 : vector<8x8x8xf32>
    %cst_78 = arith.constant dense<0xFF800000> : vector<8x8xf32>
    %185 = vector.multi_reduction <maximumf>, %184, %cst_78 [2] : vector<8x8x8xf32> to vector<8x8xf32>
    %186 = vector.shape_cast %185 : vector<8x8xf32> to vector<8x8x1xf32>
    %187 = vector.broadcast %186 : vector<8x8x1xf32> to vector<8x8x8xf32>
    %188 = arith.subf %184, %187 : vector<8x8x8xf32>
    %189 = math.exp %188 : vector<8x8x8xf32>
    %cst_79 = arith.constant dense<0.000000e+00> : vector<8x8xf32>
    %190 = vector.multi_reduction <add>, %189, %cst_79 [2] : vector<8x8x8xf32> to vector<8x8xf32>
    %191 = vector.shape_cast %190 : vector<8x8xf32> to vector<8x8x1xf32>
    %192 = tpu.reciprocal %191 {approx = true} : vector<8x8x1xf32> -> vector<8x8x1xf32>
    %193 = vector.broadcast %192 : vector<8x8x1xf32> to vector<8x8x8xf32>
    %194 = arith.mulf %189, %193 : vector<8x8x8xf32>
    %195 = arith.truncf %194 : vector<8x8x8xf32> to vector<8x8x8xbf16>
    "tpu.trace_start"() <{level = 10 : i32, message = "bqk,bkd->bqd"}> : () -> ()
    %cst_80 = arith.constant dense<0.000000e+00> : vector<8x8x8xf32>
    %196 = tpu.matmul %195, %182, %cst_80 {dimension_numbers = #tpu.dot_dimension_numbers<[2], [1], [1], [2], [0, 0, 0, 1, 1, 2], [0], [0]>} : vector<8x8x8xbf16>, vector<8x8x8xbf16>, vector<8x8x8xf32> -> vector<8x8x8xf32>
    "tpu.trace_stop"() : () -> ()
    %197 = vector.shape_cast %196 : vector<8x8x8xf32> to vector<2x4x8x8xf32>
    %198 = tpu.transpose %197, [0, 2, 1, 3] : vector<2x4x8x8xf32> -> vector<2x8x4x8xf32>
    %199 = vector.shape_cast %198 : vector<2x8x4x8xf32> to vector<16x32xf32>
    %c1_81 = arith.constant 1 : index
    %c0_82 = arith.constant 0 : index
    %c0_83 = arith.constant 0 : index
    %200 = vector.load %arg6[%c1_81, %c0_82, %c0_83] : memref<2x32x32xbf16, #tpu.memory_space<vmem>>, vector<1x32x32xbf16>
    %201 = vector.shape_cast %200 : vector<1x32x32xbf16> to vector<32x32xbf16>
    %202 = arith.truncf %199 : vector<16x32xf32> to vector<16x32xbf16>
    %cst_84 = arith.constant dense<0.000000e+00> : vector<16x32xf32>
    %203 = tpu.matmul %202, %201, %cst_84 {dimension_numbers = #tpu.dot_dimension_numbers<[1], [0], [0], [1], [0, 0, 1, 1], [], []>} : vector<16x32xbf16>, vector<32x32xbf16>, vector<16x32xf32> -> vector<16x32xf32>
    %204 = arith.addf %159, %203 : vector<16x32xf32>
    %c1_85 = arith.constant 1 : index
    %c0_86 = arith.constant 0 : index
    %c0_87 = arith.constant 0 : index
    %205 = vector.load %arg7[%c1_85, %c0_86, %c0_87] : memref<2x1x32xf32, #tpu.memory_space<vmem>>, vector<1x1x32xf32>
    %206 = vector.shape_cast %205 : vector<1x1x32xf32> to vector<1x32xf32>
    %207 = vector.broadcast %206 : vector<1x32xf32> to vector<16x32xf32>
    %208 = arith.addf %204, %207 : vector<16x32xf32>
    %c1_88 = arith.constant 1 : index
    %c0_89 = arith.constant 0 : index
    %c0_90 = arith.constant 0 : index
    %209 = vector.load %arg8[%c1_88, %c0_89, %c0_90] : memref<2x1x32xf32, #tpu.memory_space<vmem>>, vector<1x1x32xf32>
    %210 = vector.shape_cast %209 : vector<1x1x32xf32> to vector<1x32xf32>
    %c1_91 = arith.constant 1 : index
    %c0_92 = arith.constant 0 : index
    %c0_93 = arith.constant 0 : index
    %211 = vector.load %arg9[%c1_91, %c0_92, %c0_93] : memref<2x1x32xf32, #tpu.memory_space<vmem>>, vector<1x1x32xf32>
    %212 = vector.shape_cast %211 : vector<1x1x32xf32> to vector<1x32xf32>
    %cst_94 = arith.constant dense<0.000000e+00> : vector<16xf32>
    %213 = vector.multi_reduction <add>, %208, %cst_94 [1] : vector<16x32xf32> to vector<16xf32>
    %214 = vector.shape_cast %213 : vector<16xf32> to vector<16x1xf32>
    %cst_95 = arith.constant 3.200000e+01 : f32
    %215 = vector.broadcast %cst_95 : f32 to vector<16x1xf32>
    %216 = arith.divf %214, %215 : vector<16x1xf32>
    %217 = vector.broadcast %216 : vector<16x1xf32> to vector<16x32xf32>
    %218 = arith.subf %208, %217 : vector<16x32xf32>
    %219 = arith.mulf %218, %218 : vector<16x32xf32>
    %cst_96 = arith.constant dense<0.000000e+00> : vector<16xf32>
    %220 = vector.multi_reduction <add>, %219, %cst_96 [1] : vector<16x32xf32> to vector<16xf32>
    %221 = vector.shape_cast %220 : vector<16xf32> to vector<16x1xf32>
    %cst_97 = arith.constant 3.200000e+01 : f32
    %222 = vector.broadcast %cst_97 : f32 to vector<16x1xf32>
    %223 = arith.divf %221, %222 : vector<16x1xf32>
    %224 = vector.broadcast %216 : vector<16x1xf32> to vector<16x32xf32>
    %225 = arith.subf %208, %224 : vector<16x32xf32>
    %cst_98 = arith.constant 9.99999974E-6 : f32
    %226 = vector.broadcast %cst_98 : f32 to vector<16x1xf32>
    %227 = arith.addf %223, %226 : vector<16x1xf32>
    %228 = math.rsqrt %227 : vector<16x1xf32>
    %229 = vector.broadcast %228 : vector<16x1xf32> to vector<16x32xf32>
    %230 = arith.mulf %225, %229 : vector<16x32xf32>
    %231 = vector.broadcast %210 : vector<1x32xf32> to vector<16x32xf32>
    %232 = arith.mulf %230, %231 : vector<16x32xf32>
    %233 = vector.broadcast %212 : vector<1x32xf32> to vector<16x32xf32>
    %234 = arith.addf %232, %233 : vector<16x32xf32>
    %c1_99 = arith.constant 1 : index
    %c0_100 = arith.constant 0 : index
    %c0_101 = arith.constant 0 : index
    %235 = vector.load %arg10[%c1_99, %c0_100, %c0_101] : memref<2x32x64xbf16, #tpu.memory_space<vmem>>, vector<1x32x64xbf16>
    %236 = vector.shape_cast %235 : vector<1x32x64xbf16> to vector<32x64xbf16>
    %237 = arith.truncf %234 : vector<16x32xf32> to vector<16x32xbf16>
    %cst_102 = arith.constant dense<0.000000e+00> : vector<16x64xf32>
    %238 = tpu.matmul %237, %236, %cst_102 {dimension_numbers = #tpu.dot_dimension_numbers<[1], [0], [0], [1], [0, 0, 1, 1], [], []>} : vector<16x32xbf16>, vector<32x64xbf16>, vector<16x64xf32> -> vector<16x64xf32>
    %c1_103 = arith.constant 1 : index
    %c0_104 = arith.constant 0 : index
    %c0_105 = arith.constant 0 : index
    %239 = vector.load %arg11[%c1_103, %c0_104, %c0_105] : memref<2x1x64xf32, #tpu.memory_space<vmem>>, vector<1x1x64xf32>
    %240 = vector.shape_cast %239 : vector<1x1x64xf32> to vector<1x64xf32>
    %241 = vector.broadcast %240 : vector<1x64xf32> to vector<16x64xf32>
    %242 = arith.addf %238, %241 : vector<16x64xf32>
    %243 = arith.mulf %242, %242 : vector<16x64xf32>
    %244 = arith.mulf %242, %243 : vector<16x64xf32>
    %cst_106 = arith.constant 4.471500e-02 : f32
    %245 = vector.broadcast %cst_106 : f32 to vector<16x64xf32>
    %246 = arith.mulf %245, %244 : vector<16x64xf32>
    %247 = arith.addf %242, %246 : vector<16x64xf32>
    %cst_107 = arith.constant 0.797884583 : f32
    %248 = vector.broadcast %cst_107 : f32 to vector<16x64xf32>
    %249 = arith.mulf %248, %247 : vector<16x64xf32>
    %250 = math.tanh %249 : vector<16x64xf32>
    %cst_108 = arith.constant 1.000000e+00 : f32
    %251 = vector.broadcast %cst_108 : f32 to vector<16x64xf32>
    %252 = arith.addf %251, %250 : vector<16x64xf32>
    %cst_109 = arith.constant 5.000000e-01 : f32
    %253 = vector.broadcast %cst_109 : f32 to vector<16x64xf32>
    %254 = arith.mulf %253, %252 : vector<16x64xf32>
    %255 = arith.mulf %242, %254 : vector<16x64xf32>
    %c1_110 = arith.constant 1 : index
    %c0_111 = arith.constant 0 : index
    %c0_112 = arith.constant 0 : index
    %256 = vector.load %arg12[%c1_110, %c0_111, %c0_112] : memref<2x64x32xbf16, #tpu.memory_space<vmem>>, vector<1x64x32xbf16>
    %257 = vector.shape_cast %256 : vector<1x64x32xbf16> to vector<64x32xbf16>
    %258 = arith.truncf %255 : vector<16x64xf32> to vector<16x64xbf16>
    %cst_113 = arith.constant dense<0.000000e+00> : vector<16x32xf32>
    %259 = tpu.matmul %258, %257, %cst_113 {dimension_numbers = #tpu.dot_dimension_numbers<[1], [0], [0], [1], [0, 0, 1, 1], [], []>} : vector<16x64xbf16>, vector<64x32xbf16>, vector<16x32xf32> -> vector<16x32xf32>
    %c1_114 = arith.constant 1 : index
    %c0_115 = arith.constant 0 : index
    %c0_116 = arith.constant 0 : index
    %260 = vector.load %arg13[%c1_114, %c0_115, %c0_116] : memref<2x1x32xf32, #tpu.memory_space<vmem>>, vector<1x1x32xf32>
    %261 = vector.shape_cast %260 : vector<1x1x32xf32> to vector<1x32xf32>
    %262 = vector.broadcast %261 : vector<1x32xf32> to vector<16x32xf32>
    %263 = arith.addf %259, %262 : vector<16x32xf32>
    %264 = arith.addf %234, %263 : vector<16x32xf32>
    %c1_117 = arith.constant 1 : index
    %c0_118 = arith.constant 0 : index
    %c0_119 = arith.constant 0 : index
    %265 = vector.load %arg14[%c1_117, %c0_118, %c0_119] : memref<2x1x32xf32, #tpu.memory_space<vmem>>, vector<1x1x32xf32>
    %266 = vector.shape_cast %265 : vector<1x1x32xf32> to vector<1x32xf32>
    %c1_120 = arith.constant 1 : index
    %c0_121 = arith.constant 0 : index
    %c0_122 = arith.constant 0 : index
    %267 = vector.load %arg15[%c1_120, %c0_121, %c0_122] : memref<2x1x32xf32, #tpu.memory_space<vmem>>, vector<1x1x32xf32>
    %268 = vector.shape_cast %267 : vector<1x1x32xf32> to vector<1x32xf32>
    %cst_123 = arith.constant dense<0.000000e+00> : vector<16xf32>
    %269 = vector.multi_reduction <add>, %264, %cst_123 [1] : vector<16x32xf32> to vector<16xf32>
    %270 = vector.shape_cast %269 : vector<16xf32> to vector<16x1xf32>
    %cst_124 = arith.constant 3.200000e+01 : f32
    %271 = vector.broadcast %cst_124 : f32 to vector<16x1xf32>
    %272 = arith.divf %270, %271 : vector<16x1xf32>
    %273 = vector.broadcast %272 : vector<16x1xf32> to vector<16x32xf32>
    %274 = arith.subf %264, %273 : vector<16x32xf32>
    %275 = arith.mulf %274, %274 : vector<16x32xf32>
    %cst_125 = arith.constant dense<0.000000e+00> : vector<16xf32>
    %276 = vector.multi_reduction <add>, %275, %cst_125 [1] : vector<16x32xf32> to vector<16xf32>
    %277 = vector.shape_cast %276 : vector<16xf32> to vector<16x1xf32>
    %cst_126 = arith.constant 3.200000e+01 : f32
    %278 = vector.broadcast %cst_126 : f32 to vector<16x1xf32>
    %279 = arith.divf %277, %278 : vector<16x1xf32>
    %280 = vector.broadcast %272 : vector<16x1xf32> to vector<16x32xf32>
    %281 = arith.subf %264, %280 : vector<16x32xf32>
    %cst_127 = arith.constant 9.99999974E-6 : f32
    %282 = vector.broadcast %cst_127 : f32 to vector<16x1xf32>
    %283 = arith.addf %279, %282 : vector<16x1xf32>
    %284 = math.rsqrt %283 : vector<16x1xf32>
    %285 = vector.broadcast %284 : vector<16x1xf32> to vector<16x32xf32>
    %286 = arith.mulf %281, %285 : vector<16x32xf32>
    %287 = vector.broadcast %266 : vector<1x32xf32> to vector<16x32xf32>
    %288 = arith.mulf %286, %287 : vector<16x32xf32>
    %289 = vector.broadcast %268 : vector<1x32xf32> to vector<16x32xf32>
    %290 = arith.addf %288, %289 : vector<16x32xf32>
    %291 = vector.shape_cast %290 : vector<16x32xf32> to vector<2x8x32xf32>
    %292 = vector.extract_strided_slice %291 {offsets = [0, 0, 0], sizes = [2, 1, 32], strides = [1, 1, 1]} : vector<2x8x32xf32> to vector<2x1x32xf32>
    %293 = vector.shape_cast %292 : vector<2x1x32xf32> to vector<2x32xf32>
    %c0_128 = arith.constant 0 : index
    %c0_129 = arith.constant 0 : index
    %c0_130 = arith.constant 0 : index
    %294 = vector.load %arg16[%c0_128, %c0_129, %c0_130] : memref<2x32x2xbf16, #tpu.memory_space<vmem>>, vector<1x32x2xbf16>
    %295 = vector.shape_cast %294 : vector<1x32x2xbf16> to vector<32x2xbf16>
    %296 = arith.truncf %293 : vector<2x32xf32> to vector<2x32xbf16>
    %cst_131 = arith.constant dense<0.000000e+00> : vector<2x2xf32>
    %297 = tpu.matmul %296, %295, %cst_131 {dimension_numbers = #tpu.dot_dimension_numbers<[1], [0], [0], [1], [0, 0, 1, 1], [], []>} : vector<2x32xbf16>, vector<32x2xbf16>, vector<2x2xf32> -> vector<2x2xf32>
    %c1_132 = arith.constant 1 : index
    %c0_133 = arith.constant 0 : index
    %c0_134 = arith.constant 0 : index
    %298 = vector.load %arg16[%c1_132, %c0_133, %c0_134] : memref<2x32x2xbf16, #tpu.memory_space<vmem>>, vector<1x32x2xbf16>
    %299 = vector.shape_cast %298 : vector<1x32x2xbf16> to vector<32x2xbf16>
    %300 = arith.truncf %290 : vector<16x32xf32> to vector<16x32xbf16>
    %cst_135 = arith.constant dense<0.000000e+00> : vector<16x2xf32>
    %301 = tpu.matmul %300, %299, %cst_135 {dimension_numbers = #tpu.dot_dimension_numbers<[1], [0], [0], [1], [0, 0, 1, 1], [], []>} : vector<16x32xbf16>, vector<32x2xbf16>, vector<16x2xf32> -> vector<16x2xf32>
    %302 = vector.shape_cast %301 : vector<16x2xf32> to vector<2x8x2xf32>
    %303 = vector.shape_cast %297 : vector<2x2xf32> to vector<2x1x2xf32>
    %304 = vector.broadcast %303 : vector<2x1x2xf32> to vector<2x8x2xf32>
    %305 = arith.addf %302, %304 : vector<2x8x2xf32>
    %c0_136 = arith.constant 0 : index
    %c0_137 = arith.constant 0 : index
    %306 = vector.load %arg17[%c0_136, %c0_137] : memref<1x2xf32, #tpu.memory_space<vmem>>, vector<1x2xf32>
    %307 = vector.shape_cast %306 : vector<1x2xf32> to vector<1x1x2xf32>
    %308 = vector.broadcast %307 : vector<1x1x2xf32> to vector<2x8x2xf32>
    %309 = arith.addf %305, %308 : vector<2x8x2xf32>
    %c0_138 = arith.constant 0 : index
    %c0_139 = arith.constant 0 : index
    %c0_140 = arith.constant 0 : index
    %310 = vector.load %arg18[%c0_138, %c0_139, %c0_140] : memref<2x8x2xf32, #tpu.memory_space<vmem>>, vector<2x8x2xf32>
    tpu.vector_store %arg18[%c0_138, %c0_139, %c0_140], %309 {strides = array<i32>} : memref<2x8x2xf32, #tpu.memory_space<vmem>>, vector<2x8x2xf32>,
    return
  }
}

</mosaic_0001>

<llo_original>
// kernel: custom_roberta_forward.1
$region0: #{custom_roberta_forward.1}
  #allocation0 [shape = 'u32[]', space=smem, size = 0x4, offset = 0x4, fixed_abs, tag = 'smem constant byte address 0x4 - core index']
  #allocation1 [shape = 'u32[72,128]{1,0:T(1,128)}', space=vmem, size = 0x9000, scoped, tag = 'internal scratch']
  %s0 = inlined_call_operand.vmem [shape: f32[16,32], index: 0, kind: input, shape index: {}]
  %s1 = inlined_call_operand.vmem [shape: f32[2,1,1,8], index: 1, kind: input, shape index: {}]
  %s2 = inlined_call_operand.vmem [shape: f32[1,32], index: 2, kind: input, shape index: {}]
  %s3 = inlined_call_operand.vmem [shape: f32[1,32], index: 3, kind: input, shape index: {}]
  %s4 = inlined_call_operand.vmem [shape: bf16[2,32,96], index: 4, kind: input, shape index: {}]
  %s5 = inlined_call_operand.vmem [shape: f32[2,1,96], index: 5, kind: input, shape index: {}]
  %s6 = inlined_call_operand.vmem [shape: bf16[2,32,32], index: 6, kind: input, shape index: {}]
  %s7 = inlined_call_operand.vmem [shape: f32[2,1,32], index: 7, kind: input, shape index: {}]
  %s8 = inlined_call_operand.vmem [shape: f32[2,1,32], index: 8, kind: input, shape index: {}]
  %s9 = inlined_call_operand.vmem [shape: f32[2,1,32], index: 9, kind: input, shape index: {}]
  %s10 = inlined_call_operand.vmem [shape: bf16[2,32,64], index: 10, kind: input, shape index: {}]
  %s11 = inlined_call_operand.vmem [shape: f32[2,1,64], index: 11, kind: input, shape index: {}]
  %s12 = inlined_call_operand.vmem [shape: bf16[2,64,32], index: 12, kind: input, shape index: {}]
  %s13 = inlined_call_operand.vmem [shape: f32[2,1,32], index: 13, kind: input, shape index: {}]
  %s14 = inlined_call_operand.vmem [shape: f32[2,1,32], index: 14, kind: input, shape index: {}]
  %s15 = inlined_call_operand.vmem [shape: f32[2,1,32], index: 15, kind: input, shape index: {}]
  %s16 = inlined_call_operand.vmem [shape: bf16[2,32,2], index: 16, kind: input, shape index: {}]
  %s17 = inlined_call_operand.vmem [shape: f32[1,2], index: 17, kind: input, shape index: {}]
  %s18 = inlined_call_operand.vmem [shape: f32[2,8,2], index: 18, kind: output, shape index: {}]
  %s19 = sld [smem:[#allocation0]]
  $region82: #{custom_roberta_forward.1} parent=0
    _
  %s21 = ssub.s32 1, %s19
  %s22 = scalar_select 0, %s21, %s19
  // Predicated region
  $region2: #{custom_roberta_forward.1} parent=0 // pred_check
    _
  $region3: #{custom_roberta_forward.1} parent=0 // pred_check_branch
    %24 = sbr.rel (0) target = $region5
  $region4: #{custom_roberta_forward.1} parent=0 // pred_region
    _
  $region5: #{custom_roberta_forward.1} parent=0 // pred_fallthru
    _
  // Predicated region
  $region6: #{custom_roberta_forward.1} parent=0 // pred_check
    _
  $region7: #{custom_roberta_forward.1} parent=0 // pred_check_branch
    %26 = sbr.rel (0) target = $region9
  $region8: #{custom_roberta_forward.1} parent=0 // pred_region
    _
  $region9: #{custom_roberta_forward.1} parent=0 // pred_fallthru
    _
  // Predicated region
  $region10: #{custom_roberta_forward.1} parent=0 // pred_check
    _
  $region11: #{custom_roberta_forward.1} parent=0 // pred_check_branch
    %28 = sbr.rel (0) target = $region13
  $region12: #{custom_roberta_forward.1} parent=0 // pred_region
    _
  $region13: #{custom_roberta_forward.1} parent=0 // pred_fallthru
    _
  // Predicated region
  $region14: #{custom_roberta_forward.1} parent=0 // pred_check
    _
  $region15: #{custom_roberta_forward.1} parent=0 // pred_check_branch
    %30 = sbr.rel (0) target = $region17
  $region16: #{custom_roberta_forward.1} parent=0 // pred_region
    _
  $region17: #{custom_roberta_forward.1} parent=0 // pred_fallthru
    _
  // Predicated region
  $region18: #{custom_roberta_forward.1} parent=0 // pred_check
    _
  $region19: #{custom_roberta_forward.1} parent=0 // pred_check_branch
    %32 = sbr.rel (0) target = $region21
  $region20: #{custom_roberta_forward.1} parent=0 // pred_region
    _
  $region21: #{custom_roberta_forward.1} parent=0 // pred_fallthru
    _
  // Predicated region
  $region22: #{custom_roberta_forward.1} parent=0 // pred_check
    _
  $region23: #{custom_roberta_forward.1} parent=0 // pred_check_branch
    %34 = sbr.rel (0) target = $region25
  $region24: #{custom_roberta_forward.1} parent=0 // pred_region
    _
  $region25: #{custom_roberta_forward.1} parent=0 // pred_fallthru
    _
  // Predicated region
  $region26: #{custom_roberta_forward.1} parent=0 // pred_check
    _
  $region27: #{custom_roberta_forward.1} parent=0 // pred_check_branch
    %36 = sbr.rel (0) target = $region29
  $region28: #{custom_roberta_forward.1} parent=0 // pred_region
    _
  $region29: #{custom_roberta_forward.1} parent=0 // pred_fallthru
    _
  // Predicated region
  $region30: #{custom_roberta_forward.1} parent=0 // pred_check
    _
  $region31: #{custom_roberta_forward.1} parent=0 // pred_check_branch
    %38 = sbr.rel (0) target = $region33
  $region32: #{custom_roberta_forward.1} parent=0 // pred_region
    _
  $region33: #{custom_roberta_forward.1} parent=0 // pred_fallthru
    _
  // Predicated region
  $region34: #{custom_roberta_forward.1} parent=0 // pred_check
    _
  $region35: #{custom_roberta_forward.1} parent=0 // pred_check_branch
    %40 = sbr.rel (0) target = $region37
  $region36: #{custom_roberta_forward.1} parent=0 // pred_region
    _
  $region37: #{custom_roberta_forward.1} parent=0 // pred_fallthru
    _
  // Predicated region
  $region38: #{custom_roberta_forward.1} parent=0 // pred_check
    _
  $region39: #{custom_roberta_forward.1} parent=0 // pred_check_branch
    %42 = sbr.rel (0) target = $region41
  $region40: #{custom_roberta_forward.1} parent=0 // pred_region
    _
  $region41: #{custom_roberta_forward.1} parent=0 // pred_fallthru
    _
  // Predicated region
  $region42: #{custom_roberta_forward.1} parent=0 // pred_check
    _
  $region43: #{custom_roberta_forward.1} parent=0 // pred_check_branch
    %44 = sbr.rel (0) target = $region45
  $region44: #{custom_roberta_forward.1} parent=0 // pred_region
    _
  $region45: #{custom_roberta_forward.1} parent=0 // pred_fallthru
    _
  // Predicated region
  $region46: #{custom_roberta_forward.1} parent=0 // pred_check
    _
  $region47: #{custom_roberta_forward.1} parent=0 // pred_check_branch
    %46 = sbr.rel (0) target = $region49
  $region48: #{custom_roberta_forward.1} parent=0 // pred_region
    _
  $region49: #{custom_roberta_forward.1} parent=0 // pred_fallthru
    _
  // Predicated region
  $region50: #{custom_roberta_forward.1} parent=0 // pred_check
    _
  $region51: #{custom_roberta_forward.1} parent=0 // pred_check_branch
    %48 = sbr.rel (0) target = $region53
  $region52: #{custom_roberta_forward.1} parent=0 // pred_region
    _
  $region53: #{custom_roberta_forward.1} parent=0 // pred_fallthru
    _
  // Predicated region
  $region54: #{custom_roberta_forward.1} parent=0 // pred_check
    _
  $region55: #{custom_roberta_forward.1} parent=0 // pred_check_branch
    %50 = sbr.rel (0) target = $region57
  $region56: #{custom_roberta_forward.1} parent=0 // pred_region
    _
  $region57: #{custom_roberta_forward.1} parent=0 // pred_fallthru
    _
  // Predicated region
  $region58: #{custom_roberta_forward.1} parent=0 // pred_check
    _
  $region59: #{custom_roberta_forward.1} parent=0 // pred_check_branch
    %52 = sbr.rel (0) target = $region61
  $region60: #{custom_roberta_forward.1} parent=0 // pred_region
    _
  $region61: #{custom_roberta_forward.1} parent=0 // pred_fallthru
    _
  // Predicated region
  $region62: #{custom_roberta_forward.1} parent=0 // pred_check
    _
  $region63: #{custom_roberta_forward.1} parent=0 // pred_check_branch
    %54 = sbr.rel (0) target = $region65
  $region64: #{custom_roberta_forward.1} parent=0 // pred_region
    _
  $region65: #{custom_roberta_forward.1} parent=0 // pred_fallthru
    _
  // Predicated region
  $region66: #{custom_roberta_forward.1} parent=0 // pred_check
    _
  $region67: #{custom_roberta_forward.1} parent=0 // pred_check_branch
    %56 = sbr.rel (0) target = $region69
  $region68: #{custom_roberta_forward.1} parent=0 // pred_region
    _
  $region69: #{custom_roberta_forward.1} parent=0 // pred_fallthru
    _
  // Predicated region
  $region70: #{custom_roberta_forward.1} parent=0 // pred_check
    _
  $region71: #{custom_roberta_forward.1} parent=0 // pred_check_branch
    %58 = sbr.rel (0) target = $region73
  $region72: #{custom_roberta_forward.1} parent=0 // pred_region
    _
  $region73: #{custom_roberta_forward.1} parent=0 // pred_fallthru
    _
  %v60 = vld [vmem:[%s1] sm:$0x1]
  %v61 = vld [vmem:[%s1 + $0x1] sm:$0x1]
  %v64 = vperm.slane %v60, 0
  %v65 = vperm.slane %v61, 0
  %v68 = vld [vmem:[%s0] sm:$0xff]
  %v69 = vld [vmem:[%s0 + $0x8] sm:$0xff]
  %v70 = vld [vmem:[%s2] sm:$0x1]
  %v71 = vld [vmem:[%s3] sm:$0x1]
  %vm72 = vcmask 261120
  %v73 = vsel %vm72, %v68, 0.0
  %74 = vadd.xlane.f32.xlu0 %v73
  %v75 = vpop.xlane.xlu0 %74
  %v76 = vsel %vm72, %v69, 0.0
  %77 = vadd.xlane.f32.xlu0 %v76
  %v78 = vpop.xlane.xlu0 %77
  %v79 = vrcp.pop 32.0
  %v80 = vmul.f32 32.0, %v79
  %v81 = vsub.f32 1.0, %v80
  %v82 = vmul.f32 %v79, %v81
  %v83 = vadd.f32 %v79, %v82
  %vm84 = vweird.f32 %v79
  %v85 = vsel %vm84, %v79, %v83
  %v86 = vmul.f32 %v75, %v85
  %v87 = vmul.f32 %v78, %v85
  %v88 = vsub.f32 %v68, %v86
  %v89 = vsub.f32 %v69, %v87
  %v90 = vmul.f32 %v88, %v88
  %v91 = vmul.f32 %v89, %v89
  %v92 = vsel %vm72, %v90, 0.0
  %93 = vadd.xlane.f32.xlu0 %v92
  %v94 = vpop.xlane.xlu0 %93
  %v95 = vsel %vm72, %v91, 0.0
  %96 = vadd.xlane.f32.xlu0 %v95
  %v97 = vpop.xlane.xlu0 %96
  %v98 = vmul.f32 %v94, %v85
  %v99 = vmul.f32 %v97, %v85
  %v100 = vadd.f32 %v98, 1e-05
  %v101 = vadd.f32 %v99, 1e-05
  %v102 = vrsqrt.pop %v100
  %v103 = vmul.f32 %v102, %v100
  %v104 = vmul.f32 %v103, %v102
  %v105 = vmul.f32 0.5, %v104
  %v106 = vsub.f32 1.5, %v105
  %v107 = vmul.f32 %v102, %v106
  %vm108 = vweird.f32 %v100
  %vm109 = vweird.f32 %v102
  %vm110 = vmor %vm108, %vm109
  %v111 = vsel %vm110, %v102, %v107
  %v112 = vrsqrt.pop %v101
  %v113 = vmul.f32 %v112, %v101
  %v114 = vmul.f32 %v113, %v112
  %v115 = vmul.f32 0.5, %v114
  %v116 = vsub.f32 1.5, %v115
  %v117 = vmul.f32 %v112, %v116
  %vm118 = vweird.f32 %v101
  %vm119 = vweird.f32 %v112
  %vm120 = vmor %vm118, %vm119
  %v121 = vsel %vm120, %v112, %v117
  %v122 = vmul.f32 %v88, %v111
  %v123 = vmul.f32 %v89, %v121
  %v125 = vperm.slane %v70, 0
  %v127 = vmul.f32 %v122, %v125
  %v128 = vmul.f32 %v123, %v125
  %v130 = vperm.slane %v71, 0
  %v132 = vadd.f32 %v127, %v130
  %v133 = vadd.f32 %v128, %v130
  %v134 = vld [vmem:[%s4] sm:$0xf]
  %v135 = vld [vmem:[%s4 + $0x4] sm:$0xf]
  %v136 = vld [vmem:[%s4 + $0x8] sm:$0xf]
  %v137 = vld [vmem:[%s4 + $0xc] sm:$0xf]
  %v138 = vpack.c.bf16 %v133, %v132
  %v139 = vld [vmem:[%s5] sm:$0x1]
  %v141 = vperm.slane %v139, 0
  %v147 = vunpack.c.l.b16 %v134
  %v148 = vunpack.c.l.b16 %v135
  %v149 = vunpack.c.l.b16 %v136
  %v150 = vunpack.c.l.b16 %v137
  %v151 = vpack.c.b16 %v148, %v147
  %v152 = vpack.c.b16 %v150, %v149
  %v156 = vsel %vm72, %v138, 0
  %158 = vmatpush.bf16.msra.mxu0 0
  %159 = vmatpush.bf16.msra.mxu0 0
  %160 = vmatpush.bf16.msra.mxu0 0
  %161 = vmatpush.bf16.msra.mxu0 0
  %162 = vmatpush.bf16.msra.mxu0 0
  %163 = vmatpush.bf16.msra.mxu0 0
  %164 = vmatpush.bf16.msra.mxu0 %v152
  %165 = vmatpush.bf16.msra.mxu0 %v151
  %166 = vmatmul.bf16.gmra.mxu0 %v156
  %v167 = vpop.f32.mrf.mxu0
  %v168 = vadd.f32 %v141, %v167
  %v169 = vpop.f32.mrf.mxu0
  %v170 = vadd.f32 %v141, %v169
  %171 = vdwg.mxu0
  %174 = vrot.lane.b32.xlu0 %v168, 120
  %v175 = vpop.permute.xlu0 %174
  %176 = vrot.lane.b32.xlu0 %v170, 120
  %v177 = vpop.permute.xlu0 %176
  %180 = vrot.lane.b32.xlu0 %v168, 112
  %v181 = vpop.permute.xlu0 %180
  %182 = vrot.lane.b32.xlu0 %v170, 112
  %v183 = vpop.permute.xlu0 %182
  %186 = vrot.lane.b32.xlu0 %v168, 104
  %v187 = vpop.permute.xlu0 %186
  %188 = vrot.lane.b32.xlu0 %v170, 104
  %v189 = vpop.permute.xlu0 %188
  %v192 = vrot.slane %v181, 4
  %vm193 = vcmask 1047556
  %v194 = vsel %vm193, %v192, %v168
  %v195 = vrot.slane %v168, 4
  %v196 = vsel %vm193, %v181, %v195
  %v198 = vunpack.c.l.s4 1983009808
  %v199 = vunpack.c.0.s8 %v198
  %v200 = vperm.slane %v194, %v199
  %v202 = vunpack.c.l.s4 1983009808
  %v203 = vunpack.c.0.s8 %v202
  %v204 = vperm.slane %v196, %v203
  %v205 = vrot.slane %v187, 4
  %v206 = vsel %vm193, %v205, %v175
  %v207 = vrot.slane %v175, 4
  %v208 = vsel %vm193, %v187, %v207
  %v210 = vunpack.c.l.s4 1983009808
  %v211 = vunpack.c.0.s8 %v210
  %v212 = vperm.slane %v206, %v211
  %v214 = vunpack.c.l.s4 1983009808
  %v215 = vunpack.c.0.s8 %v214
  %v216 = vperm.slane %v208, %v215
  %v217 = vrot.slane %v212, 4
  %v218 = vsel %vm193, %v217, %v200
  %v219 = vrot.slane %v200, 4
  %v220 = vsel %vm193, %v212, %v219
  %v222 = vunpack.c.l.s4 1934713408
  %v223 = vunpack.c.0.s8 %v222
  %v224 = vperm.slane %v218, %v223
  %v226 = vunpack.c.l.s4 1934713408
  %v227 = vunpack.c.0.s8 %v226
  %v228 = vperm.slane %v220, %v227
  %v229 = vrot.slane %v216, 4
  %v230 = vsel %vm193, %v229, %v204
  %v231 = vrot.slane %v204, 4
  %v232 = vsel %vm193, %v216, %v231
  %v234 = vunpack.c.l.s4 1934713408
  %v235 = vunpack.c.0.s8 %v234
  %v236 = vperm.slane %v230, %v235
  %v238 = vunpack.c.l.s4 1934713408
  %v239 = vunpack.c.0.s8 %v238
  %v240 = vperm.slane %v232, %v239
  %v241 = vrot.slane %v224, 4
  %v242 = vsel %vm193, 0.0, %v241
  %v243 = vrot.slane %v228, 4
  %v244 = vsel %vm193, 0.0, %v243
  %v245 = vrot.slane %v236, 4
  %v246 = vsel %vm193, 0.0, %v245
  %v247 = vrot.slane %v240, 4
  %v248 = vsel %vm193, 0.0, %v247
  %v249 = vrot.slane %v183, 4
  %v250 = vsel %vm193, %v249, %v170
  %v251 = vrot.slane %v170, 4
  %v252 = vsel %vm193, %v183, %v251
  %v254 = vunpack.c.l.s4 1983009808
  %v255 = vunpack.c.0.s8 %v254
  %v256 = vperm.slane %v250, %v255
  %v258 = vunpack.c.l.s4 1983009808
  %v259 = vunpack.c.0.s8 %v258
  %v260 = vperm.slane %v252, %v259
  %v261 = vrot.slane %v189, 4
  %v262 = vsel %vm193, %v261, %v177
  %v263 = vrot.slane %v177, 4
  %v264 = vsel %vm193, %v189, %v263
  %v266 = vunpack.c.l.s4 1983009808
  %v267 = vunpack.c.0.s8 %v266
  %v268 = vperm.slane %v262, %v267
  %v270 = vunpack.c.l.s4 1983009808
  %v271 = vunpack.c.0.s8 %v270
  %v272 = vperm.slane %v264, %v271
  %v273 = vrot.slane %v268, 4
  %v274 = vsel %vm193, %v273, %v256
  %v275 = vrot.slane %v256, 4
  %v276 = vsel %vm193, %v268, %v275
  %v278 = vunpack.c.l.s4 1934713408
  %v279 = vunpack.c.0.s8 %v278
  %v280 = vperm.slane %v274, %v279
  %v282 = vunpack.c.l.s4 1934713408
  %v283 = vunpack.c.0.s8 %v282
  %v284 = vperm.slane %v276, %v283
  %v285 = vrot.slane %v272, 4
  %v286 = vsel %vm193, %v285, %v260
  %v287 = vrot.slane %v260, 4
  %v288 = vsel %vm193, %v272, %v287
  %v290 = vunpack.c.l.s4 1934713408
  %v291 = vunpack.c.0.s8 %v290
  %v292 = vperm.slane %v286, %v291
  %v294 = vunpack.c.l.s4 1934713408
  %v295 = vunpack.c.0.s8 %v294
  %v296 = vperm.slane %v288, %v295
  %v297 = vrot.slane %v280, 4
  %v298 = vsel %vm193, 0.0, %v297
  %v299 = vrot.slane %v284, 4
  %v300 = vsel %vm193, 0.0, %v299
  %v301 = vrot.slane %v292, 4
  %v302 = vsel %vm193, 0.0, %v301
  %v303 = vrot.slane %v296, 4
  %v304 = vsel %vm193, 0.0, %v303
  %v305 = vsel %vm193, %v243, %v224
  %v307 = vunpack.c.l.s4 1983009808
  %v308 = vunpack.c.0.s8 %v307
  %v309 = vperm.slane %v305, %v308
  %v310 = vrot.slane %v244, 4
  %v311 = vsel %vm193, %v310, %v242
  %v313 = vunpack.c.l.s4 1983009808
  %v314 = vunpack.c.0.s8 %v313
  %v315 = vperm.slane %v311, %v314
  %v316 = vsel %vm193, %v247, %v236
  %v318 = vunpack.c.l.s4 1983009808
  %v319 = vunpack.c.0.s8 %v318
  %v320 = vperm.slane %v316, %v319
  %v321 = vrot.slane %v248, 4
  %v322 = vsel %vm193, %v321, %v246
  %v324 = vunpack.c.l.s4 1983009808
  %v325 = vunpack.c.0.s8 %v324
  %v326 = vperm.slane %v322, %v325
  %v327 = vrot.slane %v315, 4
  %v328 = vsel %vm193, %v327, %v309
  %v329 = vrot.slane %v309, 4
  %v330 = vsel %vm193, %v315, %v329
  %v332 = vunpack.c.l.s4 1934713408
  %v333 = vunpack.c.0.s8 %v332
  %v334 = vperm.slane %v328, %v333
  %v336 = vunpack.c.l.s4 1934713408
  %v337 = vunpack.c.0.s8 %v336
  %v338 = vperm.slane %v330, %v337
  %v339 = vrot.slane %v326, 4
  %v340 = vsel %vm193, %v339, %v320
  %v341 = vrot.slane %v320, 4
  %v342 = vsel %vm193, %v326, %v341
  %v344 = vunpack.c.l.s4 1934713408
  %v345 = vunpack.c.0.s8 %v344
  %v346 = vperm.slane %v340, %v345
  %v348 = vunpack.c.l.s4 1934713408
  %v349 = vunpack.c.0.s8 %v348
  %v350 = vperm.slane %v342, %v349
  %v351 = vrot.slane %v346, 4
  %v352 = vsel %vm193, %v351, %v334
  %v353 = vrot.slane %v334, 4
  %v354 = vsel %vm193, %v346, %v353
  %v355 = vrot.slane %v350, 4
  %v356 = vsel %vm193, %v355, %v338
  %v357 = vrot.slane %v338, 4
  %v358 = vsel %vm193, %v350, %v357
  %v359 = vsel %vm193, %v299, %v280
  %v361 = vunpack.c.l.s4 1983009808
  %v362 = vunpack.c.0.s8 %v361
  %v363 = vperm.slane %v359, %v362
  %v364 = vrot.slane %v300, 4
  %v365 = vsel %vm193, %v364, %v298
  %v367 = vunpack.c.l.s4 1983009808
  %v368 = vunpack.c.0.s8 %v367
  %v369 = vperm.slane %v365, %v368
  %v370 = vsel %vm193, %v303, %v292
  %v372 = vunpack.c.l.s4 1983009808
  %v373 = vunpack.c.0.s8 %v372
  %v374 = vperm.slane %v370, %v373
  %v375 = vrot.slane %v304, 4
  %v376 = vsel %vm193, %v375, %v302
  %v378 = vunpack.c.l.s4 1983009808
  %v379 = vunpack.c.0.s8 %v378
  %v380 = vperm.slane %v376, %v379
  %v381 = vrot.slane %v369, 4
  %v382 = vsel %vm193, %v381, %v363
  %v383 = vrot.slane %v363, 4
  %v384 = vsel %vm193, %v369, %v383
  %v386 = vunpack.c.l.s4 1934713408
  %v387 = vunpack.c.0.s8 %v386
  %v388 = vperm.slane %v382, %v387
  %v390 = vunpack.c.l.s4 1934713408
  %v391 = vunpack.c.0.s8 %v390
  %v392 = vperm.slane %v384, %v391
  %v393 = vrot.slane %v380, 4
  %v394 = vsel %vm193, %v393, %v374
  %v395 = vrot.slane %v374, 4
  %v396 = vsel %vm193, %v380, %v395
  %v398 = vunpack.c.l.s4 1934713408
  %v399 = vunpack.c.0.s8 %v398
  %v400 = vperm.slane %v394, %v399
  %v402 = vunpack.c.l.s4 1934713408
  %v403 = vunpack.c.0.s8 %v402
  %v404 = vperm.slane %v396, %v403
  %v405 = vrot.slane %v400, 4
  %v406 = vsel %vm193, %v405, %v388
  %v407 = vrot.slane %v388, 4
  %v408 = vsel %vm193, %v400, %v407
  %v409 = vrot.slane %v404, 4
  %v410 = vsel %vm193, %v409, %v392
  %v411 = vrot.slane %v392, 4
  %v412 = vsel %vm193, %v404, %v411
  %v413 = vpack.c.bf16 %v352, %v352
  %v414 = vpack.c.bf16 %v354, %v354
  %v415 = vpack.c.bf16 %v356, %v356
  %v416 = vpack.c.bf16 %v358, %v358
  %v417 = vpack.c.bf16 %v406, %v406
  %v418 = vpack.c.bf16 %v408, %v408
  %v419 = vpack.c.bf16 %v410, %v410
  %v420 = vpack.c.bf16 %v412, %v412
  %421 = vrot.lane.b32.xlu0 %v168, 96
  %v422 = vpop.permute.xlu0 %421
  %423 = vrot.lane.b32.xlu0 %v170, 96
  %v424 = vpop.permute.xlu0 %423
  %425 = vrot.lane.b32.xlu0 %v175, 96
  %v426 = vpop.permute.xlu0 %425
  %427 = vrot.lane.b32.xlu0 %v177, 96
  %v428 = vpop.permute.xlu0 %427
  %429 = vrot.lane.b32.xlu0 %v181, 96
  %v430 = vpop.permute.xlu0 %429
  %431 = vrot.lane.b32.xlu0 %v183, 96
  %v432 = vpop.permute.xlu0 %431
  %433 = vrot.lane.b32.xlu0 %v187, 96
  %v434 = vpop.permute.xlu0 %433
  %435 = vrot.lane.b32.xlu0 %v189, 96
  %v436 = vpop.permute.xlu0 %435
  %v445 = vrot.slane %v430, 4
  %v446 = vsel %vm193, %v445, %v422
  %v447 = vrot.slane %v422, 4
  %v448 = vsel %vm193, %v430, %v447
  %v450 = vunpack.c.l.s4 1983009808
  %v451 = vunpack.c.0.s8 %v450
  %v452 = vperm.slane %v446, %v451
  %v454 = vunpack.c.l.s4 1983009808
  %v455 = vunpack.c.0.s8 %v454
  %v456 = vperm.slane %v448, %v455
  %v457 = vrot.slane %v434, 4
  %v458 = vsel %vm193, %v457, %v426
  %v459 = vrot.slane %v426, 4
  %v460 = vsel %vm193, %v434, %v459
  %v462 = vunpack.c.l.s4 1983009808
  %v463 = vunpack.c.0.s8 %v462
  %v464 = vperm.slane %v458, %v463
  %v466 = vunpack.c.l.s4 1983009808
  %v467 = vunpack.c.0.s8 %v466
  %v468 = vperm.slane %v460, %v467
  %v469 = vrot.slane %v464, 4
  %v470 = vsel %vm193, %v469, %v452
  %v471 = vrot.slane %v452, 4
  %v472 = vsel %vm193, %v464, %v471
  %v474 = vunpack.c.l.s4 1934713408
  %v475 = vunpack.c.0.s8 %v474
  %v476 = vperm.slane %v470, %v475
  %v478 = vunpack.c.l.s4 1934713408
  %v479 = vunpack.c.0.s8 %v478
  %v480 = vperm.slane %v472, %v479
  %v481 = vrot.slane %v468, 4
  %v482 = vsel %vm193, %v481, %v456
  %v483 = vrot.slane %v456, 4
  %v484 = vsel %vm193, %v468, %v483
  %v486 = vunpack.c.l.s4 1934713408
  %v487 = vunpack.c.0.s8 %v486
  %v488 = vperm.slane %v482, %v487
  %v490 = vunpack.c.l.s4 1934713408
  %v491 = vunpack.c.0.s8 %v490
  %v492 = vperm.slane %v484, %v491
  %v493 = vrot.slane %v476, 4
  %v494 = vsel %vm193, 0.0, %v493
  %v495 = vrot.slane %v480, 4
  %v496 = vsel %vm193, 0.0, %v495
  %v497 = vrot.slane %v488, 4
  %v498 = vsel %vm193, 0.0, %v497
  %v499 = vrot.slane %v492, 4
  %v500 = vsel %vm193, 0.0, %v499
  %v501 = vrot.slane %v432, 4
  %v502 = vsel %vm193, %v501, %v424
  %v503 = vrot.slane %v424, 4
  %v504 = vsel %vm193, %v432, %v503
  %v506 = vunpack.c.l.s4 1983009808
  %v507 = vunpack.c.0.s8 %v506
  %v508 = vperm.slane %v502, %v507
  %v510 = vunpack.c.l.s4 1983009808
  %v511 = vunpack.c.0.s8 %v510
  %v512 = vperm.slane %v504, %v511
  %v513 = vrot.slane %v436, 4
  %v514 = vsel %vm193, %v513, %v428
  %v515 = vrot.slane %v428, 4
  %v516 = vsel %vm193, %v436, %v515
  %v518 = vunpack.c.l.s4 1983009808
  %v519 = vunpack.c.0.s8 %v518
  %v520 = vperm.slane %v514, %v519
  %v522 = vunpack.c.l.s4 1983009808
  %v523 = vunpack.c.0.s8 %v522
  %v524 = vperm.slane %v516, %v523
  %v525 = vrot.slane %v520, 4
  %v526 = vsel %vm193, %v525, %v508
  %v527 = vrot.slane %v508, 4
  %v528 = vsel %vm193, %v520, %v527
  %v530 = vunpack.c.l.s4 1934713408
  %v531 = vunpack.c.0.s8 %v530
  %v532 = vperm.slane %v526, %v531
  %v534 = vunpack.c.l.s4 1934713408
  %v535 = vunpack.c.0.s8 %v534
  %v536 = vperm.slane %v528, %v535
  %v537 = vrot.slane %v524, 4
  %v538 = vsel %vm193, %v537, %v512
  %v539 = vrot.slane %v512, 4
  %v540 = vsel %vm193, %v524, %v539
  %v542 = vunpack.c.l.s4 1934713408
  %v543 = vunpack.c.0.s8 %v542
  %v544 = vperm.slane %v538, %v543
  %v546 = vunpack.c.l.s4 1934713408
  %v547 = vunpack.c.0.s8 %v546
  %v548 = vperm.slane %v540, %v547
  %v549 = vrot.slane %v532, 4
  %v550 = vsel %vm193, 0.0, %v549
  %v551 = vrot.slane %v536, 4
  %v552 = vsel %vm193, 0.0, %v551
  %v553 = vrot.slane %v544, 4
  %v554 = vsel %vm193, 0.0, %v553
  %v555 = vrot.slane %v548, 4
  %v556 = vsel %vm193, 0.0, %v555
  %v557 = vsel %vm193, %v495, %v476
  %v559 = vunpack.c.l.s4 1983009808
  %v560 = vunpack.c.0.s8 %v559
  %v561 = vperm.slane %v557, %v560
  %v562 = vrot.slane %v496, 4
  %v563 = vsel %vm193, %v562, %v494
  %v565 = vunpack.c.l.s4 1983009808
  %v566 = vunpack.c.0.s8 %v565
  %v567 = vperm.slane %v563, %v566
  %v568 = vsel %vm193, %v499, %v488
  %v570 = vunpack.c.l.s4 1983009808
  %v571 = vunpack.c.0.s8 %v570
  %v572 = vperm.slane %v568, %v571
  %v573 = vrot.slane %v500, 4
  %v574 = vsel %vm193, %v573, %v498
  %v576 = vunpack.c.l.s4 1983009808
  %v577 = vunpack.c.0.s8 %v576
  %v578 = vperm.slane %v574, %v577
  %v579 = vrot.slane %v567, 4
  %v580 = vsel %vm193, %v579, %v561
  %v581 = vrot.slane %v561, 4
  %v582 = vsel %vm193, %v567, %v581
  %v584 = vunpack.c.l.s4 1934713408
  %v585 = vunpack.c.0.s8 %v584
  %v586 = vperm.slane %v580, %v585
  %v588 = vunpack.c.l.s4 1934713408
  %v589 = vunpack.c.0.s8 %v588
  %v590 = vperm.slane %v582, %v589
  %v591 = vrot.slane %v578, 4
  %v592 = vsel %vm193, %v591, %v572
  %v593 = vrot.slane %v572, 4
  %v594 = vsel %vm193, %v578, %v593
  %v596 = vunpack.c.l.s4 1934713408
  %v597 = vunpack.c.0.s8 %v596
  %v598 = vperm.slane %v592, %v597
  %v600 = vunpack.c.l.s4 1934713408
  %v601 = vunpack.c.0.s8 %v600
  %v602 = vperm.slane %v594, %v601
  %v603 = vrot.slane %v598, 4
  %v604 = vsel %vm193, %v603, %v586
  %v605 = vrot.slane %v586, 4
  %v606 = vsel %vm193, %v598, %v605
  %v607 = vrot.slane %v602, 4
  %v608 = vsel %vm193, %v607, %v590
  %v609 = vrot.slane %v590, 4
  %v610 = vsel %vm193, %v602, %v609
  %v611 = vsel %vm193, %v551, %v532
  %v613 = vunpack.c.l.s4 1983009808
  %v614 = vunpack.c.0.s8 %v613
  %v615 = vperm.slane %v611, %v614
  %v616 = vrot.slane %v552, 4
  %v617 = vsel %vm193, %v616, %v550
  %v619 = vunpack.c.l.s4 1983009808
  %v620 = vunpack.c.0.s8 %v619
  %v621 = vperm.slane %v617, %v620
  %v622 = vsel %vm193, %v555, %v544
  %v624 = vunpack.c.l.s4 1983009808
  %v625 = vunpack.c.0.s8 %v624
  %v626 = vperm.slane %v622, %v625
  %v627 = vrot.slane %v556, 4
  %v628 = vsel %vm193, %v627, %v554
  %v630 = vunpack.c.l.s4 1983009808
  %v631 = vunpack.c.0.s8 %v630
  %v632 = vperm.slane %v628, %v631
  %v633 = vrot.slane %v621, 4
  %v634 = vsel %vm193, %v633, %v615
  %v635 = vrot.slane %v615, 4
  %v636 = vsel %vm193, %v621, %v635
  %v638 = vunpack.c.l.s4 1934713408
  %v639 = vunpack.c.0.s8 %v638
  %v640 = vperm.slane %v634, %v639
  %v642 = vunpack.c.l.s4 1934713408
  %v643 = vunpack.c.0.s8 %v642
  %v644 = vperm.slane %v636, %v643
  %v645 = vrot.slane %v632, 4
  %v646 = vsel %vm193, %v645, %v626
  %v647 = vrot.slane %v626, 4
  %v648 = vsel %vm193, %v632, %v647
  %v650 = vunpack.c.l.s4 1934713408
  %v651 = vunpack.c.0.s8 %v650
  %v652 = vperm.slane %v646, %v651
  %v654 = vunpack.c.l.s4 1934713408
  %v655 = vunpack.c.0.s8 %v654
  %v656 = vperm.slane %v648, %v655
  %v657 = vrot.slane %v652, 4
  %v658 = vsel %vm193, %v657, %v640
  %v659 = vrot.slane %v640, 4
  %v660 = vsel %vm193, %v652, %v659
  %v661 = vrot.slane %v656, 4
  %v662 = vsel %vm193, %v661, %v644
  %v663 = vrot.slane %v644, 4
  %v664 = vsel %vm193, %v656, %v663
  %v665 = vpack.c.bf16 %v604, %v604
  %v666 = vpack.c.bf16 %v606, %v606
  %v667 = vpack.c.bf16 %v608, %v608
  %v668 = vpack.c.bf16 %v610, %v610
  %v669 = vpack.c.bf16 %v658, %v658
  %v670 = vpack.c.bf16 %v660, %v660
  %v671 = vpack.c.bf16 %v662, %v662
  %v672 = vpack.c.bf16 %v664, %v664
  %673 = vrot.lane.b32.xlu0 %v168, 64
  %v674 = vpop.permute.xlu0 %673
  %675 = vrot.lane.b32.xlu0 %v170, 64
  %v676 = vpop.permute.xlu0 %675
  %677 = vrot.lane.b32.xlu0 %v175, 64
  %v678 = vpop.permute.xlu0 %677
  %679 = vrot.lane.b32.xlu0 %v177, 64
  %v680 = vpop.permute.xlu0 %679
  %681 = vrot.lane.b32.xlu0 %v181, 64
  %v682 = vpop.permute.xlu0 %681
  %683 = vrot.lane.b32.xlu0 %v183, 64
  %v684 = vpop.permute.xlu0 %683
  %685 = vrot.lane.b32.xlu0 %v187, 64
  %v686 = vpop.permute.xlu0 %685
  %687 = vrot.lane.b32.xlu0 %v189, 64
  %v688 = vpop.permute.xlu0 %687
  %v697 = vrot.slane %v682, 4
  %v698 = vsel %vm193, %v697, %v674
  %v699 = vrot.slane %v674, 4
  %v700 = vsel %vm193, %v682, %v699
  %v702 = vunpack.c.l.s4 1983009808
  %v703 = vunpack.c.0.s8 %v702
  %v704 = vperm.slane %v698, %v703
  %v706 = vunpack.c.l.s4 1983009808
  %v707 = vunpack.c.0.s8 %v706
  %v708 = vperm.slane %v700, %v707
  %v709 = vrot.slane %v686, 4
  %v710 = vsel %vm193, %v709, %v678
  %v711 = vrot.slane %v678, 4
  %v712 = vsel %vm193, %v686, %v711
  %v714 = vunpack.c.l.s4 1983009808
  %v715 = vunpack.c.0.s8 %v714
  %v716 = vperm.slane %v710, %v715
  %v718 = vunpack.c.l.s4 1983009808
  %v719 = vunpack.c.0.s8 %v718
  %v720 = vperm.slane %v712, %v719
  %v721 = vrot.slane %v716, 4
  %v722 = vsel %vm193, %v721, %v704
  %v723 = vrot.slane %v704, 4
  %v724 = vsel %vm193, %v716, %v723
  %v726 = vunpack.c.l.s4 1934713408
  %v727 = vunpack.c.0.s8 %v726
  %v728 = vperm.slane %v722, %v727
  %v730 = vunpack.c.l.s4 1934713408
  %v731 = vunpack.c.0.s8 %v730
  %v732 = vperm.slane %v724, %v731
  %v733 = vrot.slane %v720, 4
  %v734 = vsel %vm193, %v733, %v708
  %v735 = vrot.slane %v708, 4
  %v736 = vsel %vm193, %v720, %v735
  %v738 = vunpack.c.l.s4 1934713408
  %v739 = vunpack.c.0.s8 %v738
  %v740 = vperm.slane %v734, %v739
  %v742 = vunpack.c.l.s4 1934713408
  %v743 = vunpack.c.0.s8 %v742
  %v744 = vperm.slane %v736, %v743
  %v745 = vrot.slane %v728, 4
  %v746 = vsel %vm193, 0.0, %v745
  %v747 = vrot.slane %v732, 4
  %v748 = vsel %vm193, 0.0, %v747
  %v749 = vrot.slane %v740, 4
  %v750 = vsel %vm193, 0.0, %v749
  %v751 = vrot.slane %v744, 4
  %v752 = vsel %vm193, 0.0, %v751
  %v753 = vrot.slane %v684, 4
  %v754 = vsel %vm193, %v753, %v676
  %v755 = vrot.slane %v676, 4
  %v756 = vsel %vm193, %v684, %v755
  %v758 = vunpack.c.l.s4 1983009808
  %v759 = vunpack.c.0.s8 %v758
  %v760 = vperm.slane %v754, %v759
  %v762 = vunpack.c.l.s4 1983009808
  %v763 = vunpack.c.0.s8 %v762
  %v764 = vperm.slane %v756, %v763
  %v765 = vrot.slane %v688, 4
  %v766 = vsel %vm193, %v765, %v680
  %v767 = vrot.slane %v680, 4
  %v768 = vsel %vm193, %v688, %v767
  %v770 = vunpack.c.l.s4 1983009808
  %v771 = vunpack.c.0.s8 %v770
  %v772 = vperm.slane %v766, %v771
  %v774 = vunpack.c.l.s4 1983009808
  %v775 = vunpack.c.0.s8 %v774
  %v776 = vperm.slane %v768, %v775
  %v777 = vrot.slane %v772, 4
  %v778 = vsel %vm193, %v777, %v760
  %v779 = vrot.slane %v760, 4
  %v780 = vsel %vm193, %v772, %v779
  %v782 = vunpack.c.l.s4 1934713408
  %v783 = vunpack.c.0.s8 %v782
  %v784 = vperm.slane %v778, %v783
  %v786 = vunpack.c.l.s4 1934713408
  %v787 = vunpack.c.0.s8 %v786
  %v788 = vperm.slane %v780, %v787
  %v789 = vrot.slane %v776, 4
  %v790 = vsel %vm193, %v789, %v764
  %v791 = vrot.slane %v764, 4
  %v792 = vsel %vm193, %v776, %v791
  %v794 = vunpack.c.l.s4 1934713408
  %v795 = vunpack.c.0.s8 %v794
  %v796 = vperm.slane %v790, %v795
  %v798 = vunpack.c.l.s4 1934713408
  %v799 = vunpack.c.0.s8 %v798
  %v800 = vperm.slane %v792, %v799
  %v801 = vrot.slane %v784, 4
  %v802 = vsel %vm193, 0.0, %v801
  %v803 = vrot.slane %v788, 4
  %v804 = vsel %vm193, 0.0, %v803
  %v805 = vrot.slane %v796, 4
  %v806 = vsel %vm193, 0.0, %v805
  %v807 = vrot.slane %v800, 4
  %v808 = vsel %vm193, 0.0, %v807
  %v809 = vsel %vm193, %v747, %v728
  %v811 = vunpack.c.l.s4 1983009808
  %v812 = vunpack.c.0.s8 %v811
  %v813 = vperm.slane %v809, %v812
  %v814 = vrot.slane %v748, 4
  %v815 = vsel %vm193, %v814, %v746
  %v817 = vunpack.c.l.s4 1983009808
  %v818 = vunpack.c.0.s8 %v817
  %v819 = vperm.slane %v815, %v818
  %v820 = vsel %vm193, %v751, %v740
  %v822 = vunpack.c.l.s4 1983009808
  %v823 = vunpack.c.0.s8 %v822
  %v824 = vperm.slane %v820, %v823
  %v825 = vrot.slane %v752, 4
  %v826 = vsel %vm193, %v825, %v750
  %v828 = vunpack.c.l.s4 1983009808
  %v829 = vunpack.c.0.s8 %v828
  %v830 = vperm.slane %v826, %v829
  %v831 = vrot.slane %v819, 4
  %v832 = vsel %vm193, %v831, %v813
  %v833 = vrot.slane %v813, 4
  %v834 = vsel %vm193, %v819, %v833
  %v836 = vunpack.c.l.s4 1934713408
  %v837 = vunpack.c.0.s8 %v836
  %v838 = vperm.slane %v832, %v837
  %v840 = vunpack.c.l.s4 1934713408
  %v841 = vunpack.c.0.s8 %v840
  %v842 = vperm.slane %v834, %v841
  %v843 = vrot.slane %v830, 4
  %v844 = vsel %vm193, %v843, %v824
  %v845 = vrot.slane %v824, 4
  %v846 = vsel %vm193, %v830, %v845
  %v848 = vunpack.c.l.s4 1934713408
  %v849 = vunpack.c.0.s8 %v848
  %v850 = vperm.slane %v844, %v849
  %v852 = vunpack.c.l.s4 1934713408
  %v853 = vunpack.c.0.s8 %v852
  %v854 = vperm.slane %v846, %v853
  %v855 = vrot.slane %v850, 4
  %v856 = vsel %vm193, %v855, %v838
  %v857 = vrot.slane %v838, 4
  %v858 = vsel %vm193, %v850, %v857
  %v859 = vrot.slane %v854, 4
  %v860 = vsel %vm193, %v859, %v842
  %v861 = vrot.slane %v842, 4
  %v862 = vsel %vm193, %v854, %v861
  %v863 = vsel %vm193, %v803, %v784
  %v865 = vunpack.c.l.s4 1983009808
  %v866 = vunpack.c.0.s8 %v865
  %v867 = vperm.slane %v863, %v866
  %v868 = vrot.slane %v804, 4
  %v869 = vsel %vm193, %v868, %v802
  %v871 = vunpack.c.l.s4 1983009808
  %v872 = vunpack.c.0.s8 %v871
  %v873 = vperm.slane %v869, %v872
  %v874 = vsel %vm193, %v807, %v796
  %v876 = vunpack.c.l.s4 1983009808
  %v877 = vunpack.c.0.s8 %v876
  %v878 = vperm.slane %v874, %v877
  %v879 = vrot.slane %v808, 4
  %v880 = vsel %vm193, %v879, %v806
  %v882 = vunpack.c.l.s4 1983009808
  %v883 = vunpack.c.0.s8 %v882
  %v884 = vperm.slane %v880, %v883
  %v885 = vrot.slane %v873, 4
  %v886 = vsel %vm193, %v885, %v867
  %v887 = vrot.slane %v867, 4
  %v888 = vsel %vm193, %v873, %v887
  %v890 = vunpack.c.l.s4 1934713408
  %v891 = vunpack.c.0.s8 %v890
  %v892 = vperm.slane %v886, %v891
  %v894 = vunpack.c.l.s4 1934713408
  %v895 = vunpack.c.0.s8 %v894
  %v896 = vperm.slane %v888, %v895
  %v897 = vrot.slane %v884, 4
  %v898 = vsel %vm193, %v897, %v878
  %v899 = vrot.slane %v878, 4
  %v900 = vsel %vm193, %v884, %v899
  %v902 = vunpack.c.l.s4 1934713408
  %v903 = vunpack.c.0.s8 %v902
  %v904 = vperm.slane %v898, %v903
  %v906 = vunpack.c.l.s4 1934713408
  %v907 = vunpack.c.0.s8 %v906
  %v908 = vperm.slane %v900, %v907
  %v909 = vrot.slane %v904, 4
  %v910 = vsel %vm193, %v909, %v892
  %v911 = vrot.slane %v892, 4
  %v912 = vsel %vm193, %v904, %v911
  %v913 = vrot.slane %v908, 4
  %v914 = vsel %vm193, %v913, %v896
  %v915 = vrot.slane %v896, 4
  %v916 = vsel %vm193, %v908, %v915
  %v917 = vpack.c.bf16 %v856, %v856
  %v918 = vpack.c.bf16 %v858, %v858
  %v919 = vpack.c.bf16 %v860, %v860
  %v920 = vpack.c.bf16 %v862, %v862
  %v921 = vpack.c.bf16 %v910, %v910
  %v922 = vpack.c.bf16 %v912, %v912
  %v923 = vpack.c.bf16 %v914, %v914
  %v924 = vpack.c.bf16 %v916, %v916
  %vm925 = vcmask 64512
  %v927 = vsel %vm925, %v413, 0
  %v930 = vsel %vm925, %v665, 0
  %932 = vmatpush.bf16.xpose.msra.mxu0 0
  %933 = vmatpush.bf16.xpose.msra.mxu0 0
  %934 = vmatpush.bf16.xpose.msra.mxu0 0
  %935 = vmatpush.bf16.xpose.msra.mxu0 0
  %936 = vmatpush.bf16.xpose.msra.mxu0 0
  %937 = vmatpush.bf16.xpose.msra.mxu0 0
  %938 = vmatpush.bf16.xpose.msra.mxu0 0
  %939 = vmatpush.bf16.xpose.msra.mxu0 %v930
  %940 = vmatmul.bf16.gmra.mxu0 %v927
  %v941 = vpop.f32.mrf.mxu0
  %v942 = vadd.f32 %v64, %v941
  %v943 = vpop.f32.mrf.mxu0
  %944 = vdwg.mxu0
  %v946 = vsel %vm925, %v414, 0
  %v949 = vsel %vm925, %v666, 0
  %951 = vmatpush.bf16.xpose.msra.mxu0 0
  %952 = vmatpush.bf16.xpose.msra.mxu0 0
  %953 = vmatpush.bf16.xpose.msra.mxu0 0
  %954 = vmatpush.bf16.xpose.msra.mxu0 0
  %955 = vmatpush.bf16.xpose.msra.mxu0 0
  %956 = vmatpush.bf16.xpose.msra.mxu0 0
  %957 = vmatpush.bf16.xpose.msra.mxu0 0
  %958 = vmatpush.bf16.xpose.msra.mxu0 %v949
  %959 = vmatmul.bf16.gmra.mxu0 %v946
  %v960 = vpop.f32.mrf.mxu0
  %v961 = vadd.f32 %v64, %v960
  %v962 = vpop.f32.mrf.mxu0
  %963 = vdwg.mxu0
  %v965 = vsel %vm925, %v415, 0
  %v968 = vsel %vm925, %v667, 0
  %970 = vmatpush.bf16.xpose.msra.mxu0 0
  %971 = vmatpush.bf16.xpose.msra.mxu0 0
  %972 = vmatpush.bf16.xpose.msra.mxu0 0
  %973 = vmatpush.bf16.xpose.msra.mxu0 0
  %974 = vmatpush.bf16.xpose.msra.mxu0 0
  %975 = vmatpush.bf16.xpose.msra.mxu0 0
  %976 = vmatpush.bf16.xpose.msra.mxu0 0
  %977 = vmatpush.bf16.xpose.msra.mxu0 %v968
  %978 = vmatmul.bf16.gmra.mxu0 %v965
  %v979 = vpop.f32.mrf.mxu0
  %v980 = vadd.f32 %v64, %v979
  %v981 = vpop.f32.mrf.mxu0
  %982 = vdwg.mxu0
  %v984 = vsel %vm925, %v416, 0
  %v987 = vsel %vm925, %v668, 0
  %989 = vmatpush.bf16.xpose.msra.mxu0 0
  %990 = vmatpush.bf16.xpose.msra.mxu0 0
  %991 = vmatpush.bf16.xpose.msra.mxu0 0
  %992 = vmatpush.bf16.xpose.msra.mxu0 0
  %993 = vmatpush.bf16.xpose.msra.mxu0 0
  %994 = vmatpush.bf16.xpose.msra.mxu0 0
  %995 = vmatpush.bf16.xpose.msra.mxu0 0
  %996 = vmatpush.bf16.xpose.msra.mxu0 %v987
  %997 = vmatmul.bf16.gmra.mxu0 %v984
  %v998 = vpop.f32.mrf.mxu0
  %v999 = vadd.f32 %v64, %v998
  %v1000 = vpop.f32.mrf.mxu0
  %1001 = vdwg.mxu0
  %v1003 = vsel %vm925, %v417, 0
  %v1006 = vsel %vm925, %v669, 0
  %1008 = vmatpush.bf16.xpose.msra.mxu0 0
  %1009 = vmatpush.bf16.xpose.msra.mxu0 0
  %1010 = vmatpush.bf16.xpose.msra.mxu0 0
  %1011 = vmatpush.bf16.xpose.msra.mxu0 0
  %1012 = vmatpush.bf16.xpose.msra.mxu0 0
  %1013 = vmatpush.bf16.xpose.msra.mxu0 0
  %1014 = vmatpush.bf16.xpose.msra.mxu0 0
  %1015 = vmatpush.bf16.xpose.msra.mxu0 %v1006
  %1016 = vmatmul.bf16.gmra.mxu0 %v1003
  %v1017 = vpop.f32.mrf.mxu0
  %v1018 = vadd.f32 %v65, %v1017
  %v1019 = vpop.f32.mrf.mxu0
  %1020 = vdwg.mxu0
  %v1022 = vsel %vm925, %v418, 0
  %v1025 = vsel %vm925, %v670, 0
  %1027 = vmatpush.bf16.xpose.msra.mxu0 0
  %1028 = vmatpush.bf16.xpose.msra.mxu0 0
  %1029 = vmatpush.bf16.xpose.msra.mxu0 0
  %1030 = vmatpush.bf16.xpose.msra.mxu0 0
  %1031 = vmatpush.bf16.xpose.msra.mxu0 0
  %1032 = vmatpush.bf16.xpose.msra.mxu0 0
  %1033 = vmatpush.bf16.xpose.msra.mxu0 0
  %1034 = vmatpush.bf16.xpose.msra.mxu0 %v1025
  %1035 = vmatmul.bf16.gmra.mxu0 %v1022
  %v1036 = vpop.f32.mrf.mxu0
  %v1037 = vadd.f32 %v65, %v1036
  %v1038 = vpop.f32.mrf.mxu0
  %1039 = vdwg.mxu0
  %v1041 = vsel %vm925, %v419, 0
  %v1044 = vsel %vm925, %v671, 0
  %1046 = vmatpush.bf16.xpose.msra.mxu0 0
  %1047 = vmatpush.bf16.xpose.msra.mxu0 0
  %1048 = vmatpush.bf16.xpose.msra.mxu0 0
  %1049 = vmatpush.bf16.xpose.msra.mxu0 0
  %1050 = vmatpush.bf16.xpose.msra.mxu0 0
  %1051 = vmatpush.bf16.xpose.msra.mxu0 0
  %1052 = vmatpush.bf16.xpose.msra.mxu0 0
  %1053 = vmatpush.bf16.xpose.msra.mxu0 %v1044
  %1054 = vmatmul.bf16.gmra.mxu0 %v1041
  %v1055 = vpop.f32.mrf.mxu0
  %v1056 = vadd.f32 %v65, %v1055
  %v1057 = vpop.f32.mrf.mxu0
  %1058 = vdwg.mxu0
  %v1060 = vsel %vm925, %v420, 0
  %v1063 = vsel %vm925, %v672, 0
  %1065 = vmatpush.bf16.xpose.msra.mxu0 0
  %1066 = vmatpush.bf16.xpose.msra.mxu0 0
  %1067 = vmatpush.bf16.xpose.msra.mxu0 0
  %1068 = vmatpush.bf16.xpose.msra.mxu0 0
  %1069 = vmatpush.bf16.xpose.msra.mxu0 0
  %1070 = vmatpush.bf16.xpose.msra.mxu0 0
  %1071 = vmatpush.bf16.xpose.msra.mxu0 0
  %1072 = vmatpush.bf16.xpose.msra.mxu0 %v1063
  %1073 = vmatmul.bf16.gmra.mxu0 %v1060
  %v1074 = vpop.f32.mrf.mxu0
  %v1075 = vadd.f32 %v65, %v1074
  %v1076 = vpop.f32.mrf.mxu0
  %1077 = vdwg.mxu0
  %v1078 = vsel %vm925, %v942, -inf
  %1079 = vmax.xlane.f32.xlu0 %v1078
  %v1080 = vpop.xlane.xlu0 %1079
  %v1081 = vsel %vm925, %v961, -inf
  %1082 = vmax.xlane.f32.xlu0 %v1081
  %v1083 = vpop.xlane.xlu0 %1082
  %v1084 = vsel %vm925, %v980, -inf
  %1085 = vmax.xlane.f32.xlu0 %v1084
  %v1086 = vpop.xlane.xlu0 %1085
  %v1087 = vsel %vm925, %v999, -inf
  %1088 = vmax.xlane.f32.xlu0 %v1087
  %v1089 = vpop.xlane.xlu0 %1088
  %v1090 = vsel %vm925, %v1018, -inf
  %1091 = vmax.xlane.f32.xlu0 %v1090
  %v1092 = vpop.xlane.xlu0 %1091
  %v1093 = vsel %vm925, %v1037, -inf
  %1094 = vmax.xlane.f32.xlu0 %v1093
  %v1095 = vpop.xlane.xlu0 %1094
  %v1096 = vsel %vm925, %v1056, -inf
  %1097 = vmax.xlane.f32.xlu0 %v1096
  %v1098 = vpop.xlane.xlu0 %1097
  %v1099 = vsel %vm925, %v1075, -inf
  %1100 = vmax.xlane.f32.xlu0 %v1099
  %v1101 = vpop.xlane.xlu0 %1100
  %v1102 = vsub.f32 %v942, %v1080
  %v1103 = vsub.f32 %v961, %v1083
  %v1104 = vsub.f32 %v980, %v1086
  %v1105 = vsub.f32 %v999, %v1089
  %v1106 = vsub.f32 %v1018, %v1092
  %v1107 = vsub.f32 %v1037, %v1095
  %v1108 = vsub.f32 %v1056, %v1098
  %v1109 = vsub.f32 %v1075, %v1101
  %v1110 = vmul.f32 %v1102, 1.442695
  %v1111 = vpow.pop %v1110
  %v1112 = vmul.f32 %v1103, 1.442695
  %v1113 = vpow.pop %v1112
  %v1114 = vmul.f32 %v1104, 1.442695
  %v1115 = vpow.pop %v1114
  %v1116 = vmul.f32 %v1105, 1.442695
  %v1117 = vpow.pop %v1116
  %v1118 = vmul.f32 %v1106, 1.442695
  %v1119 = vpow.pop %v1118
  %v1120 = vmul.f32 %v1107, 1.442695
  %v1121 = vpow.pop %v1120
  %v1122 = vmul.f32 %v1108, 1.442695
  %v1123 = vpow.pop %v1122
  %v1124 = vmul.f32 %v1109, 1.442695
  %v1125 = vpow.pop %v1124
  %v1126 = vsel %vm925, %v1111, 0.0
  %1127 = vadd.xlane.f32.xlu0 %v1126
  %v1128 = vpop.xlane.xlu0 %1127
  %v1129 = vsel %vm925, %v1113, 0.0
  %1130 = vadd.xlane.f32.xlu0 %v1129
  %v1131 = vpop.xlane.xlu0 %1130
  %v1132 = vsel %vm925, %v1115, 0.0
  %1133 = vadd.xlane.f32.xlu0 %v1132
  %v1134 = vpop.xlane.xlu0 %1133
  %v1135 = vsel %vm925, %v1117, 0.0
  %1136 = vadd.xlane.f32.xlu0 %v1135
  %v1137 = vpop.xlane.xlu0 %1136
  %v1138 = vsel %vm925, %v1119, 0.0
  %1139 = vadd.xlane.f32.xlu0 %v1138
  %v1140 = vpop.xlane.xlu0 %1139
  %v1141 = vsel %vm925, %v1121, 0.0
  %1142 = vadd.xlane.f32.xlu0 %v1141
  %v1143 = vpop.xlane.xlu0 %1142
  %v1144 = vsel %vm925, %v1123, 0.0
  %1145 = vadd.xlane.f32.xlu0 %v1144
  %v1146 = vpop.xlane.xlu0 %1145
  %v1147 = vsel %vm925, %v1125, 0.0
  %1148 = vadd.xlane.f32.xlu0 %v1147
  %v1149 = vpop.xlane.xlu0 %1148
  %v1150 = vrcp.pop %v1128
  %v1151 = vrcp.pop %v1131
  %v1152 = vrcp.pop %v1134
  %v1153 = vrcp.pop %v1137
  %v1154 = vrcp.pop %v1140
  %v1155 = vrcp.pop %v1143
  %v1156 = vrcp.pop %v1146
  %v1157 = vrcp.pop %v1149
  %v1158 = vmul.f32 %v1111, %v1150
  %v1159 = vmul.f32 %v1113, %v1151
  %v1160 = vmul.f32 %v1115, %v1152
  %v1161 = vmul.f32 %v1117, %v1153
  %v1162 = vmul.f32 %v1119, %v1154
  %v1163 = vmul.f32 %v1121, %v1155
  %v1164 = vmul.f32 %v1123, %v1156
  %v1165 = vmul.f32 %v1125, %v1157
  %v1166 = vpack.c.bf16 %v1158, %v1158
  %v1167 = vpack.c.bf16 %v1159, %v1159
  %v1168 = vpack.c.bf16 %v1160, %v1160
  %v1169 = vpack.c.bf16 %v1161, %v1161
  %v1170 = vpack.c.bf16 %v1162, %v1162
  %v1171 = vpack.c.bf16 %v1163, %v1163
  %v1172 = vpack.c.bf16 %v1164, %v1164
  %v1173 = vpack.c.bf16 %v1165, %v1165
  %v1175 = vsel %vm925, %v1166, 0
  %vm1177 = vcmask 1043456
  %v1179 = vsel %vm1177, %v917, 0
  %1181 = vmatpush.bf16.msra.mxu0 0
  %1182 = vmatpush.bf16.msra.mxu0 0
  %1183 = vmatpush.bf16.msra.mxu0 0
  %1184 = vmatpush.bf16.msra.mxu0 0
  %1185 = vmatpush.bf16.msra.mxu0 0
  %1186 = vmatpush.bf16.msra.mxu0 0
  %1187 = vmatpush.bf16.msra.mxu0 0
  %1188 = vmatpush.bf16.msra.mxu0 %v1179
  %1189 = vmatmul.bf16.gmra.mxu0 %v1175
  %v1190 = vpop.f32.mrf.mxu0
  %v1191 = vadd.f32 0.0, %v1190
  %v1192 = vpop.f32.mrf.mxu0
  %1193 = vdwg.mxu0
  %v1195 = vsel %vm925, %v1167, 0
  %v1198 = vsel %vm1177, %v918, 0
  %1200 = vmatpush.bf16.msra.mxu0 0
  %1201 = vmatpush.bf16.msra.mxu0 0
  %1202 = vmatpush.bf16.msra.mxu0 0
  %1203 = vmatpush.bf16.msra.mxu0 0
  %1204 = vmatpush.bf16.msra.mxu0 0
  %1205 = vmatpush.bf16.msra.mxu0 0
  %1206 = vmatpush.bf16.msra.mxu0 0
  %1207 = vmatpush.bf16.msra.mxu0 %v1198
  %1208 = vmatmul.bf16.gmra.mxu0 %v1195
  %v1209 = vpop.f32.mrf.mxu0
  %v1210 = vadd.f32 0.0, %v1209
  %v1211 = vpop.f32.mrf.mxu0
  %1212 = vdwg.mxu0
  %v1214 = vsel %vm925, %v1168, 0
  %v1217 = vsel %vm1177, %v919, 0
  %1219 = vmatpush.bf16.msra.mxu0 0
  %1220 = vmatpush.bf16.msra.mxu0 0
  %1221 = vmatpush.bf16.msra.mxu0 0
  %1222 = vmatpush.bf16.msra.mxu0 0
  %1223 = vmatpush.bf16.msra.mxu0 0
  %1224 = vmatpush.bf16.msra.mxu0 0
  %1225 = vmatpush.bf16.msra.mxu0 0
  %1226 = vmatpush.bf16.msra.mxu0 %v1217
  %1227 = vmatmul.bf16.gmra.mxu0 %v1214
  %v1228 = vpop.f32.mrf.mxu0
  %v1229 = vadd.f32 0.0, %v1228
  %v1230 = vpop.f32.mrf.mxu0
  %1231 = vdwg.mxu0
  %v1233 = vsel %vm925, %v1169, 0
  %v1236 = vsel %vm1177, %v920, 0
  %1238 = vmatpush.bf16.msra.mxu0 0
  %1239 = vmatpush.bf16.msra.mxu0 0
  %1240 = vmatpush.bf16.msra.mxu0 0
  %1241 = vmatpush.bf16.msra.mxu0 0
  %1242 = vmatpush.bf16.msra.mxu0 0
  %1243 = vmatpush.bf16.msra.mxu0 0
  %1244 = vmatpush.bf16.msra.mxu0 0
  %1245 = vmatpush.bf16.msra.mxu0 %v1236
  %1246 = vmatmul.bf16.gmra.mxu0 %v1233
  %v1247 = vpop.f32.mrf.mxu0
  %v1248 = vadd.f32 0.0, %v1247
  %v1249 = vpop.f32.mrf.mxu0
  %1250 = vdwg.mxu0
  %v1252 = vsel %vm925, %v1170, 0
  %v1255 = vsel %vm1177, %v921, 0
  %1257 = vmatpush.bf16.msra.mxu0 0
  %1258 = vmatpush.bf16.msra.mxu0 0
  %1259 = vmatpush.bf16.msra.mxu0 0
  %1260 = vmatpush.bf16.msra.mxu0 0
  %1261 = vmatpush.bf16.msra.mxu0 0
  %1262 = vmatpush.bf16.msra.mxu0 0
  %1263 = vmatpush.bf16.msra.mxu0 0
  %1264 = vmatpush.bf16.msra.mxu0 %v1255
  %1265 = vmatmul.bf16.gmra.mxu0 %v1252
  %v1266 = vpop.f32.mrf.mxu0
  %v1267 = vadd.f32 0.0, %v1266
  %v1268 = vpop.f32.mrf.mxu0
  %1269 = vdwg.mxu0
  %v1271 = vsel %vm925, %v1171, 0
  %v1274 = vsel %vm1177, %v922, 0
  %1276 = vmatpush.bf16.msra.mxu0 0
  %1277 = vmatpush.bf16.msra.mxu0 0
  %1278 = vmatpush.bf16.msra.mxu0 0
  %1279 = vmatpush.bf16.msra.mxu0 0
  %1280 = vmatpush.bf16.msra.mxu0 0
  %1281 = vmatpush.bf16.msra.mxu0 0
  %1282 = vmatpush.bf16.msra.mxu0 0
  %1283 = vmatpush.bf16.msra.mxu0 %v1274
  %1284 = vmatmul.bf16.gmra.mxu0 %v1271
  %v1285 = vpop.f32.mrf.mxu0
  %v1286 = vadd.f32 0.0, %v1285
  %v1287 = vpop.f32.mrf.mxu0
  %1288 = vdwg.mxu0
  %v1290 = vsel %vm925, %v1172, 0
  %v1293 = vsel %vm1177, %v923, 0
  %1295 = vmatpush.bf16.msra.mxu0 0
  %1296 = vmatpush.bf16.msra.mxu0 0
  %1297 = vmatpush.bf16.msra.mxu0 0
  %1298 = vmatpush.bf16.msra.mxu0 0
  %1299 = vmatpush.bf16.msra.mxu0 0
  %1300 = vmatpush.bf16.msra.mxu0 0
  %1301 = vmatpush.bf16.msra.mxu0 0
  %1302 = vmatpush.bf16.msra.mxu0 %v1293
  %1303 = vmatmul.bf16.gmra.mxu0 %v1290
  %v1304 = vpop.f32.mrf.mxu0
  %v1305 = vadd.f32 0.0, %v1304
  %v1306 = vpop.f32.mrf.mxu0
  %1307 = vdwg.mxu0
  %v1309 = vsel %vm925, %v1173, 0
  %v1312 = vsel %vm1177, %v924, 0
  %1314 = vmatpush.bf16.msra.mxu0 0
  %1315 = vmatpush.bf16.msra.mxu0 0
  %1316 = vmatpush.bf16.msra.mxu0 0
  %1317 = vmatpush.bf16.msra.mxu0 0
  %1318 = vmatpush.bf16.msra.mxu0 0
  %1319 = vmatpush.bf16.msra.mxu0 0
  %1320 = vmatpush.bf16.msra.mxu0 0
  %1321 = vmatpush.bf16.msra.mxu0 %v1312
  %1322 = vmatmul.bf16.gmra.mxu0 %v1309
  %v1323 = vpop.f32.mrf.mxu0
  %v1324 = vadd.f32 0.0, %v1323
  %v1325 = vpop.f32.mrf.mxu0
  %1326 = vdwg.mxu0
  %v1327 = vrot.slane %v1229, 4
  %v1328 = vsel %vm193, %v1327, %v1191
  %v1329 = vrot.slane %v1191, 4
  %v1330 = vsel %vm193, %v1229, %v1329
  %v1332 = vunpack.c.l.s4 1983009808
  %v1333 = vunpack.c.0.s8 %v1332
  %v1334 = vperm.slane %v1328, %v1333
  %v1336 = vunpack.c.l.s4 1983009808
  %v1337 = vunpack.c.0.s8 %v1336
  %v1338 = vperm.slane %v1330, %v1337
  %v1339 = vrot.slane %v1248, 4
  %v1340 = vsel %vm193, %v1339, %v1210
  %v1341 = vrot.slane %v1210, 4
  %v1342 = vsel %vm193, %v1248, %v1341
  %v1344 = vunpack.c.l.s4 1983009808
  %v1345 = vunpack.c.0.s8 %v1344
  %v1346 = vperm.slane %v1340, %v1345
  %v1348 = vunpack.c.l.s4 1983009808
  %v1349 = vunpack.c.0.s8 %v1348
  %v1350 = vperm.slane %v1342, %v1349
  %v1351 = vrot.slane %v1346, 4
  %v1352 = vsel %vm193, %v1351, %v1334
  %v1353 = vrot.slane %v1334, 4
  %v1354 = vsel %vm193, %v1346, %v1353
  %v1356 = vunpack.c.l.s4 1934713408
  %v1357 = vunpack.c.0.s8 %v1356
  %v1358 = vperm.slane %v1352, %v1357
  %v1360 = vunpack.c.l.s4 1934713408
  %v1361 = vunpack.c.0.s8 %v1360
  %v1362 = vperm.slane %v1354, %v1361
  %v1363 = vrot.slane %v1350, 4
  %v1364 = vsel %vm193, %v1363, %v1338
  %v1365 = vrot.slane %v1338, 4
  %v1366 = vsel %vm193, %v1350, %v1365
  %v1368 = vunpack.c.l.s4 1934713408
  %v1369 = vunpack.c.0.s8 %v1368
  %v1370 = vperm.slane %v1364, %v1369
  %v1372 = vunpack.c.l.s4 1934713408
  %v1373 = vunpack.c.0.s8 %v1372
  %v1374 = vperm.slane %v1366, %v1373
  %v1375 = vrot.slane %v1358, 4
  %v1376 = vsel %vm193, 0.0, %v1375
  %v1377 = vrot.slane %v1362, 4
  %v1378 = vsel %vm193, 0.0, %v1377
  %v1379 = vrot.slane %v1370, 4
  %v1380 = vsel %vm193, 0.0, %v1379
  %v1381 = vrot.slane %v1374, 4
  %v1382 = vsel %vm193, 0.0, %v1381
  %v1383 = vrot.slane %v1305, 4
  %v1384 = vsel %vm193, %v1383, %v1267
  %v1385 = vrot.slane %v1267, 4
  %v1386 = vsel %vm193, %v1305, %v1385
  %v1388 = vunpack.c.l.s4 1983009808
  %v1389 = vunpack.c.0.s8 %v1388
  %v1390 = vperm.slane %v1384, %v1389
  %v1392 = vunpack.c.l.s4 1983009808
  %v1393 = vunpack.c.0.s8 %v1392
  %v1394 = vperm.slane %v1386, %v1393
  %v1395 = vrot.slane %v1324, 4
  %v1396 = vsel %vm193, %v1395, %v1286
  %v1397 = vrot.slane %v1286, 4
  %v1398 = vsel %vm193, %v1324, %v1397
  %v1400 = vunpack.c.l.s4 1983009808
  %v1401 = vunpack.c.0.s8 %v1400
  %v1402 = vperm.slane %v1396, %v1401
  %v1404 = vunpack.c.l.s4 1983009808
  %v1405 = vunpack.c.0.s8 %v1404
  %v1406 = vperm.slane %v1398, %v1405
  %v1407 = vrot.slane %v1402, 4
  %v1408 = vsel %vm193, %v1407, %v1390
  %v1409 = vrot.slane %v1390, 4
  %v1410 = vsel %vm193, %v1402, %v1409
  %v1412 = vunpack.c.l.s4 1934713408
  %v1413 = vunpack.c.0.s8 %v1412
  %v1414 = vperm.slane %v1408, %v1413
  %v1416 = vunpack.c.l.s4 1934713408
  %v1417 = vunpack.c.0.s8 %v1416
  %v1418 = vperm.slane %v1410, %v1417
  %v1419 = vrot.slane %v1406, 4
  %v1420 = vsel %vm193, %v1419, %v1394
  %v1421 = vrot.slane %v1394, 4
  %v1422 = vsel %vm193, %v1406, %v1421
  %v1424 = vunpack.c.l.s4 1934713408
  %v1425 = vunpack.c.0.s8 %v1424
  %v1426 = vperm.slane %v1420, %v1425
  %v1428 = vunpack.c.l.s4 1934713408
  %v1429 = vunpack.c.0.s8 %v1428
  %v1430 = vperm.slane %v1422, %v1429
  %v1431 = vrot.slane %v1414, 4
  %v1432 = vsel %vm193, 0.0, %v1431
  %v1433 = vrot.slane %v1418, 4
  %v1434 = vsel %vm193, 0.0, %v1433
  %v1435 = vrot.slane %v1426, 4
  %v1436 = vsel %vm193, 0.0, %v1435
  %v1437 = vrot.slane %v1430, 4
  %v1438 = vsel %vm193, 0.0, %v1437
  %v1439 = vsel %vm193, %v1377, %v1358
  %v1441 = vunpack.c.l.s4 1983009808
  %v1442 = vunpack.c.0.s8 %v1441
  %v1443 = vperm.slane %v1439, %v1442
  %v1444 = vrot.slane %v1378, 4
  %v1445 = vsel %vm193, %v1444, %v1376
  %v1447 = vunpack.c.l.s4 1983009808
  %v1448 = vunpack.c.0.s8 %v1447
  %v1449 = vperm.slane %v1445, %v1448
  %v1450 = vsel %vm193, %v1381, %v1370
  %v1452 = vunpack.c.l.s4 1983009808
  %v1453 = vunpack.c.0.s8 %v1452
  %v1454 = vperm.slane %v1450, %v1453
  %v1455 = vrot.slane %v1382, 4
  %v1456 = vsel %vm193, %v1455, %v1380
  %v1458 = vunpack.c.l.s4 1983009808
  %v1459 = vunpack.c.0.s8 %v1458
  %v1460 = vperm.slane %v1456, %v1459
  %v1461 = vrot.slane %v1449, 4
  %v1462 = vsel %vm193, %v1461, %v1443
  %v1463 = vrot.slane %v1443, 4
  %v1464 = vsel %vm193, %v1449, %v1463
  %v1466 = vunpack.c.l.s4 1934713408
  %v1467 = vunpack.c.0.s8 %v1466
  %v1468 = vperm.slane %v1462, %v1467
  %v1470 = vunpack.c.l.s4 1934713408
  %v1471 = vunpack.c.0.s8 %v1470
  %v1472 = vperm.slane %v1464, %v1471
  %v1473 = vrot.slane %v1460, 4
  %v1474 = vsel %vm193, %v1473, %v1454
  %v1475 = vrot.slane %v1454, 4
  %v1476 = vsel %vm193, %v1460, %v1475
  %v1478 = vunpack.c.l.s4 1934713408
  %v1479 = vunpack.c.0.s8 %v1478
  %v1480 = vperm.slane %v1474, %v1479
  %v1482 = vunpack.c.l.s4 1934713408
  %v1483 = vunpack.c.0.s8 %v1482
  %v1484 = vperm.slane %v1476, %v1483
  %v1485 = vrot.slane %v1480, 4
  %v1486 = vsel %vm193, %v1485, %v1468
  %v1487 = vrot.slane %v1468, 4
  %v1488 = vsel %vm193, %v1480, %v1487
  %v1489 = vrot.slane %v1484, 4
  %v1490 = vsel %vm193, %v1489, %v1472
  %v1491 = vrot.slane %v1472, 4
  %v1492 = vsel %vm193, %v1484, %v1491
  %v1493 = vsel %vm193, %v1433, %v1414
  %v1495 = vunpack.c.l.s4 1983009808
  %v1496 = vunpack.c.0.s8 %v1495
  %v1497 = vperm.slane %v1493, %v1496
  %v1498 = vrot.slane %v1434, 4
  %v1499 = vsel %vm193, %v1498, %v1432
  %v1501 = vunpack.c.l.s4 1983009808
  %v1502 = vunpack.c.0.s8 %v1501
  %v1503 = vperm.slane %v1499, %v1502
  %v1504 = vsel %vm193, %v1437, %v1426
  %v1506 = vunpack.c.l.s4 1983009808
  %v1507 = vunpack.c.0.s8 %v1506
  %v1508 = vperm.slane %v1504, %v1507
  %v1509 = vrot.slane %v1438, 4
  %v1510 = vsel %vm193, %v1509, %v1436
  %v1512 = vunpack.c.l.s4 1983009808
  %v1513 = vunpack.c.0.s8 %v1512
  %v1514 = vperm.slane %v1510, %v1513
  %v1515 = vrot.slane %v1503, 4
  %v1516 = vsel %vm193, %v1515, %v1497
  %v1517 = vrot.slane %v1497, 4
  %v1518 = vsel %vm193, %v1503, %v1517
  %v1520 = vunpack.c.l.s4 1934713408
  %v1521 = vunpack.c.0.s8 %v1520
  %v1522 = vperm.slane %v1516, %v1521
  %v1524 = vunpack.c.l.s4 1934713408
  %v1525 = vunpack.c.0.s8 %v1524
  %v1526 = vperm.slane %v1518, %v1525
  %v1527 = vrot.slane %v1514, 4
  %v1528 = vsel %vm193, %v1527, %v1508
  %v1529 = vrot.slane %v1508, 4
  %v1530 = vsel %vm193, %v1514, %v1529
  %v1532 = vunpack.c.l.s4 1934713408
  %v1533 = vunpack.c.0.s8 %v1532
  %v1534 = vperm.slane %v1528, %v1533
  %v1536 = vunpack.c.l.s4 1934713408
  %v1537 = vunpack.c.0.s8 %v1536
  %v1538 = vperm.slane %v1530, %v1537
  %v1539 = vrot.slane %v1534, 4
  %v1540 = vsel %vm193, %v1539, %v1522
  %v1541 = vrot.slane %v1522, 4
  %v1542 = vsel %vm193, %v1534, %v1541
  %v1543 = vrot.slane %v1538, 4
  %v1544 = vsel %vm193, %v1543, %v1526
  %v1545 = vrot.slane %v1526, 4
  %v1546 = vsel %vm193, %v1538, %v1545
  %1549 = vrot.lane.b32.xlu0 %v1488, 8
  %v1550 = vpop.permute.xlu0 %1549
  %1551 = vrot.lane.b32.xlu0 %v1542, 8
  %v1552 = vpop.permute.xlu0 %1551
  %1557 = vrot.lane.b32.xlu0 %v1490, 16
  %v1558 = vpop.permute.xlu0 %1557
  %1559 = vrot.lane.b32.xlu0 %v1544, 16
  %v1560 = vpop.permute.xlu0 %1559
  %1565 = vrot.lane.b32.xlu0 %v1492, 24
  %v1566 = vpop.permute.xlu0 %1565
  %1567 = vrot.lane.b32.xlu0 %v1546, 24
  %v1568 = vpop.permute.xlu0 %1567
  %v1571 = vsel %vm925, %v1486, %v1550
  %v1572 = vsel %vm925, %v1540, %v1552
  %vm1573 = vcmask 130048
  %v1574 = vsel %vm1573, %v1571, %v1558
  %v1575 = vsel %vm1573, %v1572, %v1560
  %vm1576 = vcmask 195584
  %v1577 = vsel %vm1576, %v1574, %v1566
  %v1578 = vsel %vm1576, %v1575, %v1568
  %v1579 = vld [vmem:[%s6] sm:$0xf]
  %v1580 = vld [vmem:[%s6 + $0x4] sm:$0xf]
  %v1581 = vld [vmem:[%s6 + $0x8] sm:$0xf]
  %v1582 = vld [vmem:[%s6 + $0xc] sm:$0xf]
  %v1583 = vpack.c.bf16 %v1578, %v1577
  %v1588 = vunpack.c.l.b16 %v1579
  %v1589 = vunpack.c.l.b16 %v1580
  %v1590 = vunpack.c.l.b16 %v1581
  %v1591 = vunpack.c.l.b16 %v1582
  %v1592 = vpack.c.b16 %v1589, %v1588
  %v1593 = vpack.c.b16 %v1591, %v1590
  %v1597 = vsel %vm72, %v1583, 0
  %1599 = vmatpush.bf16.msra.mxu0 0
  %1600 = vmatpush.bf16.msra.mxu0 0
  %1601 = vmatpush.bf16.msra.mxu0 0
  %1602 = vmatpush.bf16.msra.mxu0 0
  %1603 = vmatpush.bf16.msra.mxu0 0
  %1604 = vmatpush.bf16.msra.mxu0 0
  %1605 = vmatpush.bf16.msra.mxu0 %v1593
  %1606 = vmatpush.bf16.msra.mxu0 %v1592
  %1607 = vmatmul.bf16.gmra.mxu0 %v1597
  %v1608 = vpop.f32.mrf.mxu0
  %v1609 = vadd.f32 0.0, %v1608
  %v1610 = vpop.f32.mrf.mxu0
  %v1611 = vadd.f32 0.0, %v1610
  %1612 = vdwg.mxu0
  %v1613 = vadd.f32 %v132, %v1609
  %v1614 = vadd.f32 %v133, %v1611
  %v1615 = vld [vmem:[%s7] sm:$0x1]
  %v1617 = vperm.slane %v1615, 0
  %v1619 = vadd.f32 %v1613, %v1617
  %v1620 = vadd.f32 %v1614, %v1617
  %v1621 = vld [vmem:[%s8] sm:$0x1]
  %v1622 = vld [vmem:[%s9] sm:$0x1]
  %v1623 = vsel %vm72, %v1619, 0.0
  %1624 = vadd.xlane.f32.xlu0 %v1623
  %v1625 = vpop.xlane.xlu0 %1624
  %v1626 = vsel %vm72, %v1620, 0.0
  %1627 = vadd.xlane.f32.xlu0 %v1626
  %v1628 = vpop.xlane.xlu0 %1627
  %v1629 = vmul.f32 %v1625, %v85
  %v1630 = vmul.f32 %v1628, %v85
  %v1631 = vsub.f32 %v1619, %v1629
  %v1632 = vsub.f32 %v1620, %v1630
  %v1633 = vmul.f32 %v1631, %v1631
  %v1634 = vmul.f32 %v1632, %v1632
  %v1635 = vsel %vm72, %v1633, 0.0
  %1636 = vadd.xlane.f32.xlu0 %v1635
  %v1637 = vpop.xlane.xlu0 %1636
  %v1638 = vsel %vm72, %v1634, 0.0
  %1639 = vadd.xlane.f32.xlu0 %v1638
  %v1640 = vpop.xlane.xlu0 %1639
  %v1641 = vmul.f32 %v1637, %v85
  %v1642 = vmul.f32 %v1640, %v85
  %v1643 = vadd.f32 %v1641, 1e-05
  %v1644 = vadd.f32 %v1642, 1e-05
  %v1645 = vrsqrt.pop %v1643
  %v1646 = vmul.f32 %v1645, %v1643
  %v1647 = vmul.f32 %v1646, %v1645
  %v1648 = vmul.f32 0.5, %v1647
  %v1649 = vsub.f32 1.5, %v1648
  %v1650 = vmul.f32 %v1645, %v1649
  %vm1651 = vweird.f32 %v1643
  %vm1652 = vweird.f32 %v1645
  %vm1653 = vmor %vm1651, %vm1652
  %v1654 = vsel %vm1653, %v1645, %v1650
  %v1655 = vrsqrt.pop %v1644
  %v1656 = vmul.f32 %v1655, %v1644
  %v1657 = vmul.f32 %v1656, %v1655
  %v1658 = vmul.f32 0.5, %v1657
  %v1659 = vsub.f32 1.5, %v1658
  %v1660 = vmul.f32 %v1655, %v1659
  %vm1661 = vweird.f32 %v1644
  %vm1662 = vweird.f32 %v1655
  %vm1663 = vmor %vm1661, %vm1662
  %v1664 = vsel %vm1663, %v1655, %v1660
  %v1665 = vmul.f32 %v1631, %v1654
  %v1666 = vmul.f32 %v1632, %v1664
  %v1668 = vperm.slane %v1621, 0
  %v1670 = vmul.f32 %v1665, %v1668
  %v1671 = vmul.f32 %v1666, %v1668
  %v1673 = vperm.slane %v1622, 0
  %v1675 = vadd.f32 %v1670, %v1673
  %v1676 = vadd.f32 %v1671, %v1673
  %v1677 = vld [vmem:[%s10] sm:$0xf]
  %v1678 = vld [vmem:[%s10 + $0x4] sm:$0xf]
  %v1679 = vld [vmem:[%s10 + $0x8] sm:$0xf]
  %v1680 = vld [vmem:[%s10 + $0xc] sm:$0xf]
  %v1681 = vpack.c.bf16 %v1676, %v1675
  %v1682 = vld [vmem:[%s11] sm:$0x1]
  %v1684 = vperm.slane %v1682, 0
  %v1690 = vunpack.c.l.b16 %v1677
  %v1691 = vunpack.c.l.b16 %v1678
  %v1692 = vunpack.c.l.b16 %v1679
  %v1693 = vunpack.c.l.b16 %v1680
  %v1694 = vpack.c.b16 %v1691, %v1690
  %v1695 = vpack.c.b16 %v1693, %v1692
  %v1699 = vsel %vm72, %v1681, 0
  %1701 = vmatpush.bf16.msra.mxu0 0
  %1702 = vmatpush.bf16.msra.mxu0 0
  %1703 = vmatpush.bf16.msra.mxu0 0
  %1704 = vmatpush.bf16.msra.mxu0 0
  %1705 = vmatpush.bf16.msra.mxu0 0
  %1706 = vmatpush.bf16.msra.mxu0 0
  %1707 = vmatpush.bf16.msra.mxu0 %v1695
  %1708 = vmatpush.bf16.msra.mxu0 %v1694
  %1709 = vmatmul.bf16.gmra.mxu0 %v1699
  %v1710 = vpop.f32.mrf.mxu0
  %v1711 = vadd.f32 %v1684, %v1710
  %v1712 = vpop.f32.mrf.mxu0
  %v1713 = vadd.f32 %v1684, %v1712
  %1714 = vdwg.mxu0
  %v1715 = vmul.f32 %v1711, %v1711
  %v1716 = vmul.f32 %v1713, %v1713
  %v1717 = vmul.f32 %v1711, %v1715
  %v1718 = vmul.f32 %v1713, %v1716
  %v1719 = vmul.f32 %v1717, 0.044715
  %v1720 = vmul.f32 %v1718, 0.044715
  %v1721 = vadd.f32 %v1711, %v1719
  %v1722 = vadd.f32 %v1713, %v1720
  %v1723 = vmul.f32 %v1721, 0.7978846
  %v1724 = vmul.f32 %v1722, 0.7978846
  %v1725 = vtanh.pop %v1723
  %v1726 = vtanh.pop %v1724
  %v1727 = vadd.f32 %v1725, 1.0
  %v1728 = vadd.f32 %v1726, 1.0
  %v1729 = vmul.f32 %v1727, 0.5
  %v1730 = vmul.f32 %v1728, 0.5
  %v1731 = vmul.f32 %v1711, %v1729
  %v1732 = vmul.f32 %v1713, %v1730
  %v1733 = vld [vmem:[%s12] sm:$0xf]
  %v1734 = vld [vmem:[%s12 + $0x4] sm:$0xf]
  %v1735 = vld [vmem:[%s12 + $0x8] sm:$0xf]
  %v1736 = vld [vmem:[%s12 + $0xc] sm:$0xf]
  %v1737 = vld [vmem:[%s12 + $0x10] sm:$0xf]
  %v1738 = vld [vmem:[%s12 + $0x14] sm:$0xf]
  %v1739 = vld [vmem:[%s12 + $0x18] sm:$0xf]
  %v1740 = vld [vmem:[%s12 + $0x1c] sm:$0xf]
  %v1741 = vpack.c.bf16 %v1732, %v1731
  %v1742 = vld [vmem:[%s13] sm:$0x1]
  %v1744 = vperm.slane %v1742, 0
  %v1754 = vunpack.c.l.b16 %v1733
  %v1755 = vunpack.c.l.b16 %v1734
  %v1756 = vunpack.c.l.b16 %v1735
  %v1757 = vunpack.c.l.b16 %v1736
  %v1758 = vunpack.c.l.b16 %v1737
  %v1759 = vunpack.c.l.b16 %v1738
  %v1760 = vunpack.c.l.b16 %v1739
  %v1761 = vunpack.c.l.b16 %v1740
  %v1762 = vpack.c.b16 %v1755, %v1754
  %v1763 = vpack.c.b16 %v1757, %v1756
  %v1764 = vpack.c.b16 %v1759, %v1758
  %v1765 = vpack.c.b16 %v1761, %v1760
  %vm1770 = vcmask 523264
  %v1772 = vsel %vm1770, %v1741, 0
  %1774 = vmatpush.bf16.msra.mxu0 0
  %1775 = vmatpush.bf16.msra.mxu0 0
  %1776 = vmatpush.bf16.msra.mxu0 0
  %1777 = vmatpush.bf16.msra.mxu0 0
  %1778 = vmatpush.bf16.msra.mxu0 %v1765
  %1779 = vmatpush.bf16.msra.mxu0 %v1764
  %1780 = vmatpush.bf16.msra.mxu0 %v1763
  %1781 = vmatpush.bf16.msra.mxu0 %v1762
  %1782 = vmatmul.bf16.gmra.mxu0 %v1772
  %v1783 = vpop.f32.mrf.mxu0
  %v1784 = vadd.f32 %v1744, %v1783
  %v1785 = vpop.f32.mrf.mxu0
  %v1786 = vadd.f32 %v1744, %v1785
  %1787 = vdwg.mxu0
  %v1788 = vadd.f32 %v1675, %v1784
  %v1789 = vadd.f32 %v1676, %v1786
  %v1790 = vld [vmem:[%s14] sm:$0x1]
  %v1791 = vld [vmem:[%s15] sm:$0x1]
  %v1792 = vsel %vm72, %v1788, 0.0
  %1793 = vadd.xlane.f32.xlu0 %v1792
  %v1794 = vpop.xlane.xlu0 %1793
  %v1795 = vsel %vm72, %v1789, 0.0
  %1796 = vadd.xlane.f32.xlu0 %v1795
  %v1797 = vpop.xlane.xlu0 %1796
  %v1798 = vmul.f32 %v1794, %v85
  %v1799 = vmul.f32 %v1797, %v85
  %v1800 = vsub.f32 %v1788, %v1798
  %v1801 = vsub.f32 %v1789, %v1799
  %v1802 = vmul.f32 %v1800, %v1800
  %v1803 = vmul.f32 %v1801, %v1801
  %v1804 = vsel %vm72, %v1802, 0.0
  %1805 = vadd.xlane.f32.xlu0 %v1804
  %v1806 = vpop.xlane.xlu0 %1805
  %v1807 = vsel %vm72, %v1803, 0.0
  %1808 = vadd.xlane.f32.xlu0 %v1807
  %v1809 = vpop.xlane.xlu0 %1808
  %v1810 = vmul.f32 %v1806, %v85
  %v1811 = vmul.f32 %v1809, %v85
  %v1812 = vadd.f32 %v1810, 1e-05
  %v1813 = vadd.f32 %v1811, 1e-05
  %v1814 = vrsqrt.pop %v1812
  %v1815 = vmul.f32 %v1814, %v1812
  %v1816 = vmul.f32 %v1815, %v1814
  %v1817 = vmul.f32 0.5, %v1816
  %v1818 = vsub.f32 1.5, %v1817
  %v1819 = vmul.f32 %v1814, %v1818
  %vm1820 = vweird.f32 %v1812
  %vm1821 = vweird.f32 %v1814
  %vm1822 = vmor %vm1820, %vm1821
  %v1823 = vsel %vm1822, %v1814, %v1819
  %v1824 = vrsqrt.pop %v1813
  %v1825 = vmul.f32 %v1824, %v1813
  %v1826 = vmul.f32 %v1825, %v1824
  %v1827 = vmul.f32 0.5, %v1826
  %v1828 = vsub.f32 1.5, %v1827
  %v1829 = vmul.f32 %v1824, %v1828
  %vm1830 = vweird.f32 %v1813
  %vm1831 = vweird.f32 %v1824
  %vm1832 = vmor %vm1830, %vm1831
  %v1833 = vsel %vm1832, %v1824, %v1829
  %v1834 = vmul.f32 %v1800, %v1823
  %v1835 = vmul.f32 %v1801, %v1833
  %v1837 = vperm.slane %v1790, 0
  %v1839 = vmul.f32 %v1834, %v1837
  %v1840 = vmul.f32 %v1835, %v1837
  %v1842 = vperm.slane %v1791, 0
  %v1844 = vadd.f32 %v1839, %v1842
  %v1845 = vadd.f32 %v1840, %v1842
  %s1846 = scalar_lea.vmem %s4, 16
  %v1847 = vld [vmem:[%s1846] sm:$0xf]
  %v1848 = vld [vmem:[%s1846 + $0x4] sm:$0xf]
  %v1849 = vld [vmem:[%s1846 + $0x8] sm:$0xf]
  %v1850 = vld [vmem:[%s1846 + $0xc] sm:$0xf]
  %v1851 = vpack.c.bf16 %v1845, %v1844
  %s1852 = scalar_lea.vmem %s5, 1
  %v1853 = vld [vmem:[%s1852] sm:$0x1]
  %v1855 = vperm.slane %v1853, 0
  %v1861 = vunpack.c.l.b16 %v1847
  %v1862 = vunpack.c.l.b16 %v1848
  %v1863 = vunpack.c.l.b16 %v1849
  %v1864 = vunpack.c.l.b16 %v1850
  %v1865 = vpack.c.b16 %v1862, %v1861
  %v1866 = vpack.c.b16 %v1864, %v1863
  %v1870 = vsel %vm72, %v1851, 0
  %1872 = vmatpush.bf16.msra.mxu0 0
  %1873 = vmatpush.bf16.msra.mxu0 0
  %1874 = vmatpush.bf16.msra.mxu0 0
  %1875 = vmatpush.bf16.msra.mxu0 0
  %1876 = vmatpush.bf16.msra.mxu0 0
  %1877 = vmatpush.bf16.msra.mxu0 0
  %1878 = vmatpush.bf16.msra.mxu0 %v1866
  %1879 = vmatpush.bf16.msra.mxu0 %v1865
  %1880 = vmatmul.bf16.gmra.mxu0 %v1870
  %v1881 = vpop.f32.mrf.mxu0
  %v1882 = vadd.f32 %v1855, %v1881
  %v1883 = vpop.f32.mrf.mxu0
  %v1884 = vadd.f32 %v1855, %v1883
  %1885 = vdwg.mxu0
  %1888 = vrot.lane.b32.xlu0 %v1882, 120
  %v1889 = vpop.permute.xlu0 %1888
  %1890 = vrot.lane.b32.xlu0 %v1884, 120
  %v1891 = vpop.permute.xlu0 %1890
  %1894 = vrot.lane.b32.xlu0 %v1882, 112
  %v1895 = vpop.permute.xlu0 %1894
  %1896 = vrot.lane.b32.xlu0 %v1884, 112
  %v1897 = vpop.permute.xlu0 %1896
  %1900 = vrot.lane.b32.xlu0 %v1882, 104
  %v1901 = vpop.permute.xlu0 %1900
  %1902 = vrot.lane.b32.xlu0 %v1884, 104
  %v1903 = vpop.permute.xlu0 %1902
  %v1906 = vrot.slane %v1895, 4
  %v1907 = vsel %vm193, %v1906, %v1882
  %v1908 = vrot.slane %v1882, 4
  %v1909 = vsel %vm193, %v1895, %v1908
  %v1911 = vunpack.c.l.s4 1983009808
  %v1912 = vunpack.c.0.s8 %v1911
  %v1913 = vperm.slane %v1907, %v1912
  %v1915 = vunpack.c.l.s4 1983009808
  %v1916 = vunpack.c.0.s8 %v1915
  %v1917 = vperm.slane %v1909, %v1916
  %v1918 = vrot.slane %v1901, 4
  %v1919 = vsel %vm193, %v1918, %v1889
  %v1920 = vrot.slane %v1889, 4
  %v1921 = vsel %vm193, %v1901, %v1920
  %v1923 = vunpack.c.l.s4 1983009808
  %v1924 = vunpack.c.0.s8 %v1923
  %v1925 = vperm.slane %v1919, %v1924
  %v1927 = vunpack.c.l.s4 1983009808
  %v1928 = vunpack.c.0.s8 %v1927
  %v1929 = vperm.slane %v1921, %v1928
  %v1930 = vrot.slane %v1925, 4
  %v1931 = vsel %vm193, %v1930, %v1913
  %v1932 = vrot.slane %v1913, 4
  %v1933 = vsel %vm193, %v1925, %v1932
  %v1935 = vunpack.c.l.s4 1934713408
  %v1936 = vunpack.c.0.s8 %v1935
  %v1937 = vperm.slane %v1931, %v1936
  %v1939 = vunpack.c.l.s4 1934713408
  %v1940 = vunpack.c.0.s8 %v1939
  %v1941 = vperm.slane %v1933, %v1940
  %v1942 = vrot.slane %v1929, 4
  %v1943 = vsel %vm193, %v1942, %v1917
  %v1944 = vrot.slane %v1917, 4
  %v1945 = vsel %vm193, %v1929, %v1944
  %v1947 = vunpack.c.l.s4 1934713408
  %v1948 = vunpack.c.0.s8 %v1947
  %v1949 = vperm.slane %v1943, %v1948
  %v1951 = vunpack.c.l.s4 1934713408
  %v1952 = vunpack.c.0.s8 %v1951
  %v1953 = vperm.slane %v1945, %v1952
  %v1954 = vrot.slane %v1937, 4
  %v1955 = vsel %vm193, 0.0, %v1954
  %v1956 = vrot.slane %v1941, 4
  %v1957 = vsel %vm193, 0.0, %v1956
  %v1958 = vrot.slane %v1949, 4
  %v1959 = vsel %vm193, 0.0, %v1958
  %v1960 = vrot.slane %v1953, 4
  %v1961 = vsel %vm193, 0.0, %v1960
  %v1962 = vrot.slane %v1897, 4
  %v1963 = vsel %vm193, %v1962, %v1884
  %v1964 = vrot.slane %v1884, 4
  %v1965 = vsel %vm193, %v1897, %v1964
  %v1967 = vunpack.c.l.s4 1983009808
  %v1968 = vunpack.c.0.s8 %v1967
  %v1969 = vperm.slane %v1963, %v1968
  %v1971 = vunpack.c.l.s4 1983009808
  %v1972 = vunpack.c.0.s8 %v1971
  %v1973 = vperm.slane %v1965, %v1972
  %v1974 = vrot.slane %v1903, 4
  %v1975 = vsel %vm193, %v1974, %v1891
  %v1976 = vrot.slane %v1891, 4
  %v1977 = vsel %vm193, %v1903, %v1976
  %v1979 = vunpack.c.l.s4 1983009808
  %v1980 = vunpack.c.0.s8 %v1979
  %v1981 = vperm.slane %v1975, %v1980
  %v1983 = vunpack.c.l.s4 1983009808
  %v1984 = vunpack.c.0.s8 %v1983
  %v1985 = vperm.slane %v1977, %v1984
  %v1986 = vrot.slane %v1981, 4
  %v1987 = vsel %vm193, %v1986, %v1969
  %v1988 = vrot.slane %v1969, 4
  %v1989 = vsel %vm193, %v1981, %v1988
  %v1991 = vunpack.c.l.s4 1934713408
  %v1992 = vunpack.c.0.s8 %v1991
  %v1993 = vperm.slane %v1987, %v1992
  %v1995 = vunpack.c.l.s4 1934713408
  %v1996 = vunpack.c.0.s8 %v1995
  %v1997 = vperm.slane %v1989, %v1996
  %v1998 = vrot.slane %v1985, 4
  %v1999 = vsel %vm193, %v1998, %v1973
  %v2000 = vrot.slane %v1973, 4
  %v2001 = vsel %vm193, %v1985, %v2000
  %v2003 = vunpack.c.l.s4 1934713408
  %v2004 = vunpack.c.0.s8 %v2003
  %v2005 = vperm.slane %v1999, %v2004
  %v2007 = vunpack.c.l.s4 1934713408
  %v2008 = vunpack.c.0.s8 %v2007
  %v2009 = vperm.slane %v2001, %v2008
  %v2010 = vrot.slane %v1993, 4
  %v2011 = vsel %vm193, 0.0, %v2010
  %v2012 = vrot.slane %v1997, 4
  %v2013 = vsel %vm193, 0.0, %v2012
  %v2014 = vrot.slane %v2005, 4
  %v2015 = vsel %vm193, 0.0, %v2014
  %v2016 = vrot.slane %v2009, 4
  %v2017 = vsel %vm193, 0.0, %v2016
  %v2018 = vsel %vm193, %v1956, %v1937
  %v2020 = vunpack.c.l.s4 1983009808
  %v2021 = vunpack.c.0.s8 %v2020
  %v2022 = vperm.slane %v2018, %v2021
  %v2023 = vrot.slane %v1957, 4
  %v2024 = vsel %vm193, %v2023, %v1955
  %v2026 = vunpack.c.l.s4 1983009808
  %v2027 = vunpack.c.0.s8 %v2026
  %v2028 = vperm.slane %v2024, %v2027
  %v2029 = vsel %vm193, %v1960, %v1949
  %v2031 = vunpack.c.l.s4 1983009808
  %v2032 = vunpack.c.0.s8 %v2031
  %v2033 = vperm.slane %v2029, %v2032
  %v2034 = vrot.slane %v1961, 4
  %v2035 = vsel %vm193, %v2034, %v1959
  %v2037 = vunpack.c.l.s4 1983009808
  %v2038 = vunpack.c.0.s8 %v2037
  %v2039 = vperm.slane %v2035, %v2038
  %v2040 = vrot.slane %v2028, 4
  %v2041 = vsel %vm193, %v2040, %v2022
  %v2042 = vrot.slane %v2022, 4
  %v2043 = vsel %vm193, %v2028, %v2042
  %v2045 = vunpack.c.l.s4 1934713408
  %v2046 = vunpack.c.0.s8 %v2045
  %v2047 = vperm.slane %v2041, %v2046
  %v2049 = vunpack.c.l.s4 1934713408
  %v2050 = vunpack.c.0.s8 %v2049
  %v2051 = vperm.slane %v2043, %v2050
  %v2052 = vrot.slane %v2039, 4
  %v2053 = vsel %vm193, %v2052, %v2033
  %v2054 = vrot.slane %v2033, 4
  %v2055 = vsel %vm193, %v2039, %v2054
  %v2057 = vunpack.c.l.s4 1934713408
  %v2058 = vunpack.c.0.s8 %v2057
  %v2059 = vperm.slane %v2053, %v2058
  %v2061 = vunpack.c.l.s4 1934713408
  %v2062 = vunpack.c.0.s8 %v2061
  %v2063 = vperm.slane %v2055, %v2062
  %v2064 = vrot.slane %v2059, 4
  %v2065 = vsel %vm193, %v2064, %v2047
  %v2066 = vrot.slane %v2047, 4
  %v2067 = vsel %vm193, %v2059, %v2066
  %v2068 = vrot.slane %v2063, 4
  %v2069 = vsel %vm193, %v2068, %v2051
  %v2070 = vrot.slane %v2051, 4
  %v2071 = vsel %vm193, %v2063, %v2070
  %v2072 = vsel %vm193, %v2012, %v1993
  %v2074 = vunpack.c.l.s4 1983009808
  %v2075 = vunpack.c.0.s8 %v2074
  %v2076 = vperm.slane %v2072, %v2075
  %v2077 = vrot.slane %v2013, 4
  %v2078 = vsel %vm193, %v2077, %v2011
  %v2080 = vunpack.c.l.s4 1983009808
  %v2081 = vunpack.c.0.s8 %v2080
  %v2082 = vperm.slane %v2078, %v2081
  %v2083 = vsel %vm193, %v2016, %v2005
  %v2085 = vunpack.c.l.s4 1983009808
  %v2086 = vunpack.c.0.s8 %v2085
  %v2087 = vperm.slane %v2083, %v2086
  %v2088 = vrot.slane %v2017, 4
  %v2089 = vsel %vm193, %v2088, %v2015
  %v2091 = vunpack.c.l.s4 1983009808
  %v2092 = vunpack.c.0.s8 %v2091
  %v2093 = vperm.slane %v2089, %v2092
  %v2094 = vrot.slane %v2082, 4
  %v2095 = vsel %vm193, %v2094, %v2076
  %v2096 = vrot.slane %v2076, 4
  %v2097 = vsel %vm193, %v2082, %v2096
  %v2099 = vunpack.c.l.s4 1934713408
  %v2100 = vunpack.c.0.s8 %v2099
  %v2101 = vperm.slane %v2095, %v2100
  %v2103 = vunpack.c.l.s4 1934713408
  %v2104 = vunpack.c.0.s8 %v2103
  %v2105 = vperm.slane %v2097, %v2104
  %v2106 = vrot.slane %v2093, 4
  %v2107 = vsel %vm193, %v2106, %v2087
  %v2108 = vrot.slane %v2087, 4
  %v2109 = vsel %vm193, %v2093, %v2108
  %v2111 = vunpack.c.l.s4 1934713408
  %v2112 = vunpack.c.0.s8 %v2111
  %v2113 = vperm.slane %v2107, %v2112
  %v2115 = vunpack.c.l.s4 1934713408
  %v2116 = vunpack.c.0.s8 %v2115
  %v2117 = vperm.slane %v2109, %v2116
  %v2118 = vrot.slane %v2113, 4
  %v2119 = vsel %vm193, %v2118, %v2101
  %v2120 = vrot.slane %v2101, 4
  %v2121 = vsel %vm193, %v2113, %v2120
  %v2122 = vrot.slane %v2117, 4
  %v2123 = vsel %vm193, %v2122, %v2105
  %v2124 = vrot.slane %v2105, 4
  %v2125 = vsel %vm193, %v2117, %v2124
  %v2126 = vpack.c.bf16 %v2065, %v2065
  %v2127 = vpack.c.bf16 %v2067, %v2067
  %v2128 = vpack.c.bf16 %v2069, %v2069
  %v2129 = vpack.c.bf16 %v2071, %v2071
  %v2130 = vpack.c.bf16 %v2119, %v2119
  %v2131 = vpack.c.bf16 %v2121, %v2121
  %v2132 = vpack.c.bf16 %v2123, %v2123
  %v2133 = vpack.c.bf16 %v2125, %v2125
  %2134 = vrot.lane.b32.xlu0 %v1882, 96
  %v2135 = vpop.permute.xlu0 %2134
  %2136 = vrot.lane.b32.xlu0 %v1884, 96
  %v2137 = vpop.permute.xlu0 %2136
  %2138 = vrot.lane.b32.xlu0 %v1889, 96
  %v2139 = vpop.permute.xlu0 %2138
  %2140 = vrot.lane.b32.xlu0 %v1891, 96
  %v2141 = vpop.permute.xlu0 %2140
  %2142 = vrot.lane.b32.xlu0 %v1895, 96
  %v2143 = vpop.permute.xlu0 %2142
  %2144 = vrot.lane.b32.xlu0 %v1897, 96
  %v2145 = vpop.permute.xlu0 %2144
  %2146 = vrot.lane.b32.xlu0 %v1901, 96
  %v2147 = vpop.permute.xlu0 %2146
  %2148 = vrot.lane.b32.xlu0 %v1903, 96
  %v2149 = vpop.permute.xlu0 %2148
  %v2158 = vrot.slane %v2143, 4
  %v2159 = vsel %vm193, %v2158, %v2135
  %v2160 = vrot.slane %v2135, 4
  %v2161 = vsel %vm193, %v2143, %v2160
  %v2163 = vunpack.c.l.s4 1983009808
  %v2164 = vunpack.c.0.s8 %v2163
  %v2165 = vperm.slane %v2159, %v2164
  %v2167 = vunpack.c.l.s4 1983009808
  %v2168 = vunpack.c.0.s8 %v2167
  %v2169 = vperm.slane %v2161, %v2168
  %v2170 = vrot.slane %v2147, 4
  %v2171 = vsel %vm193, %v2170, %v2139
  %v2172 = vrot.slane %v2139, 4
  %v2173 = vsel %vm193, %v2147, %v2172
  %v2175 = vunpack.c.l.s4 1983009808
  %v2176 = vunpack.c.0.s8 %v2175
  %v2177 = vperm.slane %v2171, %v2176
  %v2179 = vunpack.c.l.s4 1983009808
  %v2180 = vunpack.c.0.s8 %v2179
  %v2181 = vperm.slane %v2173, %v2180
  %v2182 = vrot.slane %v2177, 4
  %v2183 = vsel %vm193, %v2182, %v2165
  %v2184 = vrot.slane %v2165, 4
  %v2185 = vsel %vm193, %v2177, %v2184
  %v2187 = vunpack.c.l.s4 1934713408
  %v2188 = vunpack.c.0.s8 %v2187
  %v2189 = vperm.slane %v2183, %v2188
  %v2191 = vunpack.c.l.s4 1934713408
  %v2192 = vunpack.c.0.s8 %v2191
  %v2193 = vperm.slane %v2185, %v2192
  %v2194 = vrot.slane %v2181, 4
  %v2195 = vsel %vm193, %v2194, %v2169
  %v2196 = vrot.slane %v2169, 4
  %v2197 = vsel %vm193, %v2181, %v2196
  %v2199 = vunpack.c.l.s4 1934713408
  %v2200 = vunpack.c.0.s8 %v2199
  %v2201 = vperm.slane %v2195, %v2200
  %v2203 = vunpack.c.l.s4 1934713408
  %v2204 = vunpack.c.0.s8 %v2203
  %v2205 = vperm.slane %v2197, %v2204
  %v2206 = vrot.slane %v2189, 4
  %v2207 = vsel %vm193, 0.0, %v2206
  %v2208 = vrot.slane %v2193, 4
  %v2209 = vsel %vm193, 0.0, %v2208
  %v2210 = vrot.slane %v2201, 4
  %v2211 = vsel %vm193, 0.0, %v2210
  %v2212 = vrot.slane %v2205, 4
  %v2213 = vsel %vm193, 0.0, %v2212
  %v2214 = vrot.slane %v2145, 4
  %v2215 = vsel %vm193, %v2214, %v2137
  %v2216 = vrot.slane %v2137, 4
  %v2217 = vsel %vm193, %v2145, %v2216
  %v2219 = vunpack.c.l.s4 1983009808
  %v2220 = vunpack.c.0.s8 %v2219
  %v2221 = vperm.slane %v2215, %v2220
  %v2223 = vunpack.c.l.s4 1983009808
  %v2224 = vunpack.c.0.s8 %v2223
  %v2225 = vperm.slane %v2217, %v2224
  %v2226 = vrot.slane %v2149, 4
  %v2227 = vsel %vm193, %v2226, %v2141
  %v2228 = vrot.slane %v2141, 4
  %v2229 = vsel %vm193, %v2149, %v2228
  %v2231 = vunpack.c.l.s4 1983009808
  %v2232 = vunpack.c.0.s8 %v2231
  %v2233 = vperm.slane %v2227, %v2232
  %v2235 = vunpack.c.l.s4 1983009808
  %v2236 = vunpack.c.0.s8 %v2235
  %v2237 = vperm.slane %v2229, %v2236
  %v2238 = vrot.slane %v2233, 4
  %v2239 = vsel %vm193, %v2238, %v2221
  %v2240 = vrot.slane %v2221, 4
  %v2241 = vsel %vm193, %v2233, %v2240
  %v2243 = vunpack.c.l.s4 1934713408
  %v2244 = vunpack.c.0.s8 %v2243
  %v2245 = vperm.slane %v2239, %v2244
  %v2247 = vunpack.c.l.s4 1934713408
  %v2248 = vunpack.c.0.s8 %v2247
  %v2249 = vperm.slane %v2241, %v2248
  %v2250 = vrot.slane %v2237, 4
  %v2251 = vsel %vm193, %v2250, %v2225
  %v2252 = vrot.slane %v2225, 4
  %v2253 = vsel %vm193, %v2237, %v2252
  %v2255 = vunpack.c.l.s4 1934713408
  %v2256 = vunpack.c.0.s8 %v2255
  %v2257 = vperm.slane %v2251, %v2256
  %v2259 = vunpack.c.l.s4 1934713408
  %v2260 = vunpack.c.0.s8 %v2259
  %v2261 = vperm.slane %v2253, %v2260
  %v2262 = vrot.slane %v2245, 4
  %v2263 = vsel %vm193, 0.0, %v2262
  %v2264 = vrot.slane %v2249, 4
  %v2265 = vsel %vm193, 0.0, %v2264
  %v2266 = vrot.slane %v2257, 4
  %v2267 = vsel %vm193, 0.0, %v2266
  %v2268 = vrot.slane %v2261, 4
  %v2269 = vsel %vm193, 0.0, %v2268
  %v2270 = vsel %vm193, %v2208, %v2189
  %v2272 = vunpack.c.l.s4 1983009808
  %v2273 = vunpack.c.0.s8 %v2272
  %v2274 = vperm.slane %v2270, %v2273
  %v2275 = vrot.slane %v2209, 4
  %v2276 = vsel %vm193, %v2275, %v2207
  %v2278 = vunpack.c.l.s4 1983009808
  %v2279 = vunpack.c.0.s8 %v2278
  %v2280 = vperm.slane %v2276, %v2279
  %v2281 = vsel %vm193, %v2212, %v2201
  %v2283 = vunpack.c.l.s4 1983009808
  %v2284 = vunpack.c.0.s8 %v2283
  %v2285 = vperm.slane %v2281, %v2284
  %v2286 = vrot.slane %v2213, 4
  %v2287 = vsel %vm193, %v2286, %v2211
  %v2289 = vunpack.c.l.s4 1983009808
  %v2290 = vunpack.c.0.s8 %v2289
  %v2291 = vperm.slane %v2287, %v2290
  %v2292 = vrot.slane %v2280, 4
  %v2293 = vsel %vm193, %v2292, %v2274
  %v2294 = vrot.slane %v2274, 4
  %v2295 = vsel %vm193, %v2280, %v2294
  %v2297 = vunpack.c.l.s4 1934713408
  %v2298 = vunpack.c.0.s8 %v2297
  %v2299 = vperm.slane %v2293, %v2298
  %v2301 = vunpack.c.l.s4 1934713408
  %v2302 = vunpack.c.0.s8 %v2301
  %v2303 = vperm.slane %v2295, %v2302
  %v2304 = vrot.slane %v2291, 4
  %v2305 = vsel %vm193, %v2304, %v2285
  %v2306 = vrot.slane %v2285, 4
  %v2307 = vsel %vm193, %v2291, %v2306
  %v2309 = vunpack.c.l.s4 1934713408
  %v2310 = vunpack.c.0.s8 %v2309
  %v2311 = vperm.slane %v2305, %v2310
  %v2313 = vunpack.c.l.s4 1934713408
  %v2314 = vunpack.c.0.s8 %v2313
  %v2315 = vperm.slane %v2307, %v2314
  %v2316 = vrot.slane %v2311, 4
  %v2317 = vsel %vm193, %v2316, %v2299
  %v2318 = vrot.slane %v2299, 4
  %v2319 = vsel %vm193, %v2311, %v2318
  %v2320 = vrot.slane %v2315, 4
  %v2321 = vsel %vm193, %v2320, %v2303
  %v2322 = vrot.slane %v2303, 4
  %v2323 = vsel %vm193, %v2315, %v2322
  %v2324 = vsel %vm193, %v2264, %v2245
  %v2326 = vunpack.c.l.s4 1983009808
  %v2327 = vunpack.c.0.s8 %v2326
  %v2328 = vperm.slane %v2324, %v2327
  %v2329 = vrot.slane %v2265, 4
  %v2330 = vsel %vm193, %v2329, %v2263
  %v2332 = vunpack.c.l.s4 1983009808
  %v2333 = vunpack.c.0.s8 %v2332
  %v2334 = vperm.slane %v2330, %v2333
  %v2335 = vsel %vm193, %v2268, %v2257
  %v2337 = vunpack.c.l.s4 1983009808
  %v2338 = vunpack.c.0.s8 %v2337
  %v2339 = vperm.slane %v2335, %v2338
  %v2340 = vrot.slane %v2269, 4
  %v2341 = vsel %vm193, %v2340, %v2267
  %v2343 = vunpack.c.l.s4 1983009808
  %v2344 = vunpack.c.0.s8 %v2343
  %v2345 = vperm.slane %v2341, %v2344
  %v2346 = vrot.slane %v2334, 4
  %v2347 = vsel %vm193, %v2346, %v2328
  %v2348 = vrot.slane %v2328, 4
  %v2349 = vsel %vm193, %v2334, %v2348
  %v2351 = vunpack.c.l.s4 1934713408
  %v2352 = vunpack.c.0.s8 %v2351
  %v2353 = vperm.slane %v2347, %v2352
  %v2355 = vunpack.c.l.s4 1934713408
  %v2356 = vunpack.c.0.s8 %v2355
  %v2357 = vperm.slane %v2349, %v2356
  %v2358 = vrot.slane %v2345, 4
  %v2359 = vsel %vm193, %v2358, %v2339
  %v2360 = vrot.slane %v2339, 4
  %v2361 = vsel %vm193, %v2345, %v2360
  %v2363 = vunpack.c.l.s4 1934713408
  %v2364 = vunpack.c.0.s8 %v2363
  %v2365 = vperm.slane %v2359, %v2364
  %v2367 = vunpack.c.l.s4 1934713408
  %v2368 = vunpack.c.0.s8 %v2367
  %v2369 = vperm.slane %v2361, %v2368
  %v2370 = vrot.slane %v2365, 4
  %v2371 = vsel %vm193, %v2370, %v2353
  %v2372 = vrot.slane %v2353, 4
  %v2373 = vsel %vm193, %v2365, %v2372
  %v2374 = vrot.slane %v2369, 4
  %v2375 = vsel %vm193, %v2374, %v2357
  %v2376 = vrot.slane %v2357, 4
  %v2377 = vsel %vm193, %v2369, %v2376
  %v2378 = vpack.c.bf16 %v2317, %v2317
  %v2379 = vpack.c.bf16 %v2319, %v2319
  %v2380 = vpack.c.bf16 %v2321, %v2321
  %v2381 = vpack.c.bf16 %v2323, %v2323
  %v2382 = vpack.c.bf16 %v2371, %v2371
  %v2383 = vpack.c.bf16 %v2373, %v2373
  %v2384 = vpack.c.bf16 %v2375, %v2375
  %v2385 = vpack.c.bf16 %v2377, %v2377
  %2386 = vrot.lane.b32.xlu0 %v1882, 64
  %v2387 = vpop.permute.xlu0 %2386
  %2388 = vrot.lane.b32.xlu0 %v1884, 64
  %v2389 = vpop.permute.xlu0 %2388
  %2390 = vrot.lane.b32.xlu0 %v1889, 64
  %v2391 = vpop.permute.xlu0 %2390
  %2392 = vrot.lane.b32.xlu0 %v1891, 64
  %v2393 = vpop.permute.xlu0 %2392
  %2394 = vrot.lane.b32.xlu0 %v1895, 64
  %v2395 = vpop.permute.xlu0 %2394
  %2396 = vrot.lane.b32.xlu0 %v1897, 64
  %v2397 = vpop.permute.xlu0 %2396
  %2398 = vrot.lane.b32.xlu0 %v1901, 64
  %v2399 = vpop.permute.xlu0 %2398
  %2400 = vrot.lane.b32.xlu0 %v1903, 64
  %v2401 = vpop.permute.xlu0 %2400
  %v2410 = vrot.slane %v2395, 4
  %v2411 = vsel %vm193, %v2410, %v2387
  %v2412 = vrot.slane %v2387, 4
  %v2413 = vsel %vm193, %v2395, %v2412
  %v2415 = vunpack.c.l.s4 1983009808
  %v2416 = vunpack.c.0.s8 %v2415
  %v2417 = vperm.slane %v2411, %v2416
  %v2419 = vunpack.c.l.s4 1983009808
  %v2420 = vunpack.c.0.s8 %v2419
  %v2421 = vperm.slane %v2413, %v2420
  %v2422 = vrot.slane %v2399, 4
  %v2423 = vsel %vm193, %v2422, %v2391
  %v2424 = vrot.slane %v2391, 4
  %v2425 = vsel %vm193, %v2399, %v2424
  %v2427 = vunpack.c.l.s4 1983009808
  %v2428 = vunpack.c.0.s8 %v2427
  %v2429 = vperm.slane %v2423, %v2428
  %v2431 = vunpack.c.l.s4 1983009808
  %v2432 = vunpack.c.0.s8 %v2431
  %v2433 = vperm.slane %v2425, %v2432
  %v2434 = vrot.slane %v2429, 4
  %v2435 = vsel %vm193, %v2434, %v2417
  %v2436 = vrot.slane %v2417, 4
  %v2437 = vsel %vm193, %v2429, %v2436
  %v2439 = vunpack.c.l.s4 1934713408
  %v2440 = vunpack.c.0.s8 %v2439
  %v2441 = vperm.slane %v2435, %v2440
  %v2443 = vunpack.c.l.s4 1934713408
  %v2444 = vunpack.c.0.s8 %v2443
  %v2445 = vperm.slane %v2437, %v2444
  %v2446 = vrot.slane %v2433, 4
  %v2447 = vsel %vm193, %v2446, %v2421
  %v2448 = vrot.slane %v2421, 4
  %v2449 = vsel %vm193, %v2433, %v2448
  %v2451 = vunpack.c.l.s4 1934713408
  %v2452 = vunpack.c.0.s8 %v2451
  %v2453 = vperm.slane %v2447, %v2452
  %v2455 = vunpack.c.l.s4 1934713408
  %v2456 = vunpack.c.0.s8 %v2455
  %v2457 = vperm.slane %v2449, %v2456
  %v2458 = vrot.slane %v2441, 4
  %v2459 = vsel %vm193, 0.0, %v2458
  %v2460 = vrot.slane %v2445, 4
  %v2461 = vsel %vm193, 0.0, %v2460
  %v2462 = vrot.slane %v2453, 4
  %v2463 = vsel %vm193, 0.0, %v2462
  %v2464 = vrot.slane %v2457, 4
  %v2465 = vsel %vm193, 0.0, %v2464
  %v2466 = vrot.slane %v2397, 4
  %v2467 = vsel %vm193, %v2466, %v2389
  %v2468 = vrot.slane %v2389, 4
  %v2469 = vsel %vm193, %v2397, %v2468
  %v2471 = vunpack.c.l.s4 1983009808
  %v2472 = vunpack.c.0.s8 %v2471
  %v2473 = vperm.slane %v2467, %v2472
  %v2475 = vunpack.c.l.s4 1983009808
  %v2476 = vunpack.c.0.s8 %v2475
  %v2477 = vperm.slane %v2469, %v2476
  %v2478 = vrot.slane %v2401, 4
  %v2479 = vsel %vm193, %v2478, %v2393
  %v2480 = vrot.slane %v2393, 4
  %v2481 = vsel %vm193, %v2401, %v2480
  %v2483 = vunpack.c.l.s4 1983009808
  %v2484 = vunpack.c.0.s8 %v2483
  %v2485 = vperm.slane %v2479, %v2484
  %v2487 = vunpack.c.l.s4 1983009808
  %v2488 = vunpack.c.0.s8 %v2487
  %v2489 = vperm.slane %v2481, %v2488
  %v2490 = vrot.slane %v2485, 4
  %v2491 = vsel %vm193, %v2490, %v2473
  %v2492 = vrot.slane %v2473, 4
  %v2493 = vsel %vm193, %v2485, %v2492
  %v2495 = vunpack.c.l.s4 1934713408
  %v2496 = vunpack.c.0.s8 %v2495
  %v2497 = vperm.slane %v2491, %v2496
  %v2499 = vunpack.c.l.s4 1934713408
  %v2500 = vunpack.c.0.s8 %v2499
  %v2501 = vperm.slane %v2493, %v2500
  %v2502 = vrot.slane %v2489, 4
  %v2503 = vsel %vm193, %v2502, %v2477
  %v2504 = vrot.slane %v2477, 4
  %v2505 = vsel %vm193, %v2489, %v2504
  %v2507 = vunpack.c.l.s4 1934713408
  %v2508 = vunpack.c.0.s8 %v2507
  %v2509 = vperm.slane %v2503, %v2508
  %v2511 = vunpack.c.l.s4 1934713408
  %v2512 = vunpack.c.0.s8 %v2511
  %v2513 = vperm.slane %v2505, %v2512
  %v2514 = vrot.slane %v2497, 4
  %v2515 = vsel %vm193, 0.0, %v2514
  %v2516 = vrot.slane %v2501, 4
  %v2517 = vsel %vm193, 0.0, %v2516
  %v2518 = vrot.slane %v2509, 4
  %v2519 = vsel %vm193, 0.0, %v2518
  %v2520 = vrot.slane %v2513, 4
  %v2521 = vsel %vm193, 0.0, %v2520
  %v2522 = vsel %vm193, %v2460, %v2441
  %v2524 = vunpack.c.l.s4 1983009808
  %v2525 = vunpack.c.0.s8 %v2524
  %v2526 = vperm.slane %v2522, %v2525
  %v2527 = vrot.slane %v2461, 4
  %v2528 = vsel %vm193, %v2527, %v2459
  %v2530 = vunpack.c.l.s4 1983009808
  %v2531 = vunpack.c.0.s8 %v2530
  %v2532 = vperm.slane %v2528, %v2531
  %v2533 = vsel %vm193, %v2464, %v2453
  %v2535 = vunpack.c.l.s4 1983009808
  %v2536 = vunpack.c.0.s8 %v2535
  %v2537 = vperm.slane %v2533, %v2536
  %v2538 = vrot.slane %v2465, 4
  %v2539 = vsel %vm193, %v2538, %v2463
  %v2541 = vunpack.c.l.s4 1983009808
  %v2542 = vunpack.c.0.s8 %v2541
  %v2543 = vperm.slane %v2539, %v2542
  %v2544 = vrot.slane %v2532, 4
  %v2545 = vsel %vm193, %v2544, %v2526
  %v2546 = vrot.slane %v2526, 4
  %v2547 = vsel %vm193, %v2532, %v2546
  %v2549 = vunpack.c.l.s4 1934713408
  %v2550 = vunpack.c.0.s8 %v2549
  %v2551 = vperm.slane %v2545, %v2550
  %v2553 = vunpack.c.l.s4 1934713408
  %v2554 = vunpack.c.0.s8 %v2553
  %v2555 = vperm.slane %v2547, %v2554
  %v2556 = vrot.slane %v2543, 4
  %v2557 = vsel %vm193, %v2556, %v2537
  %v2558 = vrot.slane %v2537, 4
  %v2559 = vsel %vm193, %v2543, %v2558
  %v2561 = vunpack.c.l.s4 1934713408
  %v2562 = vunpack.c.0.s8 %v2561
  %v2563 = vperm.slane %v2557, %v2562
  %v2565 = vunpack.c.l.s4 1934713408
  %v2566 = vunpack.c.0.s8 %v2565
  %v2567 = vperm.slane %v2559, %v2566
  %v2568 = vrot.slane %v2563, 4
  %v2569 = vsel %vm193, %v2568, %v2551
  %v2570 = vrot.slane %v2551, 4
  %v2571 = vsel %vm193, %v2563, %v2570
  %v2572 = vrot.slane %v2567, 4
  %v2573 = vsel %vm193, %v2572, %v2555
  %v2574 = vrot.slane %v2555, 4
  %v2575 = vsel %vm193, %v2567, %v2574
  %v2576 = vsel %vm193, %v2516, %v2497
  %v2578 = vunpack.c.l.s4 1983009808
  %v2579 = vunpack.c.0.s8 %v2578
  %v2580 = vperm.slane %v2576, %v2579
  %v2581 = vrot.slane %v2517, 4
  %v2582 = vsel %vm193, %v2581, %v2515
  %v2584 = vunpack.c.l.s4 1983009808
  %v2585 = vunpack.c.0.s8 %v2584
  %v2586 = vperm.slane %v2582, %v2585
  %v2587 = vsel %vm193, %v2520, %v2509
  %v2589 = vunpack.c.l.s4 1983009808
  %v2590 = vunpack.c.0.s8 %v2589
  %v2591 = vperm.slane %v2587, %v2590
  %v2592 = vrot.slane %v2521, 4
  %v2593 = vsel %vm193, %v2592, %v2519
  %v2595 = vunpack.c.l.s4 1983009808
  %v2596 = vunpack.c.0.s8 %v2595
  %v2597 = vperm.slane %v2593, %v2596
  %v2598 = vrot.slane %v2586, 4
  %v2599 = vsel %vm193, %v2598, %v2580
  %v2600 = vrot.slane %v2580, 4
  %v2601 = vsel %vm193, %v2586, %v2600
  %v2603 = vunpack.c.l.s4 1934713408
  %v2604 = vunpack.c.0.s8 %v2603
  %v2605 = vperm.slane %v2599, %v2604
  %v2607 = vunpack.c.l.s4 1934713408
  %v2608 = vunpack.c.0.s8 %v2607
  %v2609 = vperm.slane %v2601, %v2608
  %v2610 = vrot.slane %v2597, 4
  %v2611 = vsel %vm193, %v2610, %v2591
  %v2612 = vrot.slane %v2591, 4
  %v2613 = vsel %vm193, %v2597, %v2612
  %v2615 = vunpack.c.l.s4 1934713408
  %v2616 = vunpack.c.0.s8 %v2615
  %v2617 = vperm.slane %v2611, %v2616
  %v2619 = vunpack.c.l.s4 1934713408
  %v2620 = vunpack.c.0.s8 %v2619
  %v2621 = vperm.slane %v2613, %v2620
  %v2622 = vrot.slane %v2617, 4
  %v2623 = vsel %vm193, %v2622, %v2605
  %v2624 = vrot.slane %v2605, 4
  %v2625 = vsel %vm193, %v2617, %v2624
  %v2626 = vrot.slane %v2621, 4
  %v2627 = vsel %vm193, %v2626, %v2609
  %v2628 = vrot.slane %v2609, 4
  %v2629 = vsel %vm193, %v2621, %v2628
  %v2630 = vpack.c.bf16 %v2569, %v2569
  %v2631 = vpack.c.bf16 %v2571, %v2571
  %v2632 = vpack.c.bf16 %v2573, %v2573
  %v2633 = vpack.c.bf16 %v2575, %v2575
  %v2634 = vpack.c.bf16 %v2623, %v2623
  %v2635 = vpack.c.bf16 %v2625, %v2625
  %v2636 = vpack.c.bf16 %v2627, %v2627
  %v2637 = vpack.c.bf16 %v2629, %v2629
  %v2639 = vsel %vm925, %v2126, 0
  %v2642 = vsel %vm925, %v2378, 0
  %2644 = vmatpush.bf16.xpose.msra.mxu0 0
  %2645 = vmatpush.bf16.xpose.msra.mxu0 0
  %2646 = vmatpush.bf16.xpose.msra.mxu0 0
  %2647 = vmatpush.bf16.xpose.msra.mxu0 0
  %2648 = vmatpush.bf16.xpose.msra.mxu0 0
  %2649 = vmatpush.bf16.xpose.msra.mxu0 0
  %2650 = vmatpush.bf16.xpose.msra.mxu0 0
  %2651 = vmatpush.bf16.xpose.msra.mxu0 %v2642
  %2652 = vmatmul.bf16.gmra.mxu0 %v2639
  %v2653 = vpop.f32.mrf.mxu0
  %v2654 = vadd.f32 %v64, %v2653
  %v2655 = vpop.f32.mrf.mxu0
  %2656 = vdwg.mxu0
  %v2658 = vsel %vm925, %v2127, 0
  %v2661 = vsel %vm925, %v2379, 0
  %2663 = vmatpush.bf16.xpose.msra.mxu0 0
  %2664 = vmatpush.bf16.xpose.msra.mxu0 0
  %2665 = vmatpush.bf16.xpose.msra.mxu0 0
  %2666 = vmatpush.bf16.xpose.msra.mxu0 0
  %2667 = vmatpush.bf16.xpose.msra.mxu0 0
  %2668 = vmatpush.bf16.xpose.msra.mxu0 0
  %2669 = vmatpush.bf16.xpose.msra.mxu0 0
  %2670 = vmatpush.bf16.xpose.msra.mxu0 %v2661
  %2671 = vmatmul.bf16.gmra.mxu0 %v2658
  %v2672 = vpop.f32.mrf.mxu0
  %v2673 = vadd.f32 %v64, %v2672
  %v2674 = vpop.f32.mrf.mxu0
  %2675 = vdwg.mxu0
  %v2677 = vsel %vm925, %v2128, 0
  %v2680 = vsel %vm925, %v2380, 0
  %2682 = vmatpush.bf16.xpose.msra.mxu0 0
  %2683 = vmatpush.bf16.xpose.msra.mxu0 0
  %2684 = vmatpush.bf16.xpose.msra.mxu0 0
  %2685 = vmatpush.bf16.xpose.msra.mxu0 0
  %2686 = vmatpush.bf16.xpose.msra.mxu0 0
  %2687 = vmatpush.bf16.xpose.msra.mxu0 0
  %2688 = vmatpush.bf16.xpose.msra.mxu0 0
  %2689 = vmatpush.bf16.xpose.msra.mxu0 %v2680
  %2690 = vmatmul.bf16.gmra.mxu0 %v2677
  %v2691 = vpop.f32.mrf.mxu0
  %v2692 = vadd.f32 %v64, %v2691
  %v2693 = vpop.f32.mrf.mxu0
  %2694 = vdwg.mxu0
  %v2696 = vsel %vm925, %v2129, 0
  %v2699 = vsel %vm925, %v2381, 0
  %2701 = vmatpush.bf16.xpose.msra.mxu0 0
  %2702 = vmatpush.bf16.xpose.msra.mxu0 0
  %2703 = vmatpush.bf16.xpose.msra.mxu0 0
  %2704 = vmatpush.bf16.xpose.msra.mxu0 0
  %2705 = vmatpush.bf16.xpose.msra.mxu0 0
  %2706 = vmatpush.bf16.xpose.msra.mxu0 0
  %2707 = vmatpush.bf16.xpose.msra.mxu0 0
  %2708 = vmatpush.bf16.xpose.msra.mxu0 %v2699
  %2709 = vmatmul.bf16.gmra.mxu0 %v2696
  %v2710 = vpop.f32.mrf.mxu0
  %v2711 = vadd.f32 %v64, %v2710
  %v2712 = vpop.f32.mrf.mxu0
  %2713 = vdwg.mxu0
  %v2715 = vsel %vm925, %v2130, 0
  %v2718 = vsel %vm925, %v2382, 0
  %2720 = vmatpush.bf16.xpose.msra.mxu0 0
  %2721 = vmatpush.bf16.xpose.msra.mxu0 0
  %2722 = vmatpush.bf16.xpose.msra.mxu0 0
  %2723 = vmatpush.bf16.xpose.msra.mxu0 0
  %2724 = vmatpush.bf16.xpose.msra.mxu0 0
  %2725 = vmatpush.bf16.xpose.msra.mxu0 0
  %2726 = vmatpush.bf16.xpose.msra.mxu0 0
  %2727 = vmatpush.bf16.xpose.msra.mxu0 %v2718
  %2728 = vmatmul.bf16.gmra.mxu0 %v2715
  %v2729 = vpop.f32.mrf.mxu0
  %v2730 = vadd.f32 %v65, %v2729
  %v2731 = vpop.f32.mrf.mxu0
  %2732 = vdwg.mxu0
  %v2734 = vsel %vm925, %v2131, 0
  %v2737 = vsel %vm925, %v2383, 0
  %2739 = vmatpush.bf16.xpose.msra.mxu0 0
  %2740 = vmatpush.bf16.xpose.msra.mxu0 0
  %2741 = vmatpush.bf16.xpose.msra.mxu0 0
  %2742 = vmatpush.bf16.xpose.msra.mxu0 0
  %2743 = vmatpush.bf16.xpose.msra.mxu0 0
  %2744 = vmatpush.bf16.xpose.msra.mxu0 0
  %2745 = vmatpush.bf16.xpose.msra.mxu0 0
  %2746 = vmatpush.bf16.xpose.msra.mxu0 %v2737
  %2747 = vmatmul.bf16.gmra.mxu0 %v2734
  %v2748 = vpop.f32.mrf.mxu0
  %v2749 = vadd.f32 %v65, %v2748
  %v2750 = vpop.f32.mrf.mxu0
  %2751 = vdwg.mxu0
  %v2753 = vsel %vm925, %v2132, 0
  %v2756 = vsel %vm925, %v2384, 0
  %2758 = vmatpush.bf16.xpose.msra.mxu0 0
  %2759 = vmatpush.bf16.xpose.msra.mxu0 0
  %2760 = vmatpush.bf16.xpose.msra.mxu0 0
  %2761 = vmatpush.bf16.xpose.msra.mxu0 0
  %2762 = vmatpush.bf16.xpose.msra.mxu0 0
  %2763 = vmatpush.bf16.xpose.msra.mxu0 0
  %2764 = vmatpush.bf16.xpose.msra.mxu0 0
  %2765 = vmatpush.bf16.xpose.msra.mxu0 %v2756
  %2766 = vmatmul.bf16.gmra.mxu0 %v2753
  %v2767 = vpop.f32.mrf.mxu0
  %v2768 = vadd.f32 %v65, %v2767
  %v2769 = vpop.f32.mrf.mxu0
  %2770 = vdwg.mxu0
  %v2772 = vsel %vm925, %v2133, 0
  %v2775 = vsel %vm925, %v2385, 0
  %2777 = vmatpush.bf16.xpose.msra.mxu0 0
  %2778 = vmatpush.bf16.xpose.msra.mxu0 0
  %2779 = vmatpush.bf16.xpose.msra.mxu0 0
  %2780 = vmatpush.bf16.xpose.msra.mxu0 0
  %2781 = vmatpush.bf16.xpose.msra.mxu0 0
  %2782 = vmatpush.bf16.xpose.msra.mxu0 0
  %2783 = vmatpush.bf16.xpose.msra.mxu0 0
  %2784 = vmatpush.bf16.xpose.msra.mxu0 %v2775
  %2785 = vmatmul.bf16.gmra.mxu0 %v2772
  %v2786 = vpop.f32.mrf.mxu0
  %v2787 = vadd.f32 %v65, %v2786
  %v2788 = vpop.f32.mrf.mxu0
  %2789 = vdwg.mxu0
  %v2790 = vsel %vm925, %v2654, -inf
  %2791 = vmax.xlane.f32.xlu0 %v2790
  %v2792 = vpop.xlane.xlu0 %2791
  %v2793 = vsel %vm925, %v2673, -inf
  %2794 = vmax.xlane.f32.xlu0 %v2793
  %v2795 = vpop.xlane.xlu0 %2794
  %v2796 = vsel %vm925, %v2692, -inf
  %2797 = vmax.xlane.f32.xlu0 %v2796
  %v2798 = vpop.xlane.xlu0 %2797
  %v2799 = vsel %vm925, %v2711, -inf
  %2800 = vmax.xlane.f32.xlu0 %v2799
  %v2801 = vpop.xlane.xlu0 %2800
  %v2802 = vsel %vm925, %v2730, -inf
  %2803 = vmax.xlane.f32.xlu0 %v2802
  %v2804 = vpop.xlane.xlu0 %2803
  %v2805 = vsel %vm925, %v2749, -inf
  %2806 = vmax.xlane.f32.xlu0 %v2805
  %v2807 = vpop.xlane.xlu0 %2806
  %v2808 = vsel %vm925, %v2768, -inf
  %2809 = vmax.xlane.f32.xlu0 %v2808
  %v2810 = vpop.xlane.xlu0 %2809
  %v2811 = vsel %vm925, %v2787, -inf
  %2812 = vmax.xlane.f32.xlu0 %v2811
  %v2813 = vpop.xlane.xlu0 %2812
  %v2814 = vsub.f32 %v2654, %v2792
  %v2815 = vsub.f32 %v2673, %v2795
  %v2816 = vsub.f32 %v2692, %v2798
  %v2817 = vsub.f32 %v2711, %v2801
  %v2818 = vsub.f32 %v2730, %v2804
  %v2819 = vsub.f32 %v2749, %v2807
  %v2820 = vsub.f32 %v2768, %v2810
  %v2821 = vsub.f32 %v2787, %v2813
  %v2822 = vmul.f32 %v2814, 1.442695
  %v2823 = vpow.pop %v2822
  %v2824 = vmul.f32 %v2815, 1.442695
  %v2825 = vpow.pop %v2824
  %v2826 = vmul.f32 %v2816, 1.442695
  %v2827 = vpow.pop %v2826
  %v2828 = vmul.f32 %v2817, 1.442695
  %v2829 = vpow.pop %v2828
  %v2830 = vmul.f32 %v2818, 1.442695
  %v2831 = vpow.pop %v2830
  %v2832 = vmul.f32 %v2819, 1.442695
  %v2833 = vpow.pop %v2832
  %v2834 = vmul.f32 %v2820, 1.442695
  %v2835 = vpow.pop %v2834
  %v2836 = vmul.f32 %v2821, 1.442695
  %v2837 = vpow.pop %v2836
  %v2838 = vsel %vm925, %v2823, 0.0
  %2839 = vadd.xlane.f32.xlu0 %v2838
  %v2840 = vpop.xlane.xlu0 %2839
  %v2841 = vsel %vm925, %v2825, 0.0
  %2842 = vadd.xlane.f32.xlu0 %v2841
  %v2843 = vpop.xlane.xlu0 %2842
  %v2844 = vsel %vm925, %v2827, 0.0
  %2845 = vadd.xlane.f32.xlu0 %v2844
  %v2846 = vpop.xlane.xlu0 %2845
  %v2847 = vsel %vm925, %v2829, 0.0
  %2848 = vadd.xlane.f32.xlu0 %v2847
  %v2849 = vpop.xlane.xlu0 %2848
  %v2850 = vsel %vm925, %v2831, 0.0
  %2851 = vadd.xlane.f32.xlu0 %v2850
  %v2852 = vpop.xlane.xlu0 %2851
  %v2853 = vsel %vm925, %v2833, 0.0
  %2854 = vadd.xlane.f32.xlu0 %v2853
  %v2855 = vpop.xlane.xlu0 %2854
  %v2856 = vsel %vm925, %v2835, 0.0
  %2857 = vadd.xlane.f32.xlu0 %v2856
  %v2858 = vpop.xlane.xlu0 %2857
  %v2859 = vsel %vm925, %v2837, 0.0
  %2860 = vadd.xlane.f32.xlu0 %v2859
  %v2861 = vpop.xlane.xlu0 %2860
  %v2862 = vrcp.pop %v2840
  %v2863 = vrcp.pop %v2843
  %v2864 = vrcp.pop %v2846
  %v2865 = vrcp.pop %v2849
  %v2866 = vrcp.pop %v2852
  %v2867 = vrcp.pop %v2855
  %v2868 = vrcp.pop %v2858
  %v2869 = vrcp.pop %v2861
  %v2870 = vmul.f32 %v2823, %v2862
  %v2871 = vmul.f32 %v2825, %v2863
  %v2872 = vmul.f32 %v2827, %v2864
  %v2873 = vmul.f32 %v2829, %v2865
  %v2874 = vmul.f32 %v2831, %v2866
  %v2875 = vmul.f32 %v2833, %v2867
  %v2876 = vmul.f32 %v2835, %v2868
  %v2877 = vmul.f32 %v2837, %v2869
  %v2878 = vpack.c.bf16 %v2870, %v2870
  %v2879 = vpack.c.bf16 %v2871, %v2871
  %v2880 = vpack.c.bf16 %v2872, %v2872
  %v2881 = vpack.c.bf16 %v2873, %v2873
  %v2882 = vpack.c.bf16 %v2874, %v2874
  %v2883 = vpack.c.bf16 %v2875, %v2875
  %v2884 = vpack.c.bf16 %v2876, %v2876
  %v2885 = vpack.c.bf16 %v2877, %v2877
  %v2887 = vsel %vm925, %v2878, 0
  %v2890 = vsel %vm1177, %v2630, 0
  %2892 = vmatpush.bf16.msra.mxu0 0
  %2893 = vmatpush.bf16.msra.mxu0 0
  %2894 = vmatpush.bf16.msra.mxu0 0
  %2895 = vmatpush.bf16.msra.mxu0 0
  %2896 = vmatpush.bf16.msra.mxu0 0
  %2897 = vmatpush.bf16.msra.mxu0 0
  %2898 = vmatpush.bf16.msra.mxu0 0
  %2899 = vmatpush.bf16.msra.mxu0 %v2890
  %2900 = vmatmul.bf16.gmra.mxu0 %v2887
  %v2901 = vpop.f32.mrf.mxu0
  %v2902 = vadd.f32 0.0, %v2901
  %v2903 = vpop.f32.mrf.mxu0
  %2904 = vdwg.mxu0
  %v2906 = vsel %vm925, %v2879, 0
  %v2909 = vsel %vm1177, %v2631, 0
  %2911 = vmatpush.bf16.msra.mxu0 0
  %2912 = vmatpush.bf16.msra.mxu0 0
  %2913 = vmatpush.bf16.msra.mxu0 0
  %2914 = vmatpush.bf16.msra.mxu0 0
  %2915 = vmatpush.bf16.msra.mxu0 0
  %2916 = vmatpush.bf16.msra.mxu0 0
  %2917 = vmatpush.bf16.msra.mxu0 0
  %2918 = vmatpush.bf16.msra.mxu0 %v2909
  %2919 = vmatmul.bf16.gmra.mxu0 %v2906
  %v2920 = vpop.f32.mrf.mxu0
  %v2921 = vadd.f32 0.0, %v2920
  %v2922 = vpop.f32.mrf.mxu0
  %2923 = vdwg.mxu0
  %v2925 = vsel %vm925, %v2880, 0
  %v2928 = vsel %vm1177, %v2632, 0
  %2930 = vmatpush.bf16.msra.mxu0 0
  %2931 = vmatpush.bf16.msra.mxu0 0
  %2932 = vmatpush.bf16.msra.mxu0 0
  %2933 = vmatpush.bf16.msra.mxu0 0
  %2934 = vmatpush.bf16.msra.mxu0 0
  %2935 = vmatpush.bf16.msra.mxu0 0
  %2936 = vmatpush.bf16.msra.mxu0 0
  %2937 = vmatpush.bf16.msra.mxu0 %v2928
  %2938 = vmatmul.bf16.gmra.mxu0 %v2925
  %v2939 = vpop.f32.mrf.mxu0
  %v2940 = vadd.f32 0.0, %v2939
  %v2941 = vpop.f32.mrf.mxu0
  %2942 = vdwg.mxu0
  %v2944 = vsel %vm925, %v2881, 0
  %v2947 = vsel %vm1177, %v2633, 0
  %2949 = vmatpush.bf16.msra.mxu0 0
  %2950 = vmatpush.bf16.msra.mxu0 0
  %2951 = vmatpush.bf16.msra.mxu0 0
  %2952 = vmatpush.bf16.msra.mxu0 0
  %2953 = vmatpush.bf16.msra.mxu0 0
  %2954 = vmatpush.bf16.msra.mxu0 0
  %2955 = vmatpush.bf16.msra.mxu0 0
  %2956 = vmatpush.bf16.msra.mxu0 %v2947
  %2957 = vmatmul.bf16.gmra.mxu0 %v2944
  %v2958 = vpop.f32.mrf.mxu0
  %v2959 = vadd.f32 0.0, %v2958
  %v2960 = vpop.f32.mrf.mxu0
  %2961 = vdwg.mxu0
  %v2963 = vsel %vm925, %v2882, 0
  %v2966 = vsel %vm1177, %v2634, 0
  %2968 = vmatpush.bf16.msra.mxu0 0
  %2969 = vmatpush.bf16.msra.mxu0 0
  %2970 = vmatpush.bf16.msra.mxu0 0
  %2971 = vmatpush.bf16.msra.mxu0 0
  %2972 = vmatpush.bf16.msra.mxu0 0
  %2973 = vmatpush.bf16.msra.mxu0 0
  %2974 = vmatpush.bf16.msra.mxu0 0
  %2975 = vmatpush.bf16.msra.mxu0 %v2966
  %2976 = vmatmul.bf16.gmra.mxu0 %v2963
  %v2977 = vpop.f32.mrf.mxu0
  %v2978 = vadd.f32 0.0, %v2977
  %v2979 = vpop.f32.mrf.mxu0
  %2980 = vdwg.mxu0
  %v2982 = vsel %vm925, %v2883, 0
  %v2985 = vsel %vm1177, %v2635, 0
  %2987 = vmatpush.bf16.msra.mxu0 0
  %2988 = vmatpush.bf16.msra.mxu0 0
  %2989 = vmatpush.bf16.msra.mxu0 0
  %2990 = vmatpush.bf16.msra.mxu0 0
  %2991 = vmatpush.bf16.msra.mxu0 0
  %2992 = vmatpush.bf16.msra.mxu0 0
  %2993 = vmatpush.bf16.msra.mxu0 0
  %2994 = vmatpush.bf16.msra.mxu0 %v2985
  %2995 = vmatmul.bf16.gmra.mxu0 %v2982
  %v2996 = vpop.f32.mrf.mxu0
  %v2997 = vadd.f32 0.0, %v2996
  %v2998 = vpop.f32.mrf.mxu0
  %2999 = vdwg.mxu0
  %v3001 = vsel %vm925, %v2884, 0
  %v3004 = vsel %vm1177, %v2636, 0
  %3006 = vmatpush.bf16.msra.mxu0 0
  %3007 = vmatpush.bf16.msra.mxu0 0
  %3008 = vmatpush.bf16.msra.mxu0 0
  %3009 = vmatpush.bf16.msra.mxu0 0
  %3010 = vmatpush.bf16.msra.mxu0 0
  %3011 = vmatpush.bf16.msra.mxu0 0
  %3012 = vmatpush.bf16.msra.mxu0 0
  %3013 = vmatpush.bf16.msra.mxu0 %v3004
  %3014 = vmatmul.bf16.gmra.mxu0 %v3001
  %v3015 = vpop.f32.mrf.mxu0
  %v3016 = vadd.f32 0.0, %v3015
  %v3017 = vpop.f32.mrf.mxu0
  %3018 = vdwg.mxu0
  %v3020 = vsel %vm925, %v2885, 0
  %v3023 = vsel %vm1177, %v2637, 0
  %3025 = vmatpush.bf16.msra.mxu0 0
  %3026 = vmatpush.bf16.msra.mxu0 0
  %3027 = vmatpush.bf16.msra.mxu0 0
  %3028 = vmatpush.bf16.msra.mxu0 0
  %3029 = vmatpush.bf16.msra.mxu0 0
  %3030 = vmatpush.bf16.msra.mxu0 0
  %3031 = vmatpush.bf16.msra.mxu0 0
  %3032 = vmatpush.bf16.msra.mxu0 %v3023
  %3033 = vmatmul.bf16.gmra.mxu0 %v3020
  %v3034 = vpop.f32.mrf.mxu0
  %v3035 = vadd.f32 0.0, %v3034
  %v3036 = vpop.f32.mrf.mxu0
  %3037 = vdwg.mxu0
  %v3038 = vrot.slane %v2940, 4
  %v3039 = vsel %vm193, %v3038, %v2902
  %v3040 = vrot.slane %v2902, 4
  %v3041 = vsel %vm193, %v2940, %v3040
  %v3043 = vunpack.c.l.s4 1983009808
  %v3044 = vunpack.c.0.s8 %v3043
  %v3045 = vperm.slane %v3039, %v3044
  %v3047 = vunpack.c.l.s4 1983009808
  %v3048 = vunpack.c.0.s8 %v3047
  %v3049 = vperm.slane %v3041, %v3048
  %v3050 = vrot.slane %v2959, 4
  %v3051 = vsel %vm193, %v3050, %v2921
  %v3052 = vrot.slane %v2921, 4
  %v3053 = vsel %vm193, %v2959, %v3052
  %v3055 = vunpack.c.l.s4 1983009808
  %v3056 = vunpack.c.0.s8 %v3055
  %v3057 = vperm.slane %v3051, %v3056
  %v3059 = vunpack.c.l.s4 1983009808
  %v3060 = vunpack.c.0.s8 %v3059
  %v3061 = vperm.slane %v3053, %v3060
  %v3062 = vrot.slane %v3057, 4
  %v3063 = vsel %vm193, %v3062, %v3045
  %v3064 = vrot.slane %v3045, 4
  %v3065 = vsel %vm193, %v3057, %v3064
  %v3067 = vunpack.c.l.s4 1934713408
  %v3068 = vunpack.c.0.s8 %v3067
  %v3069 = vperm.slane %v3063, %v3068
  %v3071 = vunpack.c.l.s4 1934713408
  %v3072 = vunpack.c.0.s8 %v3071
  %v3073 = vperm.slane %v3065, %v3072
  %v3074 = vrot.slane %v3061, 4
  %v3075 = vsel %vm193, %v3074, %v3049
  %v3076 = vrot.slane %v3049, 4
  %v3077 = vsel %vm193, %v3061, %v3076
  %v3079 = vunpack.c.l.s4 1934713408
  %v3080 = vunpack.c.0.s8 %v3079
  %v3081 = vperm.slane %v3075, %v3080
  %v3083 = vunpack.c.l.s4 1934713408
  %v3084 = vunpack.c.0.s8 %v3083
  %v3085 = vperm.slane %v3077, %v3084
  %v3086 = vrot.slane %v3069, 4
  %v3087 = vsel %vm193, 0.0, %v3086
  %v3088 = vrot.slane %v3073, 4
  %v3089 = vsel %vm193, 0.0, %v3088
  %v3090 = vrot.slane %v3081, 4
  %v3091 = vsel %vm193, 0.0, %v3090
  %v3092 = vrot.slane %v3085, 4
  %v3093 = vsel %vm193, 0.0, %v3092
  %v3094 = vrot.slane %v3016, 4
  %v3095 = vsel %vm193, %v3094, %v2978
  %v3096 = vrot.slane %v2978, 4
  %v3097 = vsel %vm193, %v3016, %v3096
  %v3099 = vunpack.c.l.s4 1983009808
  %v3100 = vunpack.c.0.s8 %v3099
  %v3101 = vperm.slane %v3095, %v3100
  %v3103 = vunpack.c.l.s4 1983009808
  %v3104 = vunpack.c.0.s8 %v3103
  %v3105 = vperm.slane %v3097, %v3104
  %v3106 = vrot.slane %v3035, 4
  %v3107 = vsel %vm193, %v3106, %v2997
  %v3108 = vrot.slane %v2997, 4
  %v3109 = vsel %vm193, %v3035, %v3108
  %v3111 = vunpack.c.l.s4 1983009808
  %v3112 = vunpack.c.0.s8 %v3111
  %v3113 = vperm.slane %v3107, %v3112
  %v3115 = vunpack.c.l.s4 1983009808
  %v3116 = vunpack.c.0.s8 %v3115
  %v3117 = vperm.slane %v3109, %v3116
  %v3118 = vrot.slane %v3113, 4
  %v3119 = vsel %vm193, %v3118, %v3101
  %v3120 = vrot.slane %v3101, 4
  %v3121 = vsel %vm193, %v3113, %v3120
  %v3123 = vunpack.c.l.s4 1934713408
  %v3124 = vunpack.c.0.s8 %v3123
  %v3125 = vperm.slane %v3119, %v3124
  %v3127 = vunpack.c.l.s4 1934713408
  %v3128 = vunpack.c.0.s8 %v3127
  %v3129 = vperm.slane %v3121, %v3128
  %v3130 = vrot.slane %v3117, 4
  %v3131 = vsel %vm193, %v3130, %v3105
  %v3132 = vrot.slane %v3105, 4
  %v3133 = vsel %vm193, %v3117, %v3132
  %v3135 = vunpack.c.l.s4 1934713408
  %v3136 = vunpack.c.0.s8 %v3135
  %v3137 = vperm.slane %v3131, %v3136
  %v3139 = vunpack.c.l.s4 1934713408
  %v3140 = vunpack.c.0.s8 %v3139
  %v3141 = vperm.slane %v3133, %v3140
  %v3142 = vrot.slane %v3125, 4
  %v3143 = vsel %vm193, 0.0, %v3142
  %v3144 = vrot.slane %v3129, 4
  %v3145 = vsel %vm193, 0.0, %v3144
  %v3146 = vrot.slane %v3137, 4
  %v3147 = vsel %vm193, 0.0, %v3146
  %v3148 = vrot.slane %v3141, 4
  %v3149 = vsel %vm193, 0.0, %v3148
  %v3150 = vsel %vm193, %v3088, %v3069
  %v3152 = vunpack.c.l.s4 1983009808
  %v3153 = vunpack.c.0.s8 %v3152
  %v3154 = vperm.slane %v3150, %v3153
  %v3155 = vrot.slane %v3089, 4
  %v3156 = vsel %vm193, %v3155, %v3087
  %v3158 = vunpack.c.l.s4 1983009808
  %v3159 = vunpack.c.0.s8 %v3158
  %v3160 = vperm.slane %v3156, %v3159
  %v3161 = vsel %vm193, %v3092, %v3081
  %v3163 = vunpack.c.l.s4 1983009808
  %v3164 = vunpack.c.0.s8 %v3163
  %v3165 = vperm.slane %v3161, %v3164
  %v3166 = vrot.slane %v3093, 4
  %v3167 = vsel %vm193, %v3166, %v3091
  %v3169 = vunpack.c.l.s4 1983009808
  %v3170 = vunpack.c.0.s8 %v3169
  %v3171 = vperm.slane %v3167, %v3170
  %v3172 = vrot.slane %v3160, 4
  %v3173 = vsel %vm193, %v3172, %v3154
  %v3174 = vrot.slane %v3154, 4
  %v3175 = vsel %vm193, %v3160, %v3174
  %v3177 = vunpack.c.l.s4 1934713408
  %v3178 = vunpack.c.0.s8 %v3177
  %v3179 = vperm.slane %v3173, %v3178
  %v3181 = vunpack.c.l.s4 1934713408
  %v3182 = vunpack.c.0.s8 %v3181
  %v3183 = vperm.slane %v3175, %v3182
  %v3184 = vrot.slane %v3171, 4
  %v3185 = vsel %vm193, %v3184, %v3165
  %v3186 = vrot.slane %v3165, 4
  %v3187 = vsel %vm193, %v3171, %v3186
  %v3189 = vunpack.c.l.s4 1934713408
  %v3190 = vunpack.c.0.s8 %v3189
  %v3191 = vperm.slane %v3185, %v3190
  %v3193 = vunpack.c.l.s4 1934713408
  %v3194 = vunpack.c.0.s8 %v3193
  %v3195 = vperm.slane %v3187, %v3194
  %v3196 = vrot.slane %v3191, 4
  %v3197 = vsel %vm193, %v3196, %v3179
  %v3198 = vrot.slane %v3179, 4
  %v3199 = vsel %vm193, %v3191, %v3198
  %v3200 = vrot.slane %v3195, 4
  %v3201 = vsel %vm193, %v3200, %v3183
  %v3202 = vrot.slane %v3183, 4
  %v3203 = vsel %vm193, %v3195, %v3202
  %v3204 = vsel %vm193, %v3144, %v3125
  %v3206 = vunpack.c.l.s4 1983009808
  %v3207 = vunpack.c.0.s8 %v3206
  %v3208 = vperm.slane %v3204, %v3207
  %v3209 = vrot.slane %v3145, 4
  %v3210 = vsel %vm193, %v3209, %v3143
  %v3212 = vunpack.c.l.s4 1983009808
  %v3213 = vunpack.c.0.s8 %v3212
  %v3214 = vperm.slane %v3210, %v3213
  %v3215 = vsel %vm193, %v3148, %v3137
  %v3217 = vunpack.c.l.s4 1983009808
  %v3218 = vunpack.c.0.s8 %v3217
  %v3219 = vperm.slane %v3215, %v3218
  %v3220 = vrot.slane %v3149, 4
  %v3221 = vsel %vm193, %v3220, %v3147
  %v3223 = vunpack.c.l.s4 1983009808
  %v3224 = vunpack.c.0.s8 %v3223
  %v3225 = vperm.slane %v3221, %v3224
  %v3226 = vrot.slane %v3214, 4
  %v3227 = vsel %vm193, %v3226, %v3208
  %v3228 = vrot.slane %v3208, 4
  %v3229 = vsel %vm193, %v3214, %v3228
  %v3231 = vunpack.c.l.s4 1934713408
  %v3232 = vunpack.c.0.s8 %v3231
  %v3233 = vperm.slane %v3227, %v3232
  %v3235 = vunpack.c.l.s4 1934713408
  %v3236 = vunpack.c.0.s8 %v3235
  %v3237 = vperm.slane %v3229, %v3236
  %v3238 = vrot.slane %v3225, 4
  %v3239 = vsel %vm193, %v3238, %v3219
  %v3240 = vrot.slane %v3219, 4
  %v3241 = vsel %vm193, %v3225, %v3240
  %v3243 = vunpack.c.l.s4 1934713408
  %v3244 = vunpack.c.0.s8 %v3243
  %v3245 = vperm.slane %v3239, %v3244
  %v3247 = vunpack.c.l.s4 1934713408
  %v3248 = vunpack.c.0.s8 %v3247
  %v3249 = vperm.slane %v3241, %v3248
  %v3250 = vrot.slane %v3245, 4
  %v3251 = vsel %vm193, %v3250, %v3233
  %v3252 = vrot.slane %v3233, 4
  %v3253 = vsel %vm193, %v3245, %v3252
  %v3254 = vrot.slane %v3249, 4
  %v3255 = vsel %vm193, %v3254, %v3237
  %v3256 = vrot.slane %v3237, 4
  %v3257 = vsel %vm193, %v3249, %v3256
  %3260 = vrot.lane.b32.xlu0 %v3199, 8
  %v3261 = vpop.permute.xlu0 %3260
  %3262 = vrot.lane.b32.xlu0 %v3253, 8
  %v3263 = vpop.permute.xlu0 %3262
  %3268 = vrot.lane.b32.xlu0 %v3201, 16
  %v3269 = vpop.permute.xlu0 %3268
  %3270 = vrot.lane.b32.xlu0 %v3255, 16
  %v3271 = vpop.permute.xlu0 %3270
  %3276 = vrot.lane.b32.xlu0 %v3203, 24
  %v3277 = vpop.permute.xlu0 %3276
  %3278 = vrot.lane.b32.xlu0 %v3257, 24
  %v3279 = vpop.permute.xlu0 %3278
  %v3282 = vsel %vm925, %v3197, %v3261
  %v3283 = vsel %vm925, %v3251, %v3263
  %v3284 = vsel %vm1573, %v3282, %v3269
  %v3285 = vsel %vm1573, %v3283, %v3271
  %v3286 = vsel %vm1576, %v3284, %v3277
  %v3287 = vsel %vm1576, %v3285, %v3279
  %s3288 = scalar_lea.vmem %s6, 16
  %v3289 = vld [vmem:[%s3288] sm:$0xf]
  %v3290 = vld [vmem:[%s3288 + $0x4] sm:$0xf]
  %v3291 = vld [vmem:[%s3288 + $0x8] sm:$0xf]
  %v3292 = vld [vmem:[%s3288 + $0xc] sm:$0xf]
  %v3293 = vpack.c.bf16 %v3287, %v3286
  %v3298 = vunpack.c.l.b16 %v3289
  %v3299 = vunpack.c.l.b16 %v3290
  %v3300 = vunpack.c.l.b16 %v3291
  %v3301 = vunpack.c.l.b16 %v3292
  %v3302 = vpack.c.b16 %v3299, %v3298
  %v3303 = vpack.c.b16 %v3301, %v3300
  %v3307 = vsel %vm72, %v3293, 0
  %3309 = vmatpush.bf16.msra.mxu0 0
  %3310 = vmatpush.bf16.msra.mxu0 0
  %3311 = vmatpush.bf16.msra.mxu0 0
  %3312 = vmatpush.bf16.msra.mxu0 0
  %3313 = vmatpush.bf16.msra.mxu0 0
  %3314 = vmatpush.bf16.msra.mxu0 0
  %3315 = vmatpush.bf16.msra.mxu0 %v3303
  %3316 = vmatpush.bf16.msra.mxu0 %v3302
  %3317 = vmatmul.bf16.gmra.mxu0 %v3307
  %v3318 = vpop.f32.mrf.mxu0
  %v3319 = vadd.f32 0.0, %v3318
  %v3320 = vpop.f32.mrf.mxu0
  %v3321 = vadd.f32 0.0, %v3320
  %3322 = vdwg.mxu0
  %v3323 = vadd.f32 %v1844, %v3319
  %v3324 = vadd.f32 %v1845, %v3321
  %s3325 = scalar_lea.vmem %s7, 1
  %v3326 = vld [vmem:[%s3325] sm:$0x1]
  %v3328 = vperm.slane %v3326, 0
  %v3330 = vadd.f32 %v3323, %v3328
  %v3331 = vadd.f32 %v3324, %v3328
  %s3332 = scalar_lea.vmem %s8, 1
  %v3333 = vld [vmem:[%s3332] sm:$0x1]
  %s3334 = scalar_lea.vmem %s9, 1
  %v3335 = vld [vmem:[%s3334] sm:$0x1]
  %v3336 = vsel %vm72, %v3330, 0.0
  %3337 = vadd.xlane.f32.xlu0 %v3336
  %v3338 = vpop.xlane.xlu0 %3337
  %v3339 = vsel %vm72, %v3331, 0.0
  %3340 = vadd.xlane.f32.xlu0 %v3339
  %v3341 = vpop.xlane.xlu0 %3340
  %v3342 = vmul.f32 %v3338, %v85
  %v3343 = vmul.f32 %v3341, %v85
  %v3344 = vsub.f32 %v3330, %v3342
  %v3345 = vsub.f32 %v3331, %v3343
  %v3346 = vmul.f32 %v3344, %v3344
  %v3347 = vmul.f32 %v3345, %v3345
  %v3348 = vsel %vm72, %v3346, 0.0
  %3349 = vadd.xlane.f32.xlu0 %v3348
  %v3350 = vpop.xlane.xlu0 %3349
  %v3351 = vsel %vm72, %v3347, 0.0
  %3352 = vadd.xlane.f32.xlu0 %v3351
  %v3353 = vpop.xlane.xlu0 %3352
  %v3354 = vmul.f32 %v3350, %v85
  %v3355 = vmul.f32 %v3353, %v85
  %v3356 = vadd.f32 %v3354, 1e-05
  %v3357 = vadd.f32 %v3355, 1e-05
  %v3358 = vrsqrt.pop %v3356
  %v3359 = vmul.f32 %v3358, %v3356
  %v3360 = vmul.f32 %v3359, %v3358
  %v3361 = vmul.f32 0.5, %v3360
  %v3362 = vsub.f32 1.5, %v3361
  %v3363 = vmul.f32 %v3358, %v3362
  %vm3364 = vweird.f32 %v3356
  %vm3365 = vweird.f32 %v3358
  %vm3366 = vmor %vm3364, %vm3365
  %v3367 = vsel %vm3366, %v3358, %v3363
  %v3368 = vrsqrt.pop %v3357
  %v3369 = vmul.f32 %v3368, %v3357
  %v3370 = vmul.f32 %v3369, %v3368
  %v3371 = vmul.f32 0.5, %v3370
  %v3372 = vsub.f32 1.5, %v3371
  %v3373 = vmul.f32 %v3368, %v3372
  %vm3374 = vweird.f32 %v3357
  %vm3375 = vweird.f32 %v3368
  %vm3376 = vmor %vm3374, %vm3375
  %v3377 = vsel %vm3376, %v3368, %v3373
  %v3378 = vmul.f32 %v3344, %v3367
  %v3379 = vmul.f32 %v3345, %v3377
  %v3381 = vperm.slane %v3333, 0
  %v3383 = vmul.f32 %v3378, %v3381
  %v3384 = vmul.f32 %v3379, %v3381
  %v3386 = vperm.slane %v3335, 0
  %v3388 = vadd.f32 %v3383, %v3386
  %v3389 = vadd.f32 %v3384, %v3386
  %s3390 = scalar_lea.vmem %s10, 16
  %v3391 = vld [vmem:[%s3390] sm:$0xf]
  %v3392 = vld [vmem:[%s3390 + $0x4] sm:$0xf]
  %v3393 = vld [vmem:[%s3390 + $0x8] sm:$0xf]
  %v3394 = vld [vmem:[%s3390 + $0xc] sm:$0xf]
  %v3395 = vpack.c.bf16 %v3389, %v3388
  %s3396 = scalar_lea.vmem %s11, 1
  %v3397 = vld [vmem:[%s3396] sm:$0x1]
  %v3399 = vperm.slane %v3397, 0
  %v3405 = vunpack.c.l.b16 %v3391
  %v3406 = vunpack.c.l.b16 %v3392
  %v3407 = vunpack.c.l.b16 %v3393
  %v3408 = vunpack.c.l.b16 %v3394
  %v3409 = vpack.c.b16 %v3406, %v3405
  %v3410 = vpack.c.b16 %v3408, %v3407
  %v3414 = vsel %vm72, %v3395, 0
  %3416 = vmatpush.bf16.msra.mxu0 0
  %3417 = vmatpush.bf16.msra.mxu0 0
  %3418 = vmatpush.bf16.msra.mxu0 0
  %3419 = vmatpush.bf16.msra.mxu0 0
  %3420 = vmatpush.bf16.msra.mxu0 0
  %3421 = vmatpush.bf16.msra.mxu0 0
  %3422 = vmatpush.bf16.msra.mxu0 %v3410
  %3423 = vmatpush.bf16.msra.mxu0 %v3409
  %3424 = vmatmul.bf16.gmra.mxu0 %v3414
  %v3425 = vpop.f32.mrf.mxu0
  %v3426 = vadd.f32 %v3399, %v3425
  %v3427 = vpop.f32.mrf.mxu0
  %v3428 = vadd.f32 %v3399, %v3427
  %3429 = vdwg.mxu0
  %v3430 = vmul.f32 %v3426, %v3426
  %v3431 = vmul.f32 %v3428, %v3428
  %v3432 = vmul.f32 %v3426, %v3430
  %v3433 = vmul.f32 %v3428, %v3431
  %v3434 = vmul.f32 %v3432, 0.044715
  %v3435 = vmul.f32 %v3433, 0.044715
  %v3436 = vadd.f32 %v3426, %v3434
  %v3437 = vadd.f32 %v3428, %v3435
  %v3438 = vmul.f32 %v3436, 0.7978846
  %v3439 = vmul.f32 %v3437, 0.7978846
  %v3440 = vtanh.pop %v3438
  %v3441 = vtanh.pop %v3439
  %v3442 = vadd.f32 %v3440, 1.0
  %v3443 = vadd.f32 %v3441, 1.0
  %v3444 = vmul.f32 %v3442, 0.5
  %v3445 = vmul.f32 %v3443, 0.5
  %v3446 = vmul.f32 %v3426, %v3444
  %v3447 = vmul.f32 %v3428, %v3445
  %s3448 = scalar_lea.vmem %s12, 32
  %v3449 = vld [vmem:[%s3448] sm:$0xf]
  %v3450 = vld [vmem:[%s3448 + $0x4] sm:$0xf]
  %v3451 = vld [vmem:[%s3448 + $0x8] sm:$0xf]
  %v3452 = vld [vmem:[%s3448 + $0xc] sm:$0xf]
  %v3453 = vld [vmem:[%s3448 + $0x10] sm:$0xf]
  %v3454 = vld [vmem:[%s3448 + $0x14] sm:$0xf]
  %v3455 = vld [vmem:[%s3448 + $0x18] sm:$0xf]
  %v3456 = vld [vmem:[%s3448 + $0x1c] sm:$0xf]
  %v3457 = vpack.c.bf16 %v3447, %v3446
  %s3458 = scalar_lea.vmem %s13, 1
  %v3459 = vld [vmem:[%s3458] sm:$0x1]
  %v3461 = vperm.slane %v3459, 0
  %v3471 = vunpack.c.l.b16 %v3449
  %v3472 = vunpack.c.l.b16 %v3450
  %v3473 = vunpack.c.l.b16 %v3451
  %v3474 = vunpack.c.l.b16 %v3452
  %v3475 = vunpack.c.l.b16 %v3453
  %v3476 = vunpack.c.l.b16 %v3454
  %v3477 = vunpack.c.l.b16 %v3455
  %v3478 = vunpack.c.l.b16 %v3456
  %v3479 = vpack.c.b16 %v3472, %v3471
  %v3480 = vpack.c.b16 %v3474, %v3473
  %v3481 = vpack.c.b16 %v3476, %v3475
  %v3482 = vpack.c.b16 %v3478, %v3477
  %v3488 = vsel %vm1770, %v3457, 0
  %3490 = vmatpush.bf16.msra.mxu0 0
  %3491 = vmatpush.bf16.msra.mxu0 0
  %3492 = vmatpush.bf16.msra.mxu0 0
  %3493 = vmatpush.bf16.msra.mxu0 0
  %3494 = vmatpush.bf16.msra.mxu0 %v3482
  %3495 = vmatpush.bf16.msra.mxu0 %v3481
  %3496 = vmatpush.bf16.msra.mxu0 %v3480
  %3497 = vmatpush.bf16.msra.mxu0 %v3479
  %3498 = vmatmul.bf16.gmra.mxu0 %v3488
  %v3499 = vpop.f32.mrf.mxu0
  %v3500 = vadd.f32 %v3461, %v3499
  %v3501 = vpop.f32.mrf.mxu0
  %v3502 = vadd.f32 %v3461, %v3501
  %3503 = vdwg.mxu0
  %v3504 = vadd.f32 %v3388, %v3500
  %v3505 = vadd.f32 %v3389, %v3502
  %s3506 = scalar_lea.vmem %s14, 1
  %v3507 = vld [vmem:[%s3506] sm:$0x1]
  %s3508 = scalar_lea.vmem %s15, 1
  %v3509 = vld [vmem:[%s3508] sm:$0x1]
  %v3510 = vsel %vm72, %v3504, 0.0
  %3511 = vadd.xlane.f32.xlu0 %v3510
  %v3512 = vpop.xlane.xlu0 %3511
  %v3513 = vsel %vm72, %v3505, 0.0
  %3514 = vadd.xlane.f32.xlu0 %v3513
  %v3515 = vpop.xlane.xlu0 %3514
  %v3516 = vmul.f32 %v3512, %v85
  %v3517 = vmul.f32 %v3515, %v85
  %v3518 = vsub.f32 %v3504, %v3516
  %v3519 = vsub.f32 %v3505, %v3517
  %v3520 = vmul.f32 %v3518, %v3518
  %v3521 = vmul.f32 %v3519, %v3519
  %v3522 = vsel %vm72, %v3520, 0.0
  %3523 = vadd.xlane.f32.xlu0 %v3522
  %v3524 = vpop.xlane.xlu0 %3523
  %v3525 = vsel %vm72, %v3521, 0.0
  %3526 = vadd.xlane.f32.xlu0 %v3525
  %v3527 = vpop.xlane.xlu0 %3526
  %v3528 = vmul.f32 %v3524, %v85
  %v3529 = vmul.f32 %v3527, %v85
  %v3530 = vadd.f32 %v3528, 1e-05
  %v3531 = vadd.f32 %v3529, 1e-05
  %v3532 = vrsqrt.pop %v3530
  %v3533 = vmul.f32 %v3532, %v3530
  %v3534 = vmul.f32 %v3533, %v3532
  %v3535 = vmul.f32 0.5, %v3534
  %v3536 = vsub.f32 1.5, %v3535
  %v3537 = vmul.f32 %v3532, %v3536
  %vm3538 = vweird.f32 %v3530
  %vm3539 = vweird.f32 %v3532
  %vm3540 = vmor %vm3538, %vm3539
  %v3541 = vsel %vm3540, %v3532, %v3537
  %v3542 = vrsqrt.pop %v3531
  %v3543 = vmul.f32 %v3542, %v3531
  %v3544 = vmul.f32 %v3543, %v3542
  %v3545 = vmul.f32 0.5, %v3544
  %v3546 = vsub.f32 1.5, %v3545
  %v3547 = vmul.f32 %v3542, %v3546
  %vm3548 = vweird.f32 %v3531
  %vm3549 = vweird.f32 %v3542
  %vm3550 = vmor %vm3548, %vm3549
  %v3551 = vsel %vm3550, %v3542, %v3547
  %v3552 = vmul.f32 %v3518, %v3541
  %v3553 = vmul.f32 %v3519, %v3551
  %v3555 = vperm.slane %v3507, 0
  %v3557 = vmul.f32 %v3552, %v3555
  %v3558 = vmul.f32 %v3553, %v3555
  %v3560 = vperm.slane %v3509, 0
  %v3562 = vadd.f32 %v3557, %v3560
  %v3563 = vadd.f32 %v3558, %v3560
  %v3564 = vld [vmem:[%s16] sm:$0xf]
  %v3565 = vld [vmem:[%s16 + $0x4] sm:$0xf]
  %v3566 = vld [vmem:[%s16 + $0x8] sm:$0xf]
  %v3567 = vld [vmem:[%s16 + $0xc] sm:$0xf]
  %v3568 = vpack.c.bf16 %v3562, %v3562
  %v3569 = vpack.c.bf16 %v3563, %v3563
  %v3572 = vunpack.c.l.b16 %v3568
  %v3573 = vunpack.c.l.b16 %v3569
  %v3574 = vrot.slane %v3573, 7
  %vm3575 = vcmask 1041409
  %v3576 = vsel %vm3575, %v3574, %v3572
  %v3577 = vpack.c.b16 %v3576, %v3576
  %v3582 = vunpack.c.l.b16 %v3564
  %v3583 = vunpack.c.l.b16 %v3565
  %v3584 = vunpack.c.l.b16 %v3566
  %v3585 = vunpack.c.l.b16 %v3567
  %v3586 = vpack.c.b16 %v3583, %v3582
  %v3587 = vpack.c.b16 %v3585, %v3584
  %v3591 = vsel %vm72, %v3577, 0
  %3593 = vmatpush.bf16.msra.mxu0 0
  %3594 = vmatpush.bf16.msra.mxu0 0
  %3595 = vmatpush.bf16.msra.mxu0 0
  %3596 = vmatpush.bf16.msra.mxu0 0
  %3597 = vmatpush.bf16.msra.mxu0 0
  %3598 = vmatpush.bf16.msra.mxu0 0
  %3599 = vmatpush.bf16.msra.mxu0 %v3587
  %3600 = vmatpush.bf16.msra.mxu0 %v3586
  %3601 = vmatmul.bf16.gmra.mxu0 %v3591
  %v3602 = vpop.f32.mrf.mxu0
  %v3603 = vadd.f32 0.0, %v3602
  %v3604 = vpop.f32.mrf.mxu0
  %3605 = vdwg.mxu0
  %s3606 = scalar_lea.vmem %s16, 16
  %v3607 = vld [vmem:[%s3606] sm:$0xf]
  %v3608 = vld [vmem:[%s3606 + $0x4] sm:$0xf]
  %v3609 = vld [vmem:[%s3606 + $0x8] sm:$0xf]
  %v3610 = vld [vmem:[%s3606 + $0xc] sm:$0xf]
  %v3611 = vpack.c.bf16 %v3563, %v3562
  %v3616 = vunpack.c.l.b16 %v3607
  %v3617 = vunpack.c.l.b16 %v3608
  %v3618 = vunpack.c.l.b16 %v3609
  %v3619 = vunpack.c.l.b16 %v3610
  %v3620 = vpack.c.b16 %v3617, %v3616
  %v3621 = vpack.c.b16 %v3619, %v3618
  %v3625 = vsel %vm72, %v3611, 0
  %3627 = vmatpush.bf16.msra.mxu0 0
  %3628 = vmatpush.bf16.msra.mxu0 0
  %3629 = vmatpush.bf16.msra.mxu0 0
  %3630 = vmatpush.bf16.msra.mxu0 0
  %3631 = vmatpush.bf16.msra.mxu0 0
  %3632 = vmatpush.bf16.msra.mxu0 0
  %3633 = vmatpush.bf16.msra.mxu0 %v3621
  %3634 = vmatpush.bf16.msra.mxu0 %v3620
  %3635 = vmatmul.bf16.gmra.mxu0 %v3625
  %v3636 = vpop.f32.mrf.mxu0
  %v3637 = vadd.f32 0.0, %v3636
  %v3638 = vpop.f32.mrf.mxu0
  %v3639 = vadd.f32 0.0, %v3638
  %3640 = vdwg.mxu0
  %v3642 = vrot.slane %v3603, 1
  %v3643 = vperm.slane %v3603, 0
  %v3644 = vperm.slane %v3642, 0
  %v3647 = vadd.f32 %v3637, %v3643
  %v3648 = vadd.f32 %v3639, %v3644
  %v3649 = vld [vmem:[%s17] sm:$0x1]
  %v3651 = vperm.slane %v3649, 0
  %v3653 = vadd.f32 %v3647, %v3651
  %v3654 = vadd.f32 %v3648, %v3651
  %vm3655 = vcmask 15360
  %3656 = vst.msk [vmem:[%s18] sm:$0xff] %vm3655, %v3653
  %3657 = vst.msk [vmem:[%s18 + $0x8] sm:$0xff] %vm3655, %v3654
  // Predicated region
  $region74: #{custom_roberta_forward.1} parent=0 // pred_check
    _
  $region75: #{custom_roberta_forward.1} parent=0 // pred_check_branch
    %3659 = sbr.rel (0) target = $region77
  $region76: #{custom_roberta_forward.1} parent=0 // pred_region
    _
  $region77: #{custom_roberta_forward.1} parent=0 // pred_fallthru
    _
  // Predicated region
  $region78: #{custom_roberta_forward.1} parent=0 // pred_check
    _
  $region79: #{custom_roberta_forward.1} parent=0 // pred_check_branch
    %3661 = sbr.rel (0) target = $region81
  $region80: #{custom_roberta_forward.1} parent=0 // pred_region
    _
  $region81: #{custom_roberta_forward.1} parent=0 // pred_fallthru
    _

</llo_original>
